<compile_context>
chip_gen: v5e
topology: v5e:2x2
jax: 0.10.0
libtpu: 0.0.40
codegen_flags: <defaults>
</compile_context>

<pallas_src>
import jax
import jax.numpy as jnp
from jax.experimental import pallas as pl
from jax.experimental.pallas import tpu as pltpu

BN_EPS = 1e-5
LRELU_SLOPE = 0.01      # PyTorch nn.LeakyReLU default negative_slope
LANE = 128


# ---------------------------------------------------------------------------
# Small helpers
# ---------------------------------------------------------------------------
def _round_up(x, m):
    return (x + m - 1) // m * m


def _pad_axis_to(x, axis, target):
    pad = target - x.shape[axis]
    if pad <= 0:
        return x
    widths = [(0, 0)] * x.ndim
    widths[axis] = (0, pad)
    return jnp.pad(x, widths)


def _vmem_spec():
    # whole array resident in VMEM (no blocking; shapes are tiny)
    return pl.BlockSpec(memory_space=pltpu.MemorySpace.VMEM)


def _extract_patches(x_nhwc):
    """im2col (k=3, s=2, p=1) of the raw network input.

    Runs once per call in XLA outside the kernel.  The K axis (9*Cin) is NOT
    lane-padded: for Cin=1 this keeps the layer-1 input DMA ~14x smaller than
    a 128-lane-padded patch tile.
    """
    n, h, w, c = x_nhwc.shape
    ho, wo = (h + 1) // 2, (w + 1) // 2
    xp = jnp.pad(x_nhwc, ((0, 0), (1, 1), (1, 1), (0, 0)))
    taps = []
    for kh in range(3):
        for kw in range(3):
            taps.append(xp[:, kh::2, kw::2, :][:, :ho, :wo, :])
    p = jnp.stack(taps, axis=3)                           # (N, Ho, Wo, 9, Cin)
    return p.reshape(n * ho * wo, 9 * c)                  # rows (n, oh, ow)


# ---------------------------------------------------------------------------
# The single fused kernel
# ---------------------------------------------------------------------------
def _make_encoder_kernel(num_layers, n_batch, cin0, spatial, m_list, cp_list,
                         sp_last):
    """Fused encoder kernel body.

    Input ref order:
      patches0 (M1, 9*Cin) f32          im2col of the raw input (un-padded K)
      per conv layer li:
        w_li   : li==0 -> (9*Cin, C0p) f32   (VPU path)
                 li>0  -> (9*Cprev_p, Cli_p) bf16, tap-stacked rows (MXU path)
        gb_li  : (2, Cli_p) f32          row 0 = gamma, row 1 = beta
      w_head (Clast_p, Hp) bf16, b_head (1, Hp) f32
    Output: (N, Hp) f32, Hp = round_up(2*hidden, 128); columns [mu || log_sigma]
    Scratch (per layer transition li -> li+1):
      P2_li  (N*(Ho+2)*(Wo+2), Cli_p) f32   zero-padded raster activation
      PT_li+1 (M_{li+1}, 9*Cli_p)     bf16  assembled im2col patches
    """
    n_inputs = 1 + 2 * num_layers + 2

    def kernel(*refs):
        in_refs = refs[:n_inputs]
        out_ref = refs[n_inputs]
        scratch = refs[n_inputs + 1:]
        p2_scr = scratch[0::2]       # padded raster activations (f32)
        pt_scr = scratch[1::2]       # assembled patch tiles (bf16)

        idx = 0
        patches0 = in_refs[idx][...]; idx += 1            # (M1, 9*Cin) f32

        act = None
        for li in range(num_layers):
            w_ref = in_refs[idx]; idx += 1
            gb_ref = in_refs[idx]; idx += 1
            h_in, w_in = spatial[li]
            h_out, w_out = spatial[li + 1]
            m_out = m_list[li]

            if li == 0:
                # Cin == 1 special case: the 3x3/s2 conv is 9 cheap VPU
                # broadcast multiply-adds -- no MXU, no K padding to 128.
                w0 = w_ref[...]                            # (9*Cin, C0p) f32
                y = patches0[:, 0:1] * w0[0:1, :]
                for t in range(1, 9 * cin0):
                    y = y + patches0[:, t:t + 1] * w0[t:t + 1, :]
            else:
                c_prev_p = cp_list[li - 1]
                p2 = p2_scr[li - 1]
                pt = pt_scr[li - 1]
                wp = w_in + 2
                blk = (h_in + 2) * wp
                # In-kernel im2col: stride-2 sublane loads from the padded
                # raster scratch (zero rows supply the conv's zero padding),
                # stored tap-major into the lane-dense bf16 patch tile.
                for t in range(9):
                    kh, kw = divmod(t, 3)
                    col0 = t * c_prev_p
                    for n in range(n_batch):
                        for oh in range(h_out):
                            src = n * blk + (2 * oh + kh) * wp + kw
                            dst = (n * h_out + oh) * w_out
                            rows = p2[pl.ds(src, w_out, stride=2), :]
                            pt[pl.ds(dst, w_out), col0:col0 + c_prev_p] = (
                                rows.astype(jnp.bfloat16))
                # One fused matmul, K = 9*Cprev_p (bf16 x bf16 -> f32 acc).
                y = jnp.dot(pt[...], w_ref[...],
                            preferred_element_type=jnp.float32)

            # Train-mode BatchNorm (biased variance, two-pass) + LeakyReLU,
            # all in f32.  The conv bias is intentionally omitted: batch-mean
            # subtraction cancels it exactly.  Padded channel lanes stay
            # exactly 0 because gamma/beta are zero-padded there.
            gb = gb_ref[...]                               # (2, Cp) f32
            gamma, beta = gb[0:1, :], gb[1:2, :]
            inv_m = 1.0 / m_out
            mean = jnp.sum(y, axis=0, keepdims=True) * inv_m
            d = y - mean
            var = jnp.sum(d * d, axis=0, keepdims=True) * inv_m
            z = gamma * (d * jax.lax.rsqrt(var + BN_EPS)) + beta
            act = jnp.where(z >= 0, z, LRELU_SLOPE * z)    # LeakyReLU

            if li < num_layers - 1:
                # Stage this layer's activation into the next layer's padded
                # raster scratch (the zero border is the conv padding).
                p2n = p2_scr[li]
                p2n[...] = jnp.zeros_like(p2n)
                wp_n = w_out + 2
                blk_n = (h_out + 2) * wp_n
                for n in range(n_batch):
                    for h in range(h_out):
                        dst = n * blk_n + (h + 1) * wp_n + 1
                        src = (n * h_out + h) * w_out
                        p2n[pl.ds(dst, w_out), :] = act[src:src + w_out, :]

        # Head: AdaptiveAvgPool2d(1) + Flatten + combined [mu || log_sigma]
        # Linear as a single lane-dense matmul.
        w_head = in_refs[idx][...]; idx += 1               # (Clast_p, Hp) bf16
        b_head = in_refs[idx][...]; idx += 1               # (1, Hp) f32
        pooled = jnp.mean(act.reshape(n_batch, sp_last, cp_list[-1]), axis=1)
        out_ref[...] = jnp.dot(pooled.astype(jnp.bfloat16), w_head,
                               preferred_element_type=jnp.float32) + b_head

    return kernel


# ---------------------------------------------------------------------------
# One-time parameter preparation (hoisted off the per-call critical path)
# ---------------------------------------------------------------------------
def prepare_encoder_params(params, n_batch, image_hw):
    conv_layers = params["conv_layers"]
    num_layers = len(conv_layers)
    h, w = image_hw
    spatial = [(h, w)]
    for _ in conv_layers:
        ph, pw = spatial[-1]
        spatial.append(((ph + 1) // 2, (pw + 1) // 2))
    m_list = [n_batch * sh * sw for (sh, sw) in spatial[1:]]
    c_real = [layer["w"].shape[3] for layer in conv_layers]
    cp_list = [_round_up(c, LANE) for c in c_real]
    cin0 = conv_layers[0]["w"].shape[2]
    hidden = params["w_mu"].shape[1]
    head_pad = _round_up(2 * hidden, LANE)
    sp_last = spatial[-1][0] * spatial[-1][1]

    weights = []
    for li, layer in enumerate(conv_layers):
        w_hwio = layer["w"].astype(jnp.float32)            # (3, 3, Cin, Cout)
        cout = w_hwio.shape[3]
        cpad = cp_list[li]
        if li == 0:
            w2d = w_hwio.reshape(-1, cout)                 # (9*Cin, Cout)
            weights.append(_pad_axis_to(w2d, 1, cpad))     # f32 (VPU path)
        else:
            cprev_p = cp_list[li - 1]
            taps = []
            for kh in range(3):
                for kw in range(3):
                    wt = w_hwio[kh, kw]                    # (Cin, Cout)
                    taps.append(_pad_axis_to(_pad_axis_to(wt, 0, cprev_p), 1, cpad))
            weights.append(jnp.concatenate(taps, axis=0).astype(jnp.bfloat16))
        gb = jnp.stack([_pad_axis_to(layer["gamma"], 0, cpad),
                        _pad_axis_to(layer["beta"], 0, cpad)]).astype(jnp.float32)
        weights.append(gb)                                 # (2, Cp): gamma, beta
        # NOTE: conv bias deliberately not passed -- train-mode BatchNorm's
        # mean subtraction cancels it exactly (verified vs. the reference).

    w_head = jnp.concatenate([params["w_mu"], params["w_ls"]], axis=1)
    w_head = _pad_axis_to(_pad_axis_to(w_head, 0, cp_list[-1]), 1, head_pad)
    weights.append(w_head.astype(jnp.bfloat16))
    b_head = jnp.concatenate([params["b_mu"], params["b_ls"]]).reshape(1, -1)
    weights.append(_pad_axis_to(b_head, 1, head_pad).astype(jnp.float32))
    weights = [jax.device_put(a) for a in weights]

    cfg = dict(num_layers=num_layers, n_batch=n_batch, cin0=cin0,
               spatial=tuple(spatial), m_list=tuple(m_list),
               cp_list=tuple(cp_list), sp_last=sp_last,
               hidden=hidden, head_pad=head_pad)
    return weights, cfg


# ---------------------------------------------------------------------------
# Build the jitted forward function (prep happens exactly once)
# ---------------------------------------------------------------------------
def make_encoder_fn(params, n_batch, image_hw):
    weights, cfg = prepare_encoder_params(params, n_batch, image_hw)
    num_layers = cfg["num_layers"]
    spatial, cp_list, m_list = cfg["spatial"], cfg["cp_list"], cfg["m_list"]
    hidden = cfg["hidden"]

    scratch_shapes = []
    for li in range(num_layers - 1):
        ho, wo = spatial[li + 1]
        scratch_shapes.append(
            pltpu.VMEM((n_batch * (ho + 2) * (wo + 2), cp_list[li]), jnp.float32))
        scratch_shapes.append(
            pltpu.VMEM((m_list[li + 1], 9 * cp_list[li]), jnp.bfloat16))

    kernel = _make_encoder_kernel(num_layers, n_batch, cfg["cin0"], spatial,
                                  m_list, cp_list, cfg["sp_last"])
    n_inputs = 1 + 2 * num_layers + 2
    call = pl.pallas_call(
        kernel,
        out_shape=jax.ShapeDtypeStruct((n_batch, cfg["head_pad"]), jnp.float32),
        in_specs=[_vmem_spec()] * n_inputs,
        out_specs=_vmem_spec(),
        scratch_shapes=scratch_shapes,
        # Explicit scoped-VMEM budget (v5e default is only 16 MiB of 128 MiB);
        # the toy problem itself uses well under 1 MiB.
        compiler_params=pltpu.CompilerParams(vmem_limit_bytes=32 * 1024 * 1024),
    )
    # NOTE: at realistic image sizes the M (=N*Ho*Wo) axis must be gridded
    # ("parallel" semantics for v7x's two TensorCores) with BatchNorm as a
    # two-phase cross-tile stats/normalize reduction; at these toy shapes a
    # grid would only add per-step overhead.
    # TODO(synk): BatchNorm2d's running_mean/running_var training-time buffer
    # updates (a module side effect) are not modeled; forward outputs in train
    # mode do not depend on them.

    @jax.jit
    def forward(x_nchw):
        x = jnp.transpose(x_nchw, (0, 2, 3, 1)).astype(jnp.float32)  # NCHW->NHWC
        patches = _extract_patches(x)                                # (M1, 9*Cin)
        out = call(patches, *weights)
        return out[:, :hidden], out[:, hidden:2 * hidden]

    return forward


# ---------------------------------------------------------------------------
# Deterministic parameter init (synthetic weights, PyTorch-like shapes)
# ---------------------------------------------------------------------------
def init_params(key, conv_dims, hidden_dim):
    params = {"conv_layers": []}
    in_ch = 1
    for c_dim in conv_dims:
        key, k1, k2 = jax.random.split(key, 3)
        params["conv_layers"].append({
            # conv weight in HWIO (kh, kw, cin, cout); PyTorch stores (cout,cin,kh,kw)
            "w": 0.1 * jax.random.normal(k1, (3, 3, in_ch, c_dim), jnp.float32),
            "b": 0.05 * jax.random.normal(k2, (c_dim,), jnp.float32),
            "gamma": jnp.ones((c_dim,), jnp.float32),   # BatchNorm2d default init
            "beta": jnp.zeros((c_dim,), jnp.float32),
        })
        in_ch = c_dim
    key, k1, k2, k3, k4 = jax.random.split(key, 5)
    params["w_mu"] = 0.1 * jax.random.normal(k1, (conv_dims[-1], hidden_dim), jnp.float32)
    params["b_mu"] = 0.05 * jax.random.normal(k2, (hidden_dim,), jnp.float32)
    params["w_ls"] = 0.1 * jax.random.normal(k3, (conv_dims[-1], hidden_dim), jnp.float32)
    params["b_ls"] = 0.05 * jax.random.normal(k4, (hidden_dim,), jnp.float32)
    return params


# ---------------------------------------------------------------------------
# Pure-JAX f32 reference (numerical sanity check; keeps the conv bias)
# ---------------------------------------------------------------------------
def encoder_ref(x_nchw, params):
    x = jnp.transpose(x_nchw, (0, 2, 3, 1)).astype(jnp.float32)
    for layer in params["conv_layers"]:
        y = jax.lax.conv_general_dilated(
            x, layer["w"], window_strides=(2, 2), padding=((1, 1), (1, 1)),
            dimension_numbers=("NHWC", "HWIO", "NHWC"))
        y = y + layer["b"]
        mean = jnp.mean(y, axis=(0, 1, 2), keepdims=True)
        var = jnp.mean((y - mean) ** 2, axis=(0, 1, 2), keepdims=True)
        y = (y - mean) * jax.lax.rsqrt(var + BN_EPS)
        y = layer["gamma"] * y + layer["beta"]
        x = jnp.where(y >= 0, y, LRELU_SLOPE * y)
    pooled = jnp.mean(x, axis=(1, 2))
    mu = pooled @ params["w_mu"] + params["b_mu"]
    ls = pooled @ params["w_ls"] + params["b_ls"]
    return mu, ls


if __name__ == "__main__":
    # Small shapes consistent with the module: 1-channel 16x16 images.
    batch, hidden_dim = 2, 32
    conv_dims = [8, 16]

    key = jax.random.PRNGKey(0)
    key, kx = jax.random.split(key)
    x = jax.random.normal(kx, (batch, 1, 16, 16), jnp.float32)  # NCHW like PyTorch

    params = init_params(key, conv_dims, hidden_dim)
    encoder = make_encoder_fn(params, batch, (16, 16))

    mu, log_sigma = encoder(x)
    mu, log_sigma = jax.block_until_ready((mu, log_sigma))

    mu_ref, ls_ref = encoder_ref(x, params)
    assert mu.shape == (batch, hidden_dim)
    assert log_sigma.shape == (batch, hidden_dim)
    # bf16 matmul operands (f32 accumulation) => slightly looser tolerance
    # than a pure-f32 comparison.
    assert jnp.allclose(mu, mu_ref, atol=2e-2, rtol=2e-2), \
        float(jnp.max(jnp.abs(mu - mu_ref)))
    assert jnp.allclose(log_sigma, ls_ref, atol=2e-2, rtol=2e-2), \
        float(jnp.max(jnp.abs(log_sigma - ls_ref)))

    print("KERNEL_OK")
</pallas_src>

<mosaic_0001>
module attributes {stable_mosaic.version = 11 : i64} {
  func.func @kernel(%arg0: memref<128x9xf32, #tpu.memory_space<vmem>>, %arg1: memref<9x128xf32, #tpu.memory_space<vmem>>, %arg2: memref<2x128xf32, #tpu.memory_space<vmem>>, %arg3: memref<1152x128xbf16, #tpu.memory_space<vmem>>, %arg4: memref<2x128xf32, #tpu.memory_space<vmem>>, %arg5: memref<128x128xbf16, #tpu.memory_space<vmem>>, %arg6: memref<1x128xf32, #tpu.memory_space<vmem>>, %arg7: memref<2x128xf32, #tpu.memory_space<vmem>>, %arg8: memref<200x128xf32, #tpu.memory_space<vmem>>, %arg9: memref<32x1152xbf16, #tpu.memory_space<vmem>>) attributes {dimension_semantics = [], scalar_prefetch = 0 : i64, scratch_operands = 2 : i64, tpu.core_type = #tpu.core_type<tc>} {
    %c0 = arith.constant 0 : index
    %c0_0 = arith.constant 0 : index
    %0 = vector.load %arg0[%c0, %c0_0] : memref<128x9xf32, #tpu.memory_space<vmem>>, vector<128x9xf32>
    %c0_1 = arith.constant 0 : index
    %c0_2 = arith.constant 0 : index
    %1 = vector.load %arg1[%c0_1, %c0_2] : memref<9x128xf32, #tpu.memory_space<vmem>>, vector<9x128xf32>
    %2 = vector.extract_strided_slice %0 {offsets = [0, 0], sizes = [128, 1], strides = [1, 1]} : vector<128x9xf32> to vector<128x1xf32>
    %3 = vector.extract_strided_slice %1 {offsets = [0, 0], sizes = [1, 128], strides = [1, 1]} : vector<9x128xf32> to vector<1x128xf32>
    %4 = vector.broadcast %2 : vector<128x1xf32> to vector<128x128xf32>
    %5 = vector.broadcast %3 : vector<1x128xf32> to vector<128x128xf32>
    %6 = arith.mulf %4, %5 : vector<128x128xf32>
    %7 = vector.extract_strided_slice %0 {offsets = [0, 1], sizes = [128, 1], strides = [1, 1]} : vector<128x9xf32> to vector<128x1xf32>
    %8 = vector.extract_strided_slice %1 {offsets = [1, 0], sizes = [1, 128], strides = [1, 1]} : vector<9x128xf32> to vector<1x128xf32>
    %9 = vector.broadcast %7 : vector<128x1xf32> to vector<128x128xf32>
    %10 = vector.broadcast %8 : vector<1x128xf32> to vector<128x128xf32>
    %11 = arith.mulf %9, %10 : vector<128x128xf32>
    %12 = arith.addf %6, %11 : vector<128x128xf32>
    %13 = vector.extract_strided_slice %0 {offsets = [0, 2], sizes = [128, 1], strides = [1, 1]} : vector<128x9xf32> to vector<128x1xf32>
    %14 = vector.extract_strided_slice %1 {offsets = [2, 0], sizes = [1, 128], strides = [1, 1]} : vector<9x128xf32> to vector<1x128xf32>
    %15 = vector.broadcast %13 : vector<128x1xf32> to vector<128x128xf32>
    %16 = vector.broadcast %14 : vector<1x128xf32> to vector<128x128xf32>
    %17 = arith.mulf %15, %16 : vector<128x128xf32>
    %18 = arith.addf %12, %17 : vector<128x128xf32>
    %19 = vector.extract_strided_slice %0 {offsets = [0, 3], sizes = [128, 1], strides = [1, 1]} : vector<128x9xf32> to vector<128x1xf32>
    %20 = vector.extract_strided_slice %1 {offsets = [3, 0], sizes = [1, 128], strides = [1, 1]} : vector<9x128xf32> to vector<1x128xf32>
    %21 = vector.broadcast %19 : vector<128x1xf32> to vector<128x128xf32>
    %22 = vector.broadcast %20 : vector<1x128xf32> to vector<128x128xf32>
    %23 = arith.mulf %21, %22 : vector<128x128xf32>
    %24 = arith.addf %18, %23 : vector<128x128xf32>
    %25 = vector.extract_strided_slice %0 {offsets = [0, 4], sizes = [128, 1], strides = [1, 1]} : vector<128x9xf32> to vector<128x1xf32>
    %26 = vector.extract_strided_slice %1 {offsets = [4, 0], sizes = [1, 128], strides = [1, 1]} : vector<9x128xf32> to vector<1x128xf32>
    %27 = vector.broadcast %25 : vector<128x1xf32> to vector<128x128xf32>
    %28 = vector.broadcast %26 : vector<1x128xf32> to vector<128x128xf32>
    %29 = arith.mulf %27, %28 : vector<128x128xf32>
    %30 = arith.addf %24, %29 : vector<128x128xf32>
    %31 = vector.extract_strided_slice %0 {offsets = [0, 5], sizes = [128, 1], strides = [1, 1]} : vector<128x9xf32> to vector<128x1xf32>
    %32 = vector.extract_strided_slice %1 {offsets = [5, 0], sizes = [1, 128], strides = [1, 1]} : vector<9x128xf32> to vector<1x128xf32>
    %33 = vector.broadcast %31 : vector<128x1xf32> to vector<128x128xf32>
    %34 = vector.broadcast %32 : vector<1x128xf32> to vector<128x128xf32>
    %35 = arith.mulf %33, %34 : vector<128x128xf32>
    %36 = arith.addf %30, %35 : vector<128x128xf32>
    %37 = vector.extract_strided_slice %0 {offsets = [0, 6], sizes = [128, 1], strides = [1, 1]} : vector<128x9xf32> to vector<128x1xf32>
    %38 = vector.extract_strided_slice %1 {offsets = [6, 0], sizes = [1, 128], strides = [1, 1]} : vector<9x128xf32> to vector<1x128xf32>
    %39 = vector.broadcast %37 : vector<128x1xf32> to vector<128x128xf32>
    %40 = vector.broadcast %38 : vector<1x128xf32> to vector<128x128xf32>
    %41 = arith.mulf %39, %40 : vector<128x128xf32>
    %42 = arith.addf %36, %41 : vector<128x128xf32>
    %43 = vector.extract_strided_slice %0 {offsets = [0, 7], sizes = [128, 1], strides = [1, 1]} : vector<128x9xf32> to vector<128x1xf32>
    %44 = vector.extract_strided_slice %1 {offsets = [7, 0], sizes = [1, 128], strides = [1, 1]} : vector<9x128xf32> to vector<1x128xf32>
    %45 = vector.broadcast %43 : vector<128x1xf32> to vector<128x128xf32>
    %46 = vector.broadcast %44 : vector<1x128xf32> to vector<128x128xf32>
    %47 = arith.mulf %45, %46 : vector<128x128xf32>
    %48 = arith.addf %42, %47 : vector<128x128xf32>
    %49 = vector.extract_strided_slice %0 {offsets = [0, 8], sizes = [128, 1], strides = [1, 1]} : vector<128x9xf32> to vector<128x1xf32>
    %50 = vector.extract_strided_slice %1 {offsets = [8, 0], sizes = [1, 128], strides = [1, 1]} : vector<9x128xf32> to vector<1x128xf32>
    %51 = vector.broadcast %49 : vector<128x1xf32> to vector<128x128xf32>
    %52 = vector.broadcast %50 : vector<1x128xf32> to vector<128x128xf32>
    %53 = arith.mulf %51, %52 : vector<128x128xf32>
    %54 = arith.addf %48, %53 : vector<128x128xf32>
    %c0_3 = arith.constant 0 : index
    %c0_4 = arith.constant 0 : index
    %55 = vector.load %arg2[%c0_3, %c0_4] : memref<2x128xf32, #tpu.memory_space<vmem>>, vector<2x128xf32>
    %56 = vector.extract_strided_slice %55 {offsets = [0, 0], sizes = [1, 128], strides = [1, 1]} : vector<2x128xf32> to vector<1x128xf32>
    %57 = vector.extract_strided_slice %55 {offsets = [1, 0], sizes = [1, 128], strides = [1, 1]} : vector<2x128xf32> to vector<1x128xf32>
    %cst = arith.constant dense<0.000000e+00> : vector<128xf32>
    %58 = vector.multi_reduction <add>, %54, %cst [0] : vector<128x128xf32> to vector<128xf32>
    %59 = vector.shape_cast %58 : vector<128xf32> to vector<1x128xf32>
    %cst_5 = arith.constant 7.812500e-03 : f32
    %60 = vector.broadcast %cst_5 : f32 to vector<1x128xf32>
    %61 = arith.mulf %59, %60 : vector<1x128xf32>
    %62 = vector.broadcast %61 : vector<1x128xf32> to vector<128x128xf32>
    %63 = arith.subf %54, %62 : vector<128x128xf32>
    %64 = arith.mulf %63, %63 : vector<128x128xf32>
    %cst_6 = arith.constant dense<0.000000e+00> : vector<128xf32>
    %65 = vector.multi_reduction <add>, %64, %cst_6 [0] : vector<128x128xf32> to vector<128xf32>
    %66 = vector.shape_cast %65 : vector<128xf32> to vector<1x128xf32>
    %cst_7 = arith.constant 7.812500e-03 : f32
    %67 = vector.broadcast %cst_7 : f32 to vector<1x128xf32>
    %68 = arith.mulf %66, %67 : vector<1x128xf32>
    %cst_8 = arith.constant 9.99999974E-6 : f32
    %69 = vector.broadcast %cst_8 : f32 to vector<1x128xf32>
    %70 = arith.addf %68, %69 : vector<1x128xf32>
    %71 = math.rsqrt %70 : vector<1x128xf32>
    %72 = vector.broadcast %71 : vector<1x128xf32> to vector<128x128xf32>
    %73 = arith.mulf %63, %72 : vector<128x128xf32>
    %74 = vector.broadcast %56 : vector<1x128xf32> to vector<128x128xf32>
    %75 = arith.mulf %74, %73 : vector<128x128xf32>
    %76 = vector.broadcast %57 : vector<1x128xf32> to vector<128x128xf32>
    %77 = arith.addf %75, %76 : vector<128x128xf32>
    %cst_9 = arith.constant 0.000000e+00 : f32
    %78 = vector.broadcast %cst_9 : f32 to vector<128x128xf32>
    %79 = arith.cmpf oge, %77, %78 : vector<128x128xf32>
    %cst_10 = arith.constant 0.00999999977 : f32
    %80 = vector.broadcast %cst_10 : f32 to vector<128x128xf32>
    %81 = arith.mulf %80, %77 : vector<128x128xf32>
    %82 = arith.select %79, %77, %81 : vector<128x128xi1>, vector<128x128xf32>
    %cst_11 = arith.constant 0.000000e+00 : f32
    %83 = vector.broadcast %cst_11 : f32 to vector<200x128xf32>
    %c0_12 = arith.constant 0 : index
    %c0_13 = arith.constant 0 : index
    %84 = vector.load %arg8[%c0_12, %c0_13] : memref<200x128xf32, #tpu.memory_space<vmem>>, vector<200x128xf32>
    tpu.vector_store %arg8[%c0_12, %c0_13], %83 {strides = array<i32>} : memref<200x128xf32, #tpu.memory_space<vmem>>, vector<200x128xf32>,
    %85 = vector.extract_strided_slice %82 {offsets = [0, 0], sizes = [8, 128], strides = [1, 1]} : vector<128x128xf32> to vector<8x128xf32>
    %c11 = arith.constant 11 : index
    %c0_14 = arith.constant 0 : index
    %86 = vector.load %arg8[%c11, %c0_14] : memref<200x128xf32, #tpu.memory_space<vmem>>, vector<8x128xf32>
    tpu.vector_store %arg8[%c11, %c0_14], %85 {strides = array<i32>} : memref<200x128xf32, #tpu.memory_space<vmem>>, vector<8x128xf32>,
    %87 = vector.extract_strided_slice %82 {offsets = [8, 0], sizes = [8, 128], strides = [1, 1]} : vector<128x128xf32> to vector<8x128xf32>
    %c21 = arith.constant 21 : index
    %c0_15 = arith.constant 0 : index
    %88 = vector.load %arg8[%c21, %c0_15] : memref<200x128xf32, #tpu.memory_space<vmem>>, vector<8x128xf32>
    tpu.vector_store %arg8[%c21, %c0_15], %87 {strides = array<i32>} : memref<200x128xf32, #tpu.memory_space<vmem>>, vector<8x128xf32>,
    %89 = vector.extract_strided_slice %82 {offsets = [16, 0], sizes = [8, 128], strides = [1, 1]} : vector<128x128xf32> to vector<8x128xf32>
    %c31 = arith.constant 31 : index
    %c0_16 = arith.constant 0 : index
    %90 = vector.load %arg8[%c31, %c0_16] : memref<200x128xf32, #tpu.memory_space<vmem>>, vector<8x128xf32>
    tpu.vector_store %arg8[%c31, %c0_16], %89 {strides = array<i32>} : memref<200x128xf32, #tpu.memory_space<vmem>>, vector<8x128xf32>,
    %91 = vector.extract_strided_slice %82 {offsets = [24, 0], sizes = [8, 128], strides = [1, 1]} : vector<128x128xf32> to vector<8x128xf32>
    %c41 = arith.constant 41 : index
    %c0_17 = arith.constant 0 : index
    %92 = vector.load %arg8[%c41, %c0_17] : memref<200x128xf32, #tpu.memory_space<vmem>>, vector<8x128xf32>
    tpu.vector_store %arg8[%c41, %c0_17], %91 {strides = array<i32>} : memref<200x128xf32, #tpu.memory_space<vmem>>, vector<8x128xf32>,
    %93 = vector.extract_strided_slice %82 {offsets = [32, 0], sizes = [8, 128], strides = [1, 1]} : vector<128x128xf32> to vector<8x128xf32>
    %c51 = arith.constant 51 : index
    %c0_18 = arith.constant 0 : index
    %94 = vector.load %arg8[%c51, %c0_18] : memref<200x128xf32, #tpu.memory_space<vmem>>, vector<8x128xf32>
    tpu.vector_store %arg8[%c51, %c0_18], %93 {strides = array<i32>} : memref<200x128xf32, #tpu.memory_space<vmem>>, vector<8x128xf32>,
    %95 = vector.extract_strided_slice %82 {offsets = [40, 0], sizes = [8, 128], strides = [1, 1]} : vector<128x128xf32> to vector<8x128xf32>
    %c61 = arith.constant 61 : index
    %c0_19 = arith.constant 0 : index
    %96 = vector.load %arg8[%c61, %c0_19] : memref<200x128xf32, #tpu.memory_space<vmem>>, vector<8x128xf32>
    tpu.vector_store %arg8[%c61, %c0_19], %95 {strides = array<i32>} : memref<200x128xf32, #tpu.memory_space<vmem>>, vector<8x128xf32>,
    %97 = vector.extract_strided_slice %82 {offsets = [48, 0], sizes = [8, 128], strides = [1, 1]} : vector<128x128xf32> to vector<8x128xf32>
    %c71 = arith.constant 71 : index
    %c0_20 = arith.constant 0 : index
    %98 = vector.load %arg8[%c71, %c0_20] : memref<200x128xf32, #tpu.memory_space<vmem>>, vector<8x128xf32>
    tpu.vector_store %arg8[%c71, %c0_20], %97 {strides = array<i32>} : memref<200x128xf32, #tpu.memory_space<vmem>>, vector<8x128xf32>,
    %99 = vector.extract_strided_slice %82 {offsets = [56, 0], sizes = [8, 128], strides = [1, 1]} : vector<128x128xf32> to vector<8x128xf32>
    %c81 = arith.constant 81 : index
    %c0_21 = arith.constant 0 : index
    %100 = vector.load %arg8[%c81, %c0_21] : memref<200x128xf32, #tpu.memory_space<vmem>>, vector<8x128xf32>
    tpu.vector_store %arg8[%c81, %c0_21], %99 {strides = array<i32>} : memref<200x128xf32, #tpu.memory_space<vmem>>, vector<8x128xf32>,
    %101 = vector.extract_strided_slice %82 {offsets = [64, 0], sizes = [8, 128], strides = [1, 1]} : vector<128x128xf32> to vector<8x128xf32>
    %c111 = arith.constant 111 : index
    %c0_22 = arith.constant 0 : index
    %102 = vector.load %arg8[%c111, %c0_22] : memref<200x128xf32, #tpu.memory_space<vmem>>, vector<8x128xf32>
    tpu.vector_store %arg8[%c111, %c0_22], %101 {strides = array<i32>} : memref<200x128xf32, #tpu.memory_space<vmem>>, vector<8x128xf32>,
    %103 = vector.extract_strided_slice %82 {offsets = [72, 0], sizes = [8, 128], strides = [1, 1]} : vector<128x128xf32> to vector<8x128xf32>
    %c121 = arith.constant 121 : index
    %c0_23 = arith.constant 0 : index
    %104 = vector.load %arg8[%c121, %c0_23] : memref<200x128xf32, #tpu.memory_space<vmem>>, vector<8x128xf32>
    tpu.vector_store %arg8[%c121, %c0_23], %103 {strides = array<i32>} : memref<200x128xf32, #tpu.memory_space<vmem>>, vector<8x128xf32>,
    %105 = vector.extract_strided_slice %82 {offsets = [80, 0], sizes = [8, 128], strides = [1, 1]} : vector<128x128xf32> to vector<8x128xf32>
    %c131 = arith.constant 131 : index
    %c0_24 = arith.constant 0 : index
    %106 = vector.load %arg8[%c131, %c0_24] : memref<200x128xf32, #tpu.memory_space<vmem>>, vector<8x128xf32>
    tpu.vector_store %arg8[%c131, %c0_24], %105 {strides = array<i32>} : memref<200x128xf32, #tpu.memory_space<vmem>>, vector<8x128xf32>,
    %107 = vector.extract_strided_slice %82 {offsets = [88, 0], sizes = [8, 128], strides = [1, 1]} : vector<128x128xf32> to vector<8x128xf32>
    %c141 = arith.constant 141 : index
    %c0_25 = arith.constant 0 : index
    %108 = vector.load %arg8[%c141, %c0_25] : memref<200x128xf32, #tpu.memory_space<vmem>>, vector<8x128xf32>
    tpu.vector_store %arg8[%c141, %c0_25], %107 {strides = array<i32>} : memref<200x128xf32, #tpu.memory_space<vmem>>, vector<8x128xf32>,
    %109 = vector.extract_strided_slice %82 {offsets = [96, 0], sizes = [8, 128], strides = [1, 1]} : vector<128x128xf32> to vector<8x128xf32>
    %c151 = arith.constant 151 : index
    %c0_26 = arith.constant 0 : index
    %110 = vector.load %arg8[%c151, %c0_26] : memref<200x128xf32, #tpu.memory_space<vmem>>, vector<8x128xf32>
    tpu.vector_store %arg8[%c151, %c0_26], %109 {strides = array<i32>} : memref<200x128xf32, #tpu.memory_space<vmem>>, vector<8x128xf32>,
    %111 = vector.extract_strided_slice %82 {offsets = [104, 0], sizes = [8, 128], strides = [1, 1]} : vector<128x128xf32> to vector<8x128xf32>
    %c161 = arith.constant 161 : index
    %c0_27 = arith.constant 0 : index
    %112 = vector.load %arg8[%c161, %c0_27] : memref<200x128xf32, #tpu.memory_space<vmem>>, vector<8x128xf32>
    tpu.vector_store %arg8[%c161, %c0_27], %111 {strides = array<i32>} : memref<200x128xf32, #tpu.memory_space<vmem>>, vector<8x128xf32>,
    %113 = vector.extract_strided_slice %82 {offsets = [112, 0], sizes = [8, 128], strides = [1, 1]} : vector<128x128xf32> to vector<8x128xf32>
    %c171 = arith.constant 171 : index
    %c0_28 = arith.constant 0 : index
    %114 = vector.load %arg8[%c171, %c0_28] : memref<200x128xf32, #tpu.memory_space<vmem>>, vector<8x128xf32>
    tpu.vector_store %arg8[%c171, %c0_28], %113 {strides = array<i32>} : memref<200x128xf32, #tpu.memory_space<vmem>>, vector<8x128xf32>,
    %115 = vector.extract_strided_slice %82 {offsets = [120, 0], sizes = [8, 128], strides = [1, 1]} : vector<128x128xf32> to vector<8x128xf32>
    %c181 = arith.constant 181 : index
    %c0_29 = arith.constant 0 : index
    %116 = vector.load %arg8[%c181, %c0_29] : memref<200x128xf32, #tpu.memory_space<vmem>>, vector<8x128xf32>
    tpu.vector_store %arg8[%c181, %c0_29], %115 {strides = array<i32>} : memref<200x128xf32, #tpu.memory_space<vmem>>, vector<8x128xf32>,
    %c0_30 = arith.constant 0 : index
    %c0_31 = arith.constant 0 : index
    %117 = tpu.strided_load %arg8[%c0_30, %c0_31] {strides = array<i32: 2, 1>} : memref<200x128xf32, #tpu.memory_space<vmem>>, vector<4x128xf32>
    %118 = arith.truncf %117 : vector<4x128xf32> to vector<4x128xbf16>
    %c0_32 = arith.constant 0 : index
    %c0_33 = arith.constant 0 : index
    %119 = vector.load %arg9[%c0_32, %c0_33] : memref<32x1152xbf16, #tpu.memory_space<vmem>>, vector<4x128xbf16>
    tpu.vector_store %arg9[%c0_32, %c0_33], %118 {strides = array<i32>} : memref<32x1152xbf16, #tpu.memory_space<vmem>>, vector<4x128xbf16>,
    %c20 = arith.constant 20 : index
    %c0_34 = arith.constant 0 : index
    %120 = tpu.strided_load %arg8[%c20, %c0_34] {strides = array<i32: 2, 1>} : memref<200x128xf32, #tpu.memory_space<vmem>>, vector<4x128xf32>
    %121 = arith.truncf %120 : vector<4x128xf32> to vector<4x128xbf16>
    %c4 = arith.constant 4 : index
    %c0_35 = arith.constant 0 : index
    %122 = vector.load %arg9[%c4, %c0_35] : memref<32x1152xbf16, #tpu.memory_space<vmem>>, vector<4x128xbf16>
    tpu.vector_store %arg9[%c4, %c0_35], %121 {strides = array<i32>} : memref<32x1152xbf16, #tpu.memory_space<vmem>>, vector<4x128xbf16>,
    %c40 = arith.constant 40 : index
    %c0_36 = arith.constant 0 : index
    %123 = tpu.strided_load %arg8[%c40, %c0_36] {strides = array<i32: 2, 1>} : memref<200x128xf32, #tpu.memory_space<vmem>>, vector<4x128xf32>
    %124 = arith.truncf %123 : vector<4x128xf32> to vector<4x128xbf16>
    %c8 = arith.constant 8 : index
    %c0_37 = arith.constant 0 : index
    %125 = vector.load %arg9[%c8, %c0_37] : memref<32x1152xbf16, #tpu.memory_space<vmem>>, vector<4x128xbf16>
    tpu.vector_store %arg9[%c8, %c0_37], %124 {strides = array<i32>} : memref<32x1152xbf16, #tpu.memory_space<vmem>>, vector<4x128xbf16>,
    %c60 = arith.constant 60 : index
    %c0_38 = arith.constant 0 : index
    %126 = tpu.strided_load %arg8[%c60, %c0_38] {strides = array<i32: 2, 1>} : memref<200x128xf32, #tpu.memory_space<vmem>>, vector<4x128xf32>
    %127 = arith.truncf %126 : vector<4x128xf32> to vector<4x128xbf16>
    %c12 = arith.constant 12 : index
    %c0_39 = arith.constant 0 : index
    %128 = vector.load %arg9[%c12, %c0_39] : memref<32x1152xbf16, #tpu.memory_space<vmem>>, vector<4x128xbf16>
    tpu.vector_store %arg9[%c12, %c0_39], %127 {strides = array<i32>} : memref<32x1152xbf16, #tpu.memory_space<vmem>>, vector<4x128xbf16>,
    %c100 = arith.constant 100 : index
    %c0_40 = arith.constant 0 : index
    %129 = tpu.strided_load %arg8[%c100, %c0_40] {strides = array<i32: 2, 1>} : memref<200x128xf32, #tpu.memory_space<vmem>>, vector<4x128xf32>
    %130 = arith.truncf %129 : vector<4x128xf32> to vector<4x128xbf16>
    %c16 = arith.constant 16 : index
    %c0_41 = arith.constant 0 : index
    %131 = vector.load %arg9[%c16, %c0_41] : memref<32x1152xbf16, #tpu.memory_space<vmem>>, vector<4x128xbf16>
    tpu.vector_store %arg9[%c16, %c0_41], %130 {strides = array<i32>} : memref<32x1152xbf16, #tpu.memory_space<vmem>>, vector<4x128xbf16>,
    %c120 = arith.constant 120 : index
    %c0_42 = arith.constant 0 : index
    %132 = tpu.strided_load %arg8[%c120, %c0_42] {strides = array<i32: 2, 1>} : memref<200x128xf32, #tpu.memory_space<vmem>>, vector<4x128xf32>
    %133 = arith.truncf %132 : vector<4x128xf32> to vector<4x128xbf16>
    %c20_43 = arith.constant 20 : index
    %c0_44 = arith.constant 0 : index
    %134 = vector.load %arg9[%c20_43, %c0_44] : memref<32x1152xbf16, #tpu.memory_space<vmem>>, vector<4x128xbf16>
    tpu.vector_store %arg9[%c20_43, %c0_44], %133 {strides = array<i32>} : memref<32x1152xbf16, #tpu.memory_space<vmem>>, vector<4x128xbf16>,
    %c140 = arith.constant 140 : index
    %c0_45 = arith.constant 0 : index
    %135 = tpu.strided_load %arg8[%c140, %c0_45] {strides = array<i32: 2, 1>} : memref<200x128xf32, #tpu.memory_space<vmem>>, vector<4x128xf32>
    %136 = arith.truncf %135 : vector<4x128xf32> to vector<4x128xbf16>
    %c24 = arith.constant 24 : index
    %c0_46 = arith.constant 0 : index
    %137 = vector.load %arg9[%c24, %c0_46] : memref<32x1152xbf16, #tpu.memory_space<vmem>>, vector<4x128xbf16>
    tpu.vector_store %arg9[%c24, %c0_46], %136 {strides = array<i32>} : memref<32x1152xbf16, #tpu.memory_space<vmem>>, vector<4x128xbf16>,
    %c160 = arith.constant 160 : index
    %c0_47 = arith.constant 0 : index
    %138 = tpu.strided_load %arg8[%c160, %c0_47] {strides = array<i32: 2, 1>} : memref<200x128xf32, #tpu.memory_space<vmem>>, vector<4x128xf32>
    %139 = arith.truncf %138 : vector<4x128xf32> to vector<4x128xbf16>
    %c28 = arith.constant 28 : index
    %c0_48 = arith.constant 0 : index
    %140 = vector.load %arg9[%c28, %c0_48] : memref<32x1152xbf16, #tpu.memory_space<vmem>>, vector<4x128xbf16>
    tpu.vector_store %arg9[%c28, %c0_48], %139 {strides = array<i32>} : memref<32x1152xbf16, #tpu.memory_space<vmem>>, vector<4x128xbf16>,
    %c1 = arith.constant 1 : index
    %c0_49 = arith.constant 0 : index
    %141 = tpu.strided_load %arg8[%c1, %c0_49] {strides = array<i32: 2, 1>} : memref<200x128xf32, #tpu.memory_space<vmem>>, vector<4x128xf32>
    %142 = arith.truncf %141 : vector<4x128xf32> to vector<4x128xbf16>
    %c0_50 = arith.constant 0 : index
    %c128 = arith.constant 128 : index
    %143 = vector.load %arg9[%c0_50, %c128] : memref<32x1152xbf16, #tpu.memory_space<vmem>>, vector<4x128xbf16>
    tpu.vector_store %arg9[%c0_50, %c128], %142 {strides = array<i32>} : memref<32x1152xbf16, #tpu.memory_space<vmem>>, vector<4x128xbf16>,
    %c21_51 = arith.constant 21 : index
    %c0_52 = arith.constant 0 : index
    %144 = tpu.strided_load %arg8[%c21_51, %c0_52] {strides = array<i32: 2, 1>} : memref<200x128xf32, #tpu.memory_space<vmem>>, vector<4x128xf32>
    %145 = arith.truncf %144 : vector<4x128xf32> to vector<4x128xbf16>
    %c4_53 = arith.constant 4 : index
    %c128_54 = arith.constant 128 : index
    %146 = vector.load %arg9[%c4_53, %c128_54] : memref<32x1152xbf16, #tpu.memory_space<vmem>>, vector<4x128xbf16>
    tpu.vector_store %arg9[%c4_53, %c128_54], %145 {strides = array<i32>} : memref<32x1152xbf16, #tpu.memory_space<vmem>>, vector<4x128xbf16>,
    %c41_55 = arith.constant 41 : index
    %c0_56 = arith.constant 0 : index
    %147 = tpu.strided_load %arg8[%c41_55, %c0_56] {strides = array<i32: 2, 1>} : memref<200x128xf32, #tpu.memory_space<vmem>>, vector<4x128xf32>
    %148 = arith.truncf %147 : vector<4x128xf32> to vector<4x128xbf16>
    %c8_57 = arith.constant 8 : index
    %c128_58 = arith.constant 128 : index
    %149 = vector.load %arg9[%c8_57, %c128_58] : memref<32x1152xbf16, #tpu.memory_space<vmem>>, vector<4x128xbf16>
    tpu.vector_store %arg9[%c8_57, %c128_58], %148 {strides = array<i32>} : memref<32x1152xbf16, #tpu.memory_space<vmem>>, vector<4x128xbf16>,
    %c61_59 = arith.constant 61 : index
    %c0_60 = arith.constant 0 : index
    %150 = tpu.strided_load %arg8[%c61_59, %c0_60] {strides = array<i32: 2, 1>} : memref<200x128xf32, #tpu.memory_space<vmem>>, vector<4x128xf32>
    %151 = arith.truncf %150 : vector<4x128xf32> to vector<4x128xbf16>
    %c12_61 = arith.constant 12 : index
    %c128_62 = arith.constant 128 : index
    %152 = vector.load %arg9[%c12_61, %c128_62] : memref<32x1152xbf16, #tpu.memory_space<vmem>>, vector<4x128xbf16>
    tpu.vector_store %arg9[%c12_61, %c128_62], %151 {strides = array<i32>} : memref<32x1152xbf16, #tpu.memory_space<vmem>>, vector<4x128xbf16>,
    %c101 = arith.constant 101 : index
    %c0_63 = arith.constant 0 : index
    %153 = tpu.strided_load %arg8[%c101, %c0_63] {strides = array<i32: 2, 1>} : memref<200x128xf32, #tpu.memory_space<vmem>>, vector<4x128xf32>
    %154 = arith.truncf %153 : vector<4x128xf32> to vector<4x128xbf16>
    %c16_64 = arith.constant 16 : index
    %c128_65 = arith.constant 128 : index
    %155 = vector.load %arg9[%c16_64, %c128_65] : memref<32x1152xbf16, #tpu.memory_space<vmem>>, vector<4x128xbf16>
    tpu.vector_store %arg9[%c16_64, %c128_65], %154 {strides = array<i32>} : memref<32x1152xbf16, #tpu.memory_space<vmem>>, vector<4x128xbf16>,
    %c121_66 = arith.constant 121 : index
    %c0_67 = arith.constant 0 : index
    %156 = tpu.strided_load %arg8[%c121_66, %c0_67] {strides = array<i32: 2, 1>} : memref<200x128xf32, #tpu.memory_space<vmem>>, vector<4x128xf32>
    %157 = arith.truncf %156 : vector<4x128xf32> to vector<4x128xbf16>
    %c20_68 = arith.constant 20 : index
    %c128_69 = arith.constant 128 : index
    %158 = vector.load %arg9[%c20_68, %c128_69] : memref<32x1152xbf16, #tpu.memory_space<vmem>>, vector<4x128xbf16>
    tpu.vector_store %arg9[%c20_68, %c128_69], %157 {strides = array<i32>} : memref<32x1152xbf16, #tpu.memory_space<vmem>>, vector<4x128xbf16>,
    %c141_70 = arith.constant 141 : index
    %c0_71 = arith.constant 0 : index
    %159 = tpu.strided_load %arg8[%c141_70, %c0_71] {strides = array<i32: 2, 1>} : memref<200x128xf32, #tpu.memory_space<vmem>>, vector<4x128xf32>
    %160 = arith.truncf %159 : vector<4x128xf32> to vector<4x128xbf16>
    %c24_72 = arith.constant 24 : index
    %c128_73 = arith.constant 128 : index
    %161 = vector.load %arg9[%c24_72, %c128_73] : memref<32x1152xbf16, #tpu.memory_space<vmem>>, vector<4x128xbf16>
    tpu.vector_store %arg9[%c24_72, %c128_73], %160 {strides = array<i32>} : memref<32x1152xbf16, #tpu.memory_space<vmem>>, vector<4x128xbf16>,
    %c161_74 = arith.constant 161 : index
    %c0_75 = arith.constant 0 : index
    %162 = tpu.strided_load %arg8[%c161_74, %c0_75] {strides = array<i32: 2, 1>} : memref<200x128xf32, #tpu.memory_space<vmem>>, vector<4x128xf32>
    %163 = arith.truncf %162 : vector<4x128xf32> to vector<4x128xbf16>
    %c28_76 = arith.constant 28 : index
    %c128_77 = arith.constant 128 : index
    %164 = vector.load %arg9[%c28_76, %c128_77] : memref<32x1152xbf16, #tpu.memory_space<vmem>>, vector<4x128xbf16>
    tpu.vector_store %arg9[%c28_76, %c128_77], %163 {strides = array<i32>} : memref<32x1152xbf16, #tpu.memory_space<vmem>>, vector<4x128xbf16>,
    %c2 = arith.constant 2 : index
    %c0_78 = arith.constant 0 : index
    %165 = tpu.strided_load %arg8[%c2, %c0_78] {strides = array<i32: 2, 1>} : memref<200x128xf32, #tpu.memory_space<vmem>>, vector<4x128xf32>
    %166 = arith.truncf %165 : vector<4x128xf32> to vector<4x128xbf16>
    %c0_79 = arith.constant 0 : index
    %c256 = arith.constant 256 : index
    %167 = vector.load %arg9[%c0_79, %c256] : memref<32x1152xbf16, #tpu.memory_space<vmem>>, vector<4x128xbf16>
    tpu.vector_store %arg9[%c0_79, %c256], %166 {strides = array<i32>} : memref<32x1152xbf16, #tpu.memory_space<vmem>>, vector<4x128xbf16>,
    %c22 = arith.constant 22 : index
    %c0_80 = arith.constant 0 : index
    %168 = tpu.strided_load %arg8[%c22, %c0_80] {strides = array<i32: 2, 1>} : memref<200x128xf32, #tpu.memory_space<vmem>>, vector<4x128xf32>
    %169 = arith.truncf %168 : vector<4x128xf32> to vector<4x128xbf16>
    %c4_81 = arith.constant 4 : index
    %c256_82 = arith.constant 256 : index
    %170 = vector.load %arg9[%c4_81, %c256_82] : memref<32x1152xbf16, #tpu.memory_space<vmem>>, vector<4x128xbf16>
    tpu.vector_store %arg9[%c4_81, %c256_82], %169 {strides = array<i32>} : memref<32x1152xbf16, #tpu.memory_space<vmem>>, vector<4x128xbf16>,
    %c42 = arith.constant 42 : index
    %c0_83 = arith.constant 0 : index
    %171 = tpu.strided_load %arg8[%c42, %c0_83] {strides = array<i32: 2, 1>} : memref<200x128xf32, #tpu.memory_space<vmem>>, vector<4x128xf32>
    %172 = arith.truncf %171 : vector<4x128xf32> to vector<4x128xbf16>
    %c8_84 = arith.constant 8 : index
    %c256_85 = arith.constant 256 : index
    %173 = vector.load %arg9[%c8_84, %c256_85] : memref<32x1152xbf16, #tpu.memory_space<vmem>>, vector<4x128xbf16>
    tpu.vector_store %arg9[%c8_84, %c256_85], %172 {strides = array<i32>} : memref<32x1152xbf16, #tpu.memory_space<vmem>>, vector<4x128xbf16>,
    %c62 = arith.constant 62 : index
    %c0_86 = arith.constant 0 : index
    %174 = tpu.strided_load %arg8[%c62, %c0_86] {strides = array<i32: 2, 1>} : memref<200x128xf32, #tpu.memory_space<vmem>>, vector<4x128xf32>
    %175 = arith.truncf %174 : vector<4x128xf32> to vector<4x128xbf16>
    %c12_87 = arith.constant 12 : index
    %c256_88 = arith.constant 256 : index
    %176 = vector.load %arg9[%c12_87, %c256_88] : memref<32x1152xbf16, #tpu.memory_space<vmem>>, vector<4x128xbf16>
    tpu.vector_store %arg9[%c12_87, %c256_88], %175 {strides = array<i32>} : memref<32x1152xbf16, #tpu.memory_space<vmem>>, vector<4x128xbf16>,
    %c102 = arith.constant 102 : index
    %c0_89 = arith.constant 0 : index
    %177 = tpu.strided_load %arg8[%c102, %c0_89] {strides = array<i32: 2, 1>} : memref<200x128xf32, #tpu.memory_space<vmem>>, vector<4x128xf32>
    %178 = arith.truncf %177 : vector<4x128xf32> to vector<4x128xbf16>
    %c16_90 = arith.constant 16 : index
    %c256_91 = arith.constant 256 : index
    %179 = vector.load %arg9[%c16_90, %c256_91] : memref<32x1152xbf16, #tpu.memory_space<vmem>>, vector<4x128xbf16>
    tpu.vector_store %arg9[%c16_90, %c256_91], %178 {strides = array<i32>} : memref<32x1152xbf16, #tpu.memory_space<vmem>>, vector<4x128xbf16>,
    %c122 = arith.constant 122 : index
    %c0_92 = arith.constant 0 : index
    %180 = tpu.strided_load %arg8[%c122, %c0_92] {strides = array<i32: 2, 1>} : memref<200x128xf32, #tpu.memory_space<vmem>>, vector<4x128xf32>
    %181 = arith.truncf %180 : vector<4x128xf32> to vector<4x128xbf16>
    %c20_93 = arith.constant 20 : index
    %c256_94 = arith.constant 256 : index
    %182 = vector.load %arg9[%c20_93, %c256_94] : memref<32x1152xbf16, #tpu.memory_space<vmem>>, vector<4x128xbf16>
    tpu.vector_store %arg9[%c20_93, %c256_94], %181 {strides = array<i32>} : memref<32x1152xbf16, #tpu.memory_space<vmem>>, vector<4x128xbf16>,
    %c142 = arith.constant 142 : index
    %c0_95 = arith.constant 0 : index
    %183 = tpu.strided_load %arg8[%c142, %c0_95] {strides = array<i32: 2, 1>} : memref<200x128xf32, #tpu.memory_space<vmem>>, vector<4x128xf32>
    %184 = arith.truncf %183 : vector<4x128xf32> to vector<4x128xbf16>
    %c24_96 = arith.constant 24 : index
    %c256_97 = arith.constant 256 : index
    %185 = vector.load %arg9[%c24_96, %c256_97] : memref<32x1152xbf16, #tpu.memory_space<vmem>>, vector<4x128xbf16>
    tpu.vector_store %arg9[%c24_96, %c256_97], %184 {strides = array<i32>} : memref<32x1152xbf16, #tpu.memory_space<vmem>>, vector<4x128xbf16>,
    %c162 = arith.constant 162 : index
    %c0_98 = arith.constant 0 : index
    %186 = tpu.strided_load %arg8[%c162, %c0_98] {strides = array<i32: 2, 1>} : memref<200x128xf32, #tpu.memory_space<vmem>>, vector<4x128xf32>
    %187 = arith.truncf %186 : vector<4x128xf32> to vector<4x128xbf16>
    %c28_99 = arith.constant 28 : index
    %c256_100 = arith.constant 256 : index
    %188 = vector.load %arg9[%c28_99, %c256_100] : memref<32x1152xbf16, #tpu.memory_space<vmem>>, vector<4x128xbf16>
    tpu.vector_store %arg9[%c28_99, %c256_100], %187 {strides = array<i32>} : memref<32x1152xbf16, #tpu.memory_space<vmem>>, vector<4x128xbf16>,
    %c10 = arith.constant 10 : index
    %c0_101 = arith.constant 0 : index
    %189 = tpu.strided_load %arg8[%c10, %c0_101] {strides = array<i32: 2, 1>} : memref<200x128xf32, #tpu.memory_space<vmem>>, vector<4x128xf32>
    %190 = arith.truncf %189 : vector<4x128xf32> to vector<4x128xbf16>
    %c0_102 = arith.constant 0 : index
    %c384 = arith.constant 384 : index
    %191 = vector.load %arg9[%c0_102, %c384] : memref<32x1152xbf16, #tpu.memory_space<vmem>>, vector<4x128xbf16>
    tpu.vector_store %arg9[%c0_102, %c384], %190 {strides = array<i32>} : memref<32x1152xbf16, #tpu.memory_space<vmem>>, vector<4x128xbf16>,
    %c30 = arith.constant 30 : index
    %c0_103 = arith.constant 0 : index
    %192 = tpu.strided_load %arg8[%c30, %c0_103] {strides = array<i32: 2, 1>} : memref<200x128xf32, #tpu.memory_space<vmem>>, vector<4x128xf32>
    %193 = arith.truncf %192 : vector<4x128xf32> to vector<4x128xbf16>
    %c4_104 = arith.constant 4 : index
    %c384_105 = arith.constant 384 : index
    %194 = vector.load %arg9[%c4_104, %c384_105] : memref<32x1152xbf16, #tpu.memory_space<vmem>>, vector<4x128xbf16>
    tpu.vector_store %arg9[%c4_104, %c384_105], %193 {strides = array<i32>} : memref<32x1152xbf16, #tpu.memory_space<vmem>>, vector<4x128xbf16>,
    %c50 = arith.constant 50 : index
    %c0_106 = arith.constant 0 : index
    %195 = tpu.strided_load %arg8[%c50, %c0_106] {strides = array<i32: 2, 1>} : memref<200x128xf32, #tpu.memory_space<vmem>>, vector<4x128xf32>
    %196 = arith.truncf %195 : vector<4x128xf32> to vector<4x128xbf16>
    %c8_107 = arith.constant 8 : index
    %c384_108 = arith.constant 384 : index
    %197 = vector.load %arg9[%c8_107, %c384_108] : memref<32x1152xbf16, #tpu.memory_space<vmem>>, vector<4x128xbf16>
    tpu.vector_store %arg9[%c8_107, %c384_108], %196 {strides = array<i32>} : memref<32x1152xbf16, #tpu.memory_space<vmem>>, vector<4x128xbf16>,
    %c70 = arith.constant 70 : index
    %c0_109 = arith.constant 0 : index
    %198 = tpu.strided_load %arg8[%c70, %c0_109] {strides = array<i32: 2, 1>} : memref<200x128xf32, #tpu.memory_space<vmem>>, vector<4x128xf32>
    %199 = arith.truncf %198 : vector<4x128xf32> to vector<4x128xbf16>
    %c12_110 = arith.constant 12 : index
    %c384_111 = arith.constant 384 : index
    %200 = vector.load %arg9[%c12_110, %c384_111] : memref<32x1152xbf16, #tpu.memory_space<vmem>>, vector<4x128xbf16>
    tpu.vector_store %arg9[%c12_110, %c384_111], %199 {strides = array<i32>} : memref<32x1152xbf16, #tpu.memory_space<vmem>>, vector<4x128xbf16>,
    %c110 = arith.constant 110 : index
    %c0_112 = arith.constant 0 : index
    %201 = tpu.strided_load %arg8[%c110, %c0_112] {strides = array<i32: 2, 1>} : memref<200x128xf32, #tpu.memory_space<vmem>>, vector<4x128xf32>
    %202 = arith.truncf %201 : vector<4x128xf32> to vector<4x128xbf16>
    %c16_113 = arith.constant 16 : index
    %c384_114 = arith.constant 384 : index
    %203 = vector.load %arg9[%c16_113, %c384_114] : memref<32x1152xbf16, #tpu.memory_space<vmem>>, vector<4x128xbf16>
    tpu.vector_store %arg9[%c16_113, %c384_114], %202 {strides = array<i32>} : memref<32x1152xbf16, #tpu.memory_space<vmem>>, vector<4x128xbf16>,
    %c130 = arith.constant 130 : index
    %c0_115 = arith.constant 0 : index
    %204 = tpu.strided_load %arg8[%c130, %c0_115] {strides = array<i32: 2, 1>} : memref<200x128xf32, #tpu.memory_space<vmem>>, vector<4x128xf32>
    %205 = arith.truncf %204 : vector<4x128xf32> to vector<4x128xbf16>
    %c20_116 = arith.constant 20 : index
    %c384_117 = arith.constant 384 : index
    %206 = vector.load %arg9[%c20_116, %c384_117] : memref<32x1152xbf16, #tpu.memory_space<vmem>>, vector<4x128xbf16>
    tpu.vector_store %arg9[%c20_116, %c384_117], %205 {strides = array<i32>} : memref<32x1152xbf16, #tpu.memory_space<vmem>>, vector<4x128xbf16>,
    %c150 = arith.constant 150 : index
    %c0_118 = arith.constant 0 : index
    %207 = tpu.strided_load %arg8[%c150, %c0_118] {strides = array<i32: 2, 1>} : memref<200x128xf32, #tpu.memory_space<vmem>>, vector<4x128xf32>
    %208 = arith.truncf %207 : vector<4x128xf32> to vector<4x128xbf16>
    %c24_119 = arith.constant 24 : index
    %c384_120 = arith.constant 384 : index
    %209 = vector.load %arg9[%c24_119, %c384_120] : memref<32x1152xbf16, #tpu.memory_space<vmem>>, vector<4x128xbf16>
    tpu.vector_store %arg9[%c24_119, %c384_120], %208 {strides = array<i32>} : memref<32x1152xbf16, #tpu.memory_space<vmem>>, vector<4x128xbf16>,
    %c170 = arith.constant 170 : index
    %c0_121 = arith.constant 0 : index
    %210 = tpu.strided_load %arg8[%c170, %c0_121] {strides = array<i32: 2, 1>} : memref<200x128xf32, #tpu.memory_space<vmem>>, vector<4x128xf32>
    %211 = arith.truncf %210 : vector<4x128xf32> to vector<4x128xbf16>
    %c28_122 = arith.constant 28 : index
    %c384_123 = arith.constant 384 : index
    %212 = vector.load %arg9[%c28_122, %c384_123] : memref<32x1152xbf16, #tpu.memory_space<vmem>>, vector<4x128xbf16>
    tpu.vector_store %arg9[%c28_122, %c384_123], %211 {strides = array<i32>} : memref<32x1152xbf16, #tpu.memory_space<vmem>>, vector<4x128xbf16>,
    %c11_124 = arith.constant 11 : index
    %c0_125 = arith.constant 0 : index
    %213 = tpu.strided_load %arg8[%c11_124, %c0_125] {strides = array<i32: 2, 1>} : memref<200x128xf32, #tpu.memory_space<vmem>>, vector<4x128xf32>
    %214 = arith.truncf %213 : vector<4x128xf32> to vector<4x128xbf16>
    %c0_126 = arith.constant 0 : index
    %c512 = arith.constant 512 : index
    %215 = vector.load %arg9[%c0_126, %c512] : memref<32x1152xbf16, #tpu.memory_space<vmem>>, vector<4x128xbf16>
    tpu.vector_store %arg9[%c0_126, %c512], %214 {strides = array<i32>} : memref<32x1152xbf16, #tpu.memory_space<vmem>>, vector<4x128xbf16>,
    %c31_127 = arith.constant 31 : index
    %c0_128 = arith.constant 0 : index
    %216 = tpu.strided_load %arg8[%c31_127, %c0_128] {strides = array<i32: 2, 1>} : memref<200x128xf32, #tpu.memory_space<vmem>>, vector<4x128xf32>
    %217 = arith.truncf %216 : vector<4x128xf32> to vector<4x128xbf16>
    %c4_129 = arith.constant 4 : index
    %c512_130 = arith.constant 512 : index
    %218 = vector.load %arg9[%c4_129, %c512_130] : memref<32x1152xbf16, #tpu.memory_space<vmem>>, vector<4x128xbf16>
    tpu.vector_store %arg9[%c4_129, %c512_130], %217 {strides = array<i32>} : memref<32x1152xbf16, #tpu.memory_space<vmem>>, vector<4x128xbf16>,
    %c51_131 = arith.constant 51 : index
    %c0_132 = arith.constant 0 : index
    %219 = tpu.strided_load %arg8[%c51_131, %c0_132] {strides = array<i32: 2, 1>} : memref<200x128xf32, #tpu.memory_space<vmem>>, vector<4x128xf32>
    %220 = arith.truncf %219 : vector<4x128xf32> to vector<4x128xbf16>
    %c8_133 = arith.constant 8 : index
    %c512_134 = arith.constant 512 : index
    %221 = vector.load %arg9[%c8_133, %c512_134] : memref<32x1152xbf16, #tpu.memory_space<vmem>>, vector<4x128xbf16>
    tpu.vector_store %arg9[%c8_133, %c512_134], %220 {strides = array<i32>} : memref<32x1152xbf16, #tpu.memory_space<vmem>>, vector<4x128xbf16>,
    %c71_135 = arith.constant 71 : index
    %c0_136 = arith.constant 0 : index
    %222 = tpu.strided_load %arg8[%c71_135, %c0_136] {strides = array<i32: 2, 1>} : memref<200x128xf32, #tpu.memory_space<vmem>>, vector<4x128xf32>
    %223 = arith.truncf %222 : vector<4x128xf32> to vector<4x128xbf16>
    %c12_137 = arith.constant 12 : index
    %c512_138 = arith.constant 512 : index
    %224 = vector.load %arg9[%c12_137, %c512_138] : memref<32x1152xbf16, #tpu.memory_space<vmem>>, vector<4x128xbf16>
    tpu.vector_store %arg9[%c12_137, %c512_138], %223 {strides = array<i32>} : memref<32x1152xbf16, #tpu.memory_space<vmem>>, vector<4x128xbf16>,
    %c111_139 = arith.constant 111 : index
    %c0_140 = arith.constant 0 : index
    %225 = tpu.strided_load %arg8[%c111_139, %c0_140] {strides = array<i32: 2, 1>} : memref<200x128xf32, #tpu.memory_space<vmem>>, vector<4x128xf32>
    %226 = arith.truncf %225 : vector<4x128xf32> to vector<4x128xbf16>
    %c16_141 = arith.constant 16 : index
    %c512_142 = arith.constant 512 : index
    %227 = vector.load %arg9[%c16_141, %c512_142] : memref<32x1152xbf16, #tpu.memory_space<vmem>>, vector<4x128xbf16>
    tpu.vector_store %arg9[%c16_141, %c512_142], %226 {strides = array<i32>} : memref<32x1152xbf16, #tpu.memory_space<vmem>>, vector<4x128xbf16>,
    %c131_143 = arith.constant 131 : index
    %c0_144 = arith.constant 0 : index
    %228 = tpu.strided_load %arg8[%c131_143, %c0_144] {strides = array<i32: 2, 1>} : memref<200x128xf32, #tpu.memory_space<vmem>>, vector<4x128xf32>
    %229 = arith.truncf %228 : vector<4x128xf32> to vector<4x128xbf16>
    %c20_145 = arith.constant 20 : index
    %c512_146 = arith.constant 512 : index
    %230 = vector.load %arg9[%c20_145, %c512_146] : memref<32x1152xbf16, #tpu.memory_space<vmem>>, vector<4x128xbf16>
    tpu.vector_store %arg9[%c20_145, %c512_146], %229 {strides = array<i32>} : memref<32x1152xbf16, #tpu.memory_space<vmem>>, vector<4x128xbf16>,
    %c151_147 = arith.constant 151 : index
    %c0_148 = arith.constant 0 : index
    %231 = tpu.strided_load %arg8[%c151_147, %c0_148] {strides = array<i32: 2, 1>} : memref<200x128xf32, #tpu.memory_space<vmem>>, vector<4x128xf32>
    %232 = arith.truncf %231 : vector<4x128xf32> to vector<4x128xbf16>
    %c24_149 = arith.constant 24 : index
    %c512_150 = arith.constant 512 : index
    %233 = vector.load %arg9[%c24_149, %c512_150] : memref<32x1152xbf16, #tpu.memory_space<vmem>>, vector<4x128xbf16>
    tpu.vector_store %arg9[%c24_149, %c512_150], %232 {strides = array<i32>} : memref<32x1152xbf16, #tpu.memory_space<vmem>>, vector<4x128xbf16>,
    %c171_151 = arith.constant 171 : index
    %c0_152 = arith.constant 0 : index
    %234 = tpu.strided_load %arg8[%c171_151, %c0_152] {strides = array<i32: 2, 1>} : memref<200x128xf32, #tpu.memory_space<vmem>>, vector<4x128xf32>
    %235 = arith.truncf %234 : vector<4x128xf32> to vector<4x128xbf16>
    %c28_153 = arith.constant 28 : index
    %c512_154 = arith.constant 512 : index
    %236 = vector.load %arg9[%c28_153, %c512_154] : memref<32x1152xbf16, #tpu.memory_space<vmem>>, vector<4x128xbf16>
    tpu.vector_store %arg9[%c28_153, %c512_154], %235 {strides = array<i32>} : memref<32x1152xbf16, #tpu.memory_space<vmem>>, vector<4x128xbf16>,
    %c12_155 = arith.constant 12 : index
    %c0_156 = arith.constant 0 : index
    %237 = tpu.strided_load %arg8[%c12_155, %c0_156] {strides = array<i32: 2, 1>} : memref<200x128xf32, #tpu.memory_space<vmem>>, vector<4x128xf32>
    %238 = arith.truncf %237 : vector<4x128xf32> to vector<4x128xbf16>
    %c0_157 = arith.constant 0 : index
    %c640 = arith.constant 640 : index
    %239 = vector.load %arg9[%c0_157, %c640] : memref<32x1152xbf16, #tpu.memory_space<vmem>>, vector<4x128xbf16>
    tpu.vector_store %arg9[%c0_157, %c640], %238 {strides = array<i32>} : memref<32x1152xbf16, #tpu.memory_space<vmem>>, vector<4x128xbf16>,
    %c32 = arith.constant 32 : index
    %c0_158 = arith.constant 0 : index
    %240 = tpu.strided_load %arg8[%c32, %c0_158] {strides = array<i32: 2, 1>} : memref<200x128xf32, #tpu.memory_space<vmem>>, vector<4x128xf32>
    %241 = arith.truncf %240 : vector<4x128xf32> to vector<4x128xbf16>
    %c4_159 = arith.constant 4 : index
    %c640_160 = arith.constant 640 : index
    %242 = vector.load %arg9[%c4_159, %c640_160] : memref<32x1152xbf16, #tpu.memory_space<vmem>>, vector<4x128xbf16>
    tpu.vector_store %arg9[%c4_159, %c640_160], %241 {strides = array<i32>} : memref<32x1152xbf16, #tpu.memory_space<vmem>>, vector<4x128xbf16>,
    %c52 = arith.constant 52 : index
    %c0_161 = arith.constant 0 : index
    %243 = tpu.strided_load %arg8[%c52, %c0_161] {strides = array<i32: 2, 1>} : memref<200x128xf32, #tpu.memory_space<vmem>>, vector<4x128xf32>
    %244 = arith.truncf %243 : vector<4x128xf32> to vector<4x128xbf16>
    %c8_162 = arith.constant 8 : index
    %c640_163 = arith.constant 640 : index
    %245 = vector.load %arg9[%c8_162, %c640_163] : memref<32x1152xbf16, #tpu.memory_space<vmem>>, vector<4x128xbf16>
    tpu.vector_store %arg9[%c8_162, %c640_163], %244 {strides = array<i32>} : memref<32x1152xbf16, #tpu.memory_space<vmem>>, vector<4x128xbf16>,
    %c72 = arith.constant 72 : index
    %c0_164 = arith.constant 0 : index
    %246 = tpu.strided_load %arg8[%c72, %c0_164] {strides = array<i32: 2, 1>} : memref<200x128xf32, #tpu.memory_space<vmem>>, vector<4x128xf32>
    %247 = arith.truncf %246 : vector<4x128xf32> to vector<4x128xbf16>
    %c12_165 = arith.constant 12 : index
    %c640_166 = arith.constant 640 : index
    %248 = vector.load %arg9[%c12_165, %c640_166] : memref<32x1152xbf16, #tpu.memory_space<vmem>>, vector<4x128xbf16>
    tpu.vector_store %arg9[%c12_165, %c640_166], %247 {strides = array<i32>} : memref<32x1152xbf16, #tpu.memory_space<vmem>>, vector<4x128xbf16>,
    %c112 = arith.constant 112 : index
    %c0_167 = arith.constant 0 : index
    %249 = tpu.strided_load %arg8[%c112, %c0_167] {strides = array<i32: 2, 1>} : memref<200x128xf32, #tpu.memory_space<vmem>>, vector<4x128xf32>
    %250 = arith.truncf %249 : vector<4x128xf32> to vector<4x128xbf16>
    %c16_168 = arith.constant 16 : index
    %c640_169 = arith.constant 640 : index
    %251 = vector.load %arg9[%c16_168, %c640_169] : memref<32x1152xbf16, #tpu.memory_space<vmem>>, vector<4x128xbf16>
    tpu.vector_store %arg9[%c16_168, %c640_169], %250 {strides = array<i32>} : memref<32x1152xbf16, #tpu.memory_space<vmem>>, vector<4x128xbf16>,
    %c132 = arith.constant 132 : index
    %c0_170 = arith.constant 0 : index
    %252 = tpu.strided_load %arg8[%c132, %c0_170] {strides = array<i32: 2, 1>} : memref<200x128xf32, #tpu.memory_space<vmem>>, vector<4x128xf32>
    %253 = arith.truncf %252 : vector<4x128xf32> to vector<4x128xbf16>
    %c20_171 = arith.constant 20 : index
    %c640_172 = arith.constant 640 : index
    %254 = vector.load %arg9[%c20_171, %c640_172] : memref<32x1152xbf16, #tpu.memory_space<vmem>>, vector<4x128xbf16>
    tpu.vector_store %arg9[%c20_171, %c640_172], %253 {strides = array<i32>} : memref<32x1152xbf16, #tpu.memory_space<vmem>>, vector<4x128xbf16>,
    %c152 = arith.constant 152 : index
    %c0_173 = arith.constant 0 : index
    %255 = tpu.strided_load %arg8[%c152, %c0_173] {strides = array<i32: 2, 1>} : memref<200x128xf32, #tpu.memory_space<vmem>>, vector<4x128xf32>
    %256 = arith.truncf %255 : vector<4x128xf32> to vector<4x128xbf16>
    %c24_174 = arith.constant 24 : index
    %c640_175 = arith.constant 640 : index
    %257 = vector.load %arg9[%c24_174, %c640_175] : memref<32x1152xbf16, #tpu.memory_space<vmem>>, vector<4x128xbf16>
    tpu.vector_store %arg9[%c24_174, %c640_175], %256 {strides = array<i32>} : memref<32x1152xbf16, #tpu.memory_space<vmem>>, vector<4x128xbf16>,
    %c172 = arith.constant 172 : index
    %c0_176 = arith.constant 0 : index
    %258 = tpu.strided_load %arg8[%c172, %c0_176] {strides = array<i32: 2, 1>} : memref<200x128xf32, #tpu.memory_space<vmem>>, vector<4x128xf32>
    %259 = arith.truncf %258 : vector<4x128xf32> to vector<4x128xbf16>
    %c28_177 = arith.constant 28 : index
    %c640_178 = arith.constant 640 : index
    %260 = vector.load %arg9[%c28_177, %c640_178] : memref<32x1152xbf16, #tpu.memory_space<vmem>>, vector<4x128xbf16>
    tpu.vector_store %arg9[%c28_177, %c640_178], %259 {strides = array<i32>} : memref<32x1152xbf16, #tpu.memory_space<vmem>>, vector<4x128xbf16>,
    %c20_179 = arith.constant 20 : index
    %c0_180 = arith.constant 0 : index
    %261 = tpu.strided_load %arg8[%c20_179, %c0_180] {strides = array<i32: 2, 1>} : memref<200x128xf32, #tpu.memory_space<vmem>>, vector<4x128xf32>
    %262 = arith.truncf %261 : vector<4x128xf32> to vector<4x128xbf16>
    %c0_181 = arith.constant 0 : index
    %c768 = arith.constant 768 : index
    %263 = vector.load %arg9[%c0_181, %c768] : memref<32x1152xbf16, #tpu.memory_space<vmem>>, vector<4x128xbf16>
    tpu.vector_store %arg9[%c0_181, %c768], %262 {strides = array<i32>} : memref<32x1152xbf16, #tpu.memory_space<vmem>>, vector<4x128xbf16>,
    %c40_182 = arith.constant 40 : index
    %c0_183 = arith.constant 0 : index
    %264 = tpu.strided_load %arg8[%c40_182, %c0_183] {strides = array<i32: 2, 1>} : memref<200x128xf32, #tpu.memory_space<vmem>>, vector<4x128xf32>
    %265 = arith.truncf %264 : vector<4x128xf32> to vector<4x128xbf16>
    %c4_184 = arith.constant 4 : index
    %c768_185 = arith.constant 768 : index
    %266 = vector.load %arg9[%c4_184, %c768_185] : memref<32x1152xbf16, #tpu.memory_space<vmem>>, vector<4x128xbf16>
    tpu.vector_store %arg9[%c4_184, %c768_185], %265 {strides = array<i32>} : memref<32x1152xbf16, #tpu.memory_space<vmem>>, vector<4x128xbf16>,
    %c60_186 = arith.constant 60 : index
    %c0_187 = arith.constant 0 : index
    %267 = tpu.strided_load %arg8[%c60_186, %c0_187] {strides = array<i32: 2, 1>} : memref<200x128xf32, #tpu.memory_space<vmem>>, vector<4x128xf32>
    %268 = arith.truncf %267 : vector<4x128xf32> to vector<4x128xbf16>
    %c8_188 = arith.constant 8 : index
    %c768_189 = arith.constant 768 : index
    %269 = vector.load %arg9[%c8_188, %c768_189] : memref<32x1152xbf16, #tpu.memory_space<vmem>>, vector<4x128xbf16>
    tpu.vector_store %arg9[%c8_188, %c768_189], %268 {strides = array<i32>} : memref<32x1152xbf16, #tpu.memory_space<vmem>>, vector<4x128xbf16>,
    %c80 = arith.constant 80 : index
    %c0_190 = arith.constant 0 : index
    %270 = tpu.strided_load %arg8[%c80, %c0_190] {strides = array<i32: 2, 1>} : memref<200x128xf32, #tpu.memory_space<vmem>>, vector<4x128xf32>
    %271 = arith.truncf %270 : vector<4x128xf32> to vector<4x128xbf16>
    %c12_191 = arith.constant 12 : index
    %c768_192 = arith.constant 768 : index
    %272 = vector.load %arg9[%c12_191, %c768_192] : memref<32x1152xbf16, #tpu.memory_space<vmem>>, vector<4x128xbf16>
    tpu.vector_store %arg9[%c12_191, %c768_192], %271 {strides = array<i32>} : memref<32x1152xbf16, #tpu.memory_space<vmem>>, vector<4x128xbf16>,
    %c120_193 = arith.constant 120 : index
    %c0_194 = arith.constant 0 : index
    %273 = tpu.strided_load %arg8[%c120_193, %c0_194] {strides = array<i32: 2, 1>} : memref<200x128xf32, #tpu.memory_space<vmem>>, vector<4x128xf32>
    %274 = arith.truncf %273 : vector<4x128xf32> to vector<4x128xbf16>
    %c16_195 = arith.constant 16 : index
    %c768_196 = arith.constant 768 : index
    %275 = vector.load %arg9[%c16_195, %c768_196] : memref<32x1152xbf16, #tpu.memory_space<vmem>>, vector<4x128xbf16>
    tpu.vector_store %arg9[%c16_195, %c768_196], %274 {strides = array<i32>} : memref<32x1152xbf16, #tpu.memory_space<vmem>>, vector<4x128xbf16>,
    %c140_197 = arith.constant 140 : index
    %c0_198 = arith.constant 0 : index
    %276 = tpu.strided_load %arg8[%c140_197, %c0_198] {strides = array<i32: 2, 1>} : memref<200x128xf32, #tpu.memory_space<vmem>>, vector<4x128xf32>
    %277 = arith.truncf %276 : vector<4x128xf32> to vector<4x128xbf16>
    %c20_199 = arith.constant 20 : index
    %c768_200 = arith.constant 768 : index
    %278 = vector.load %arg9[%c20_199, %c768_200] : memref<32x1152xbf16, #tpu.memory_space<vmem>>, vector<4x128xbf16>
    tpu.vector_store %arg9[%c20_199, %c768_200], %277 {strides = array<i32>} : memref<32x1152xbf16, #tpu.memory_space<vmem>>, vector<4x128xbf16>,
    %c160_201 = arith.constant 160 : index
    %c0_202 = arith.constant 0 : index
    %279 = tpu.strided_load %arg8[%c160_201, %c0_202] {strides = array<i32: 2, 1>} : memref<200x128xf32, #tpu.memory_space<vmem>>, vector<4x128xf32>
    %280 = arith.truncf %279 : vector<4x128xf32> to vector<4x128xbf16>
    %c24_203 = arith.constant 24 : index
    %c768_204 = arith.constant 768 : index
    %281 = vector.load %arg9[%c24_203, %c768_204] : memref<32x1152xbf16, #tpu.memory_space<vmem>>, vector<4x128xbf16>
    tpu.vector_store %arg9[%c24_203, %c768_204], %280 {strides = array<i32>} : memref<32x1152xbf16, #tpu.memory_space<vmem>>, vector<4x128xbf16>,
    %c180 = arith.constant 180 : index
    %c0_205 = arith.constant 0 : index
    %282 = tpu.strided_load %arg8[%c180, %c0_205] {strides = array<i32: 2, 1>} : memref<200x128xf32, #tpu.memory_space<vmem>>, vector<4x128xf32>
    %283 = arith.truncf %282 : vector<4x128xf32> to vector<4x128xbf16>
    %c28_206 = arith.constant 28 : index
    %c768_207 = arith.constant 768 : index
    %284 = vector.load %arg9[%c28_206, %c768_207] : memref<32x1152xbf16, #tpu.memory_space<vmem>>, vector<4x128xbf16>
    tpu.vector_store %arg9[%c28_206, %c768_207], %283 {strides = array<i32>} : memref<32x1152xbf16, #tpu.memory_space<vmem>>, vector<4x128xbf16>,
    %c21_208 = arith.constant 21 : index
    %c0_209 = arith.constant 0 : index
    %285 = tpu.strided_load %arg8[%c21_208, %c0_209] {strides = array<i32: 2, 1>} : memref<200x128xf32, #tpu.memory_space<vmem>>, vector<4x128xf32>
    %286 = arith.truncf %285 : vector<4x128xf32> to vector<4x128xbf16>
    %c0_210 = arith.constant 0 : index
    %c896 = arith.constant 896 : index
    %287 = vector.load %arg9[%c0_210, %c896] : memref<32x1152xbf16, #tpu.memory_space<vmem>>, vector<4x128xbf16>
    tpu.vector_store %arg9[%c0_210, %c896], %286 {strides = array<i32>} : memref<32x1152xbf16, #tpu.memory_space<vmem>>, vector<4x128xbf16>,
    %c41_211 = arith.constant 41 : index
    %c0_212 = arith.constant 0 : index
    %288 = tpu.strided_load %arg8[%c41_211, %c0_212] {strides = array<i32: 2, 1>} : memref<200x128xf32, #tpu.memory_space<vmem>>, vector<4x128xf32>
    %289 = arith.truncf %288 : vector<4x128xf32> to vector<4x128xbf16>
    %c4_213 = arith.constant 4 : index
    %c896_214 = arith.constant 896 : index
    %290 = vector.load %arg9[%c4_213, %c896_214] : memref<32x1152xbf16, #tpu.memory_space<vmem>>, vector<4x128xbf16>
    tpu.vector_store %arg9[%c4_213, %c896_214], %289 {strides = array<i32>} : memref<32x1152xbf16, #tpu.memory_space<vmem>>, vector<4x128xbf16>,
    %c61_215 = arith.constant 61 : index
    %c0_216 = arith.constant 0 : index
    %291 = tpu.strided_load %arg8[%c61_215, %c0_216] {strides = array<i32: 2, 1>} : memref<200x128xf32, #tpu.memory_space<vmem>>, vector<4x128xf32>
    %292 = arith.truncf %291 : vector<4x128xf32> to vector<4x128xbf16>
    %c8_217 = arith.constant 8 : index
    %c896_218 = arith.constant 896 : index
    %293 = vector.load %arg9[%c8_217, %c896_218] : memref<32x1152xbf16, #tpu.memory_space<vmem>>, vector<4x128xbf16>
    tpu.vector_store %arg9[%c8_217, %c896_218], %292 {strides = array<i32>} : memref<32x1152xbf16, #tpu.memory_space<vmem>>, vector<4x128xbf16>,
    %c81_219 = arith.constant 81 : index
    %c0_220 = arith.constant 0 : index
    %294 = tpu.strided_load %arg8[%c81_219, %c0_220] {strides = array<i32: 2, 1>} : memref<200x128xf32, #tpu.memory_space<vmem>>, vector<4x128xf32>
    %295 = arith.truncf %294 : vector<4x128xf32> to vector<4x128xbf16>
    %c12_221 = arith.constant 12 : index
    %c896_222 = arith.constant 896 : index
    %296 = vector.load %arg9[%c12_221, %c896_222] : memref<32x1152xbf16, #tpu.memory_space<vmem>>, vector<4x128xbf16>
    tpu.vector_store %arg9[%c12_221, %c896_222], %295 {strides = array<i32>} : memref<32x1152xbf16, #tpu.memory_space<vmem>>, vector<4x128xbf16>,
    %c121_223 = arith.constant 121 : index
    %c0_224 = arith.constant 0 : index
    %297 = tpu.strided_load %arg8[%c121_223, %c0_224] {strides = array<i32: 2, 1>} : memref<200x128xf32, #tpu.memory_space<vmem>>, vector<4x128xf32>
    %298 = arith.truncf %297 : vector<4x128xf32> to vector<4x128xbf16>
    %c16_225 = arith.constant 16 : index
    %c896_226 = arith.constant 896 : index
    %299 = vector.load %arg9[%c16_225, %c896_226] : memref<32x1152xbf16, #tpu.memory_space<vmem>>, vector<4x128xbf16>
    tpu.vector_store %arg9[%c16_225, %c896_226], %298 {strides = array<i32>} : memref<32x1152xbf16, #tpu.memory_space<vmem>>, vector<4x128xbf16>,
    %c141_227 = arith.constant 141 : index
    %c0_228 = arith.constant 0 : index
    %300 = tpu.strided_load %arg8[%c141_227, %c0_228] {strides = array<i32: 2, 1>} : memref<200x128xf32, #tpu.memory_space<vmem>>, vector<4x128xf32>
    %301 = arith.truncf %300 : vector<4x128xf32> to vector<4x128xbf16>
    %c20_229 = arith.constant 20 : index
    %c896_230 = arith.constant 896 : index
    %302 = vector.load %arg9[%c20_229, %c896_230] : memref<32x1152xbf16, #tpu.memory_space<vmem>>, vector<4x128xbf16>
    tpu.vector_store %arg9[%c20_229, %c896_230], %301 {strides = array<i32>} : memref<32x1152xbf16, #tpu.memory_space<vmem>>, vector<4x128xbf16>,
    %c161_231 = arith.constant 161 : index
    %c0_232 = arith.constant 0 : index
    %303 = tpu.strided_load %arg8[%c161_231, %c0_232] {strides = array<i32: 2, 1>} : memref<200x128xf32, #tpu.memory_space<vmem>>, vector<4x128xf32>
    %304 = arith.truncf %303 : vector<4x128xf32> to vector<4x128xbf16>
    %c24_233 = arith.constant 24 : index
    %c896_234 = arith.constant 896 : index
    %305 = vector.load %arg9[%c24_233, %c896_234] : memref<32x1152xbf16, #tpu.memory_space<vmem>>, vector<4x128xbf16>
    tpu.vector_store %arg9[%c24_233, %c896_234], %304 {strides = array<i32>} : memref<32x1152xbf16, #tpu.memory_space<vmem>>, vector<4x128xbf16>,
    %c181_235 = arith.constant 181 : index
    %c0_236 = arith.constant 0 : index
    %306 = tpu.strided_load %arg8[%c181_235, %c0_236] {strides = array<i32: 2, 1>} : memref<200x128xf32, #tpu.memory_space<vmem>>, vector<4x128xf32>
    %307 = arith.truncf %306 : vector<4x128xf32> to vector<4x128xbf16>
    %c28_237 = arith.constant 28 : index
    %c896_238 = arith.constant 896 : index
    %308 = vector.load %arg9[%c28_237, %c896_238] : memref<32x1152xbf16, #tpu.memory_space<vmem>>, vector<4x128xbf16>
    tpu.vector_store %arg9[%c28_237, %c896_238], %307 {strides = array<i32>} : memref<32x1152xbf16, #tpu.memory_space<vmem>>, vector<4x128xbf16>,
    %c22_239 = arith.constant 22 : index
    %c0_240 = arith.constant 0 : index
    %309 = tpu.strided_load %arg8[%c22_239, %c0_240] {strides = array<i32: 2, 1>} : memref<200x128xf32, #tpu.memory_space<vmem>>, vector<4x128xf32>
    %310 = arith.truncf %309 : vector<4x128xf32> to vector<4x128xbf16>
    %c0_241 = arith.constant 0 : index
    %c1024 = arith.constant 1024 : index
    %311 = vector.load %arg9[%c0_241, %c1024] : memref<32x1152xbf16, #tpu.memory_space<vmem>>, vector<4x128xbf16>
    tpu.vector_store %arg9[%c0_241, %c1024], %310 {strides = array<i32>} : memref<32x1152xbf16, #tpu.memory_space<vmem>>, vector<4x128xbf16>,
    %c42_242 = arith.constant 42 : index
    %c0_243 = arith.constant 0 : index
    %312 = tpu.strided_load %arg8[%c42_242, %c0_243] {strides = array<i32: 2, 1>} : memref<200x128xf32, #tpu.memory_space<vmem>>, vector<4x128xf32>
    %313 = arith.truncf %312 : vector<4x128xf32> to vector<4x128xbf16>
    %c4_244 = arith.constant 4 : index
    %c1024_245 = arith.constant 1024 : index
    %314 = vector.load %arg9[%c4_244, %c1024_245] : memref<32x1152xbf16, #tpu.memory_space<vmem>>, vector<4x128xbf16>
    tpu.vector_store %arg9[%c4_244, %c1024_245], %313 {strides = array<i32>} : memref<32x1152xbf16, #tpu.memory_space<vmem>>, vector<4x128xbf16>,
    %c62_246 = arith.constant 62 : index
    %c0_247 = arith.constant 0 : index
    %315 = tpu.strided_load %arg8[%c62_246, %c0_247] {strides = array<i32: 2, 1>} : memref<200x128xf32, #tpu.memory_space<vmem>>, vector<4x128xf32>
    %316 = arith.truncf %315 : vector<4x128xf32> to vector<4x128xbf16>
    %c8_248 = arith.constant 8 : index
    %c1024_249 = arith.constant 1024 : index
    %317 = vector.load %arg9[%c8_248, %c1024_249] : memref<32x1152xbf16, #tpu.memory_space<vmem>>, vector<4x128xbf16>
    tpu.vector_store %arg9[%c8_248, %c1024_249], %316 {strides = array<i32>} : memref<32x1152xbf16, #tpu.memory_space<vmem>>, vector<4x128xbf16>,
    %c82 = arith.constant 82 : index
    %c0_250 = arith.constant 0 : index
    %318 = tpu.strided_load %arg8[%c82, %c0_250] {strides = array<i32: 2, 1>} : memref<200x128xf32, #tpu.memory_space<vmem>>, vector<4x128xf32>
    %319 = arith.truncf %318 : vector<4x128xf32> to vector<4x128xbf16>
    %c12_251 = arith.constant 12 : index
    %c1024_252 = arith.constant 1024 : index
    %320 = vector.load %arg9[%c12_251, %c1024_252] : memref<32x1152xbf16, #tpu.memory_space<vmem>>, vector<4x128xbf16>
    tpu.vector_store %arg9[%c12_251, %c1024_252], %319 {strides = array<i32>} : memref<32x1152xbf16, #tpu.memory_space<vmem>>, vector<4x128xbf16>,
    %c122_253 = arith.constant 122 : index
    %c0_254 = arith.constant 0 : index
    %321 = tpu.strided_load %arg8[%c122_253, %c0_254] {strides = array<i32: 2, 1>} : memref<200x128xf32, #tpu.memory_space<vmem>>, vector<4x128xf32>
    %322 = arith.truncf %321 : vector<4x128xf32> to vector<4x128xbf16>
    %c16_255 = arith.constant 16 : index
    %c1024_256 = arith.constant 1024 : index
    %323 = vector.load %arg9[%c16_255, %c1024_256] : memref<32x1152xbf16, #tpu.memory_space<vmem>>, vector<4x128xbf16>
    tpu.vector_store %arg9[%c16_255, %c1024_256], %322 {strides = array<i32>} : memref<32x1152xbf16, #tpu.memory_space<vmem>>, vector<4x128xbf16>,
    %c142_257 = arith.constant 142 : index
    %c0_258 = arith.constant 0 : index
    %324 = tpu.strided_load %arg8[%c142_257, %c0_258] {strides = array<i32: 2, 1>} : memref<200x128xf32, #tpu.memory_space<vmem>>, vector<4x128xf32>
    %325 = arith.truncf %324 : vector<4x128xf32> to vector<4x128xbf16>
    %c20_259 = arith.constant 20 : index
    %c1024_260 = arith.constant 1024 : index
    %326 = vector.load %arg9[%c20_259, %c1024_260] : memref<32x1152xbf16, #tpu.memory_space<vmem>>, vector<4x128xbf16>
    tpu.vector_store %arg9[%c20_259, %c1024_260], %325 {strides = array<i32>} : memref<32x1152xbf16, #tpu.memory_space<vmem>>, vector<4x128xbf16>,
    %c162_261 = arith.constant 162 : index
    %c0_262 = arith.constant 0 : index
    %327 = tpu.strided_load %arg8[%c162_261, %c0_262] {strides = array<i32: 2, 1>} : memref<200x128xf32, #tpu.memory_space<vmem>>, vector<4x128xf32>
    %328 = arith.truncf %327 : vector<4x128xf32> to vector<4x128xbf16>
    %c24_263 = arith.constant 24 : index
    %c1024_264 = arith.constant 1024 : index
    %329 = vector.load %arg9[%c24_263, %c1024_264] : memref<32x1152xbf16, #tpu.memory_space<vmem>>, vector<4x128xbf16>
    tpu.vector_store %arg9[%c24_263, %c1024_264], %328 {strides = array<i32>} : memref<32x1152xbf16, #tpu.memory_space<vmem>>, vector<4x128xbf16>,
    %c182 = arith.constant 182 : index
    %c0_265 = arith.constant 0 : index
    %330 = tpu.strided_load %arg8[%c182, %c0_265] {strides = array<i32: 2, 1>} : memref<200x128xf32, #tpu.memory_space<vmem>>, vector<4x128xf32>
    %331 = arith.truncf %330 : vector<4x128xf32> to vector<4x128xbf16>
    %c28_266 = arith.constant 28 : index
    %c1024_267 = arith.constant 1024 : index
    %332 = vector.load %arg9[%c28_266, %c1024_267] : memref<32x1152xbf16, #tpu.memory_space<vmem>>, vector<4x128xbf16>
    tpu.vector_store %arg9[%c28_266, %c1024_267], %331 {strides = array<i32>} : memref<32x1152xbf16, #tpu.memory_space<vmem>>, vector<4x128xbf16>,
    %c0_268 = arith.constant 0 : index
    %c0_269 = arith.constant 0 : index
    %333 = vector.load %arg9[%c0_268, %c0_269] : memref<32x1152xbf16, #tpu.memory_space<vmem>>, vector<32x1152xbf16>
    %c0_270 = arith.constant 0 : index
    %c0_271 = arith.constant 0 : index
    %334 = vector.load %arg3[%c0_270, %c0_271] : memref<1152x128xbf16, #tpu.memory_space<vmem>>, vector<1152x128xbf16>
    %cst_272 = arith.constant dense<0.000000e+00> : vector<32x128xf32>
    %335 = tpu.matmul %333, %334, %cst_272 {dimension_numbers = #tpu.dot_dimension_numbers<[1], [0], [0], [1], [0, 0, 1, 1], [], []>} : vector<32x1152xbf16>, vector<1152x128xbf16>, vector<32x128xf32> -> vector<32x128xf32>
    %c0_273 = arith.constant 0 : index
    %c0_274 = arith.constant 0 : index
    %336 = vector.load %arg4[%c0_273, %c0_274] : memref<2x128xf32, #tpu.memory_space<vmem>>, vector<2x128xf32>
    %337 = vector.extract_strided_slice %336 {offsets = [0, 0], sizes = [1, 128], strides = [1, 1]} : vector<2x128xf32> to vector<1x128xf32>
    %338 = vector.extract_strided_slice %336 {offsets = [1, 0], sizes = [1, 128], strides = [1, 1]} : vector<2x128xf32> to vector<1x128xf32>
    %cst_275 = arith.constant dense<0.000000e+00> : vector<128xf32>
    %339 = vector.multi_reduction <add>, %335, %cst_275 [0] : vector<32x128xf32> to vector<128xf32>
    %340 = vector.shape_cast %339 : vector<128xf32> to vector<1x128xf32>
    %cst_276 = arith.constant 3.125000e-02 : f32
    %341 = vector.broadcast %cst_276 : f32 to vector<1x128xf32>
    %342 = arith.mulf %340, %341 : vector<1x128xf32>
    %343 = vector.broadcast %342 : vector<1x128xf32> to vector<32x128xf32>
    %344 = arith.subf %335, %343 : vector<32x128xf32>
    %345 = arith.mulf %344, %344 : vector<32x128xf32>
    %cst_277 = arith.constant dense<0.000000e+00> : vector<128xf32>
    %346 = vector.multi_reduction <add>, %345, %cst_277 [0] : vector<32x128xf32> to vector<128xf32>
    %347 = vector.shape_cast %346 : vector<128xf32> to vector<1x128xf32>
    %cst_278 = arith.constant 3.125000e-02 : f32
    %348 = vector.broadcast %cst_278 : f32 to vector<1x128xf32>
    %349 = arith.mulf %347, %348 : vector<1x128xf32>
    %cst_279 = arith.constant 9.99999974E-6 : f32
    %350 = vector.broadcast %cst_279 : f32 to vector<1x128xf32>
    %351 = arith.addf %349, %350 : vector<1x128xf32>
    %352 = math.rsqrt %351 : vector<1x128xf32>
    %353 = vector.broadcast %352 : vector<1x128xf32> to vector<32x128xf32>
    %354 = arith.mulf %344, %353 : vector<32x128xf32>
    %355 = vector.broadcast %337 : vector<1x128xf32> to vector<32x128xf32>
    %356 = arith.mulf %355, %354 : vector<32x128xf32>
    %357 = vector.broadcast %338 : vector<1x128xf32> to vector<32x128xf32>
    %358 = arith.addf %356, %357 : vector<32x128xf32>
    %cst_280 = arith.constant 0.000000e+00 : f32
    %359 = vector.broadcast %cst_280 : f32 to vector<32x128xf32>
    %360 = arith.cmpf oge, %358, %359 : vector<32x128xf32>
    %cst_281 = arith.constant 0.00999999977 : f32
    %361 = vector.broadcast %cst_281 : f32 to vector<32x128xf32>
    %362 = arith.mulf %361, %358 : vector<32x128xf32>
    %363 = arith.select %360, %358, %362 : vector<32x128xi1>, vector<32x128xf32>
    %c0_282 = arith.constant 0 : index
    %c0_283 = arith.constant 0 : index
    %364 = vector.load %arg5[%c0_282, %c0_283] : memref<128x128xbf16, #tpu.memory_space<vmem>>, vector<128x128xbf16>
    %c0_284 = arith.constant 0 : index
    %c0_285 = arith.constant 0 : index
    %365 = vector.load %arg6[%c0_284, %c0_285] : memref<1x128xf32, #tpu.memory_space<vmem>>, vector<1x128xf32>
    %366 = vector.shape_cast %363 : vector<32x128xf32> to vector<2x16x128xf32>
    %cst_286 = arith.constant dense<0.000000e+00> : vector<2x128xf32>
    %367 = vector.multi_reduction <add>, %366, %cst_286 [1] : vector<2x16x128xf32> to vector<2x128xf32>
    %cst_287 = arith.constant 1.600000e+01 : f32
    %368 = vector.broadcast %cst_287 : f32 to vector<2x128xf32>
    %369 = arith.divf %367, %368 : vector<2x128xf32>
    %370 = arith.truncf %369 : vector<2x128xf32> to vector<2x128xbf16>
    %cst_288 = arith.constant dense<0.000000e+00> : vector<2x128xf32>
    %371 = tpu.matmul %370, %364, %cst_288 {dimension_numbers = #tpu.dot_dimension_numbers<[1], [0], [0], [1], [0, 0, 1, 1], [], []>} : vector<2x128xbf16>, vector<128x128xbf16>, vector<2x128xf32> -> vector<2x128xf32>
    %372 = vector.broadcast %365 : vector<1x128xf32> to vector<2x128xf32>
    %373 = arith.addf %371, %372 : vector<2x128xf32>
    %c0_289 = arith.constant 0 : index
    %c0_290 = arith.constant 0 : index
    %374 = vector.load %arg7[%c0_289, %c0_290] : memref<2x128xf32, #tpu.memory_space<vmem>>, vector<2x128xf32>
    tpu.vector_store %arg7[%c0_289, %c0_290], %373 {strides = array<i32>} : memref<2x128xf32, #tpu.memory_space<vmem>>, vector<2x128xf32>,
    return
  }
}

</mosaic_0001>

<llo_original>
// kernel: forward.1
$region0: #{forward.1}
  #allocation0 [shape = 'u32[]', space=smem, size = 0x4, offset = 0x4, fixed_abs, tag = 'smem constant byte address 0x4 - core index']
  #allocation1 [shape = 'u32[72,128]{1,0:T(1,128)}', space=vmem, size = 0x9000, scoped, tag = 'internal scratch']
  #allocation2 [shape = 'f32[200,128]{1,0:T(8,128)}', space=vmem, size = 0x19000, scoped, tag = 'scratch operand']
  #allocation3 [shape = 'bf16[32,1152]{1,0:T(8,128)(2,1)}', space=vmem, size = 0x12000, scoped, tag = 'scratch operand']
  %s0 = inlined_call_operand.vmem [shape: f32[128,9], index: 0, kind: input, shape index: {}]
  %s1 = inlined_call_operand.vmem [shape: f32[9,128], index: 1, kind: input, shape index: {}]
  %s2 = inlined_call_operand.vmem [shape: f32[2,128], index: 2, kind: input, shape index: {}]
  %s3 = inlined_call_operand.vmem [shape: bf16[1152,128], index: 3, kind: input, shape index: {}]
  %s4 = inlined_call_operand.vmem [shape: f32[2,128], index: 4, kind: input, shape index: {}]
  %s5 = inlined_call_operand.vmem [shape: bf16[128,128], index: 5, kind: input, shape index: {}]
  %s6 = inlined_call_operand.vmem [shape: f32[1,128], index: 6, kind: input, shape index: {}]
  %s7 = inlined_call_operand.vmem [shape: f32[2,128], index: 7, kind: output, shape index: {}]
  %s8 = sld [smem:[#allocation0]]
  $region38: #{forward.1} parent=0
    _
  %s10 = ssub.s32 1, %s8
  %s11 = scalar_select 0, %s10, %s8
  // Predicated region
  $region2: #{forward.1} parent=0 // pred_check
    _
  $region3: #{forward.1} parent=0 // pred_check_branch
    %13 = sbr.rel (0) target = $region5
  $region4: #{forward.1} parent=0 // pred_region
    _
  $region5: #{forward.1} parent=0 // pred_fallthru
    _
  // Predicated region
  $region6: #{forward.1} parent=0 // pred_check
    _
  $region7: #{forward.1} parent=0 // pred_check_branch
    %15 = sbr.rel (0) target = $region9
  $region8: #{forward.1} parent=0 // pred_region
    _
  $region9: #{forward.1} parent=0 // pred_fallthru
    _
  // Predicated region
  $region10: #{forward.1} parent=0 // pred_check
    _
  $region11: #{forward.1} parent=0 // pred_check_branch
    %17 = sbr.rel (0) target = $region13
  $region12: #{forward.1} parent=0 // pred_region
    _
  $region13: #{forward.1} parent=0 // pred_fallthru
    _
  // Predicated region
  $region14: #{forward.1} parent=0 // pred_check
    _
  $region15: #{forward.1} parent=0 // pred_check_branch
    %19 = sbr.rel (0) target = $region17
  $region16: #{forward.1} parent=0 // pred_region
    _
  $region17: #{forward.1} parent=0 // pred_fallthru
    _
  // Predicated region
  $region18: #{forward.1} parent=0 // pred_check
    _
  $region19: #{forward.1} parent=0 // pred_check_branch
    %21 = sbr.rel (0) target = $region21
  $region20: #{forward.1} parent=0 // pred_region
    _
  $region21: #{forward.1} parent=0 // pred_fallthru
    _
  // Predicated region
  $region22: #{forward.1} parent=0 // pred_check
    _
  $region23: #{forward.1} parent=0 // pred_check_branch
    %23 = sbr.rel (0) target = $region25
  $region24: #{forward.1} parent=0 // pred_region
    _
  $region25: #{forward.1} parent=0 // pred_fallthru
    _
  // Predicated region
  $region26: #{forward.1} parent=0 // pred_check
    _
  $region27: #{forward.1} parent=0 // pred_check_branch
    %25 = sbr.rel (0) target = $region29
  $region28: #{forward.1} parent=0 // pred_region
    _
  $region29: #{forward.1} parent=0 // pred_fallthru
    _
  %v26 = vld [vmem:[%s0] sm:$0xff]
  %v27 = vld [vmem:[%s0 + $0x8] sm:$0xff]
  %v28 = vld [vmem:[%s0 + $0x10] sm:$0xff]
  %v29 = vld [vmem:[%s0 + $0x18] sm:$0xff]
  %v30 = vld [vmem:[%s0 + $0x20] sm:$0xff]
  %v31 = vld [vmem:[%s0 + $0x28] sm:$0xff]
  %v32 = vld [vmem:[%s0 + $0x30] sm:$0xff]
  %v33 = vld [vmem:[%s0 + $0x38] sm:$0xff]
  %v34 = vld [vmem:[%s0 + $0x40] sm:$0xff]
  %v35 = vld [vmem:[%s0 + $0x48] sm:$0xff]
  %v36 = vld [vmem:[%s0 + $0x50] sm:$0xff]
  %v37 = vld [vmem:[%s0 + $0x58] sm:$0xff]
  %v38 = vld [vmem:[%s0 + $0x60] sm:$0xff]
  %v39 = vld [vmem:[%s0 + $0x68] sm:$0xff]
  %v40 = vld [vmem:[%s0 + $0x70] sm:$0xff]
  %v41 = vld [vmem:[%s0 + $0x78] sm:$0xff]
  %v42 = vld [vmem:[%s1] sm:$0xff]
  %v43 = vld [vmem:[%s1 + $0x8] sm:$0x1]
  %45 = vset.pattern.permute.xlu0 0
  %46 = vperm.xlu0 %45, %v26
  %v47 = vpop.permute.xlu0 %46
  %50 = vset.pattern.permute.xlu0 0
  %51 = vperm.xlu0 %50, %v27
  %v52 = vpop.permute.xlu0 %51
  %55 = vset.pattern.permute.xlu0 0
  %56 = vperm.xlu0 %55, %v28
  %v57 = vpop.permute.xlu0 %56
  %60 = vset.pattern.permute.xlu0 0
  %61 = vperm.xlu0 %60, %v29
  %v62 = vpop.permute.xlu0 %61
  %65 = vset.pattern.permute.xlu0 0
  %66 = vperm.xlu0 %65, %v30
  %v67 = vpop.permute.xlu0 %66
  %70 = vset.pattern.permute.xlu0 0
  %71 = vperm.xlu0 %70, %v31
  %v72 = vpop.permute.xlu0 %71
  %75 = vset.pattern.permute.xlu0 0
  %76 = vperm.xlu0 %75, %v32
  %v77 = vpop.permute.xlu0 %76
  %80 = vset.pattern.permute.xlu0 0
  %81 = vperm.xlu0 %80, %v33
  %v82 = vpop.permute.xlu0 %81
  %85 = vset.pattern.permute.xlu0 0
  %86 = vperm.xlu0 %85, %v34
  %v87 = vpop.permute.xlu0 %86
  %90 = vset.pattern.permute.xlu0 0
  %91 = vperm.xlu0 %90, %v35
  %v92 = vpop.permute.xlu0 %91
  %95 = vset.pattern.permute.xlu0 0
  %96 = vperm.xlu0 %95, %v36
  %v97 = vpop.permute.xlu0 %96
  %100 = vset.pattern.permute.xlu0 0
  %101 = vperm.xlu0 %100, %v37
  %v102 = vpop.permute.xlu0 %101
  %105 = vset.pattern.permute.xlu0 0
  %106 = vperm.xlu0 %105, %v38
  %v107 = vpop.permute.xlu0 %106
  %110 = vset.pattern.permute.xlu0 0
  %111 = vperm.xlu0 %110, %v39
  %v112 = vpop.permute.xlu0 %111
  %115 = vset.pattern.permute.xlu0 0
  %116 = vperm.xlu0 %115, %v40
  %v117 = vpop.permute.xlu0 %116
  %120 = vset.pattern.permute.xlu0 0
  %121 = vperm.xlu0 %120, %v41
  %v122 = vpop.permute.xlu0 %121
  %v124 = vperm.slane %v42, 0
  %v125 = vmul.f32 %v47, %v124
  %v126 = vmul.f32 %v52, %v124
  %v127 = vmul.f32 %v57, %v124
  %v128 = vmul.f32 %v62, %v124
  %v129 = vmul.f32 %v67, %v124
  %v130 = vmul.f32 %v72, %v124
  %v131 = vmul.f32 %v77, %v124
  %v132 = vmul.f32 %v82, %v124
  %v133 = vmul.f32 %v87, %v124
  %v134 = vmul.f32 %v92, %v124
  %v135 = vmul.f32 %v97, %v124
  %v136 = vmul.f32 %v102, %v124
  %v137 = vmul.f32 %v107, %v124
  %v138 = vmul.f32 %v112, %v124
  %v139 = vmul.f32 %v117, %v124
  %v140 = vmul.f32 %v122, %v124
  %141 = vset.pattern.permute.xlu0 1
  %142 = vperm.xlu0 %141, %v26
  %v143 = vpop.permute.xlu0 %142
  %145 = vset.pattern.permute.xlu0 1
  %146 = vperm.xlu0 %145, %v27
  %v147 = vpop.permute.xlu0 %146
  %149 = vset.pattern.permute.xlu0 1
  %150 = vperm.xlu0 %149, %v28
  %v151 = vpop.permute.xlu0 %150
  %153 = vset.pattern.permute.xlu0 1
  %154 = vperm.xlu0 %153, %v29
  %v155 = vpop.permute.xlu0 %154
  %157 = vset.pattern.permute.xlu0 1
  %158 = vperm.xlu0 %157, %v30
  %v159 = vpop.permute.xlu0 %158
  %161 = vset.pattern.permute.xlu0 1
  %162 = vperm.xlu0 %161, %v31
  %v163 = vpop.permute.xlu0 %162
  %165 = vset.pattern.permute.xlu0 1
  %166 = vperm.xlu0 %165, %v32
  %v167 = vpop.permute.xlu0 %166
  %169 = vset.pattern.permute.xlu0 1
  %170 = vperm.xlu0 %169, %v33
  %v171 = vpop.permute.xlu0 %170
  %173 = vset.pattern.permute.xlu0 1
  %174 = vperm.xlu0 %173, %v34
  %v175 = vpop.permute.xlu0 %174
  %177 = vset.pattern.permute.xlu0 1
  %178 = vperm.xlu0 %177, %v35
  %v179 = vpop.permute.xlu0 %178
  %181 = vset.pattern.permute.xlu0 1
  %182 = vperm.xlu0 %181, %v36
  %v183 = vpop.permute.xlu0 %182
  %185 = vset.pattern.permute.xlu0 1
  %186 = vperm.xlu0 %185, %v37
  %v187 = vpop.permute.xlu0 %186
  %189 = vset.pattern.permute.xlu0 1
  %190 = vperm.xlu0 %189, %v38
  %v191 = vpop.permute.xlu0 %190
  %193 = vset.pattern.permute.xlu0 1
  %194 = vperm.xlu0 %193, %v39
  %v195 = vpop.permute.xlu0 %194
  %197 = vset.pattern.permute.xlu0 1
  %198 = vperm.xlu0 %197, %v40
  %v199 = vpop.permute.xlu0 %198
  %201 = vset.pattern.permute.xlu0 1
  %202 = vperm.xlu0 %201, %v41
  %v203 = vpop.permute.xlu0 %202
  %v205 = vperm.slane %v42, 1
  %v206 = vmul.f32 %v143, %v205
  %v207 = vmul.f32 %v147, %v205
  %v208 = vmul.f32 %v151, %v205
  %v209 = vmul.f32 %v155, %v205
  %v210 = vmul.f32 %v159, %v205
  %v211 = vmul.f32 %v163, %v205
  %v212 = vmul.f32 %v167, %v205
  %v213 = vmul.f32 %v171, %v205
  %v214 = vmul.f32 %v175, %v205
  %v215 = vmul.f32 %v179, %v205
  %v216 = vmul.f32 %v183, %v205
  %v217 = vmul.f32 %v187, %v205
  %v218 = vmul.f32 %v191, %v205
  %v219 = vmul.f32 %v195, %v205
  %v220 = vmul.f32 %v199, %v205
  %v221 = vmul.f32 %v203, %v205
  %v222 = vadd.f32 %v125, %v206
  %v223 = vadd.f32 %v126, %v207
  %v224 = vadd.f32 %v127, %v208
  %v225 = vadd.f32 %v128, %v209
  %v226 = vadd.f32 %v129, %v210
  %v227 = vadd.f32 %v130, %v211
  %v228 = vadd.f32 %v131, %v212
  %v229 = vadd.f32 %v132, %v213
  %v230 = vadd.f32 %v133, %v214
  %v231 = vadd.f32 %v134, %v215
  %v232 = vadd.f32 %v135, %v216
  %v233 = vadd.f32 %v136, %v217
  %v234 = vadd.f32 %v137, %v218
  %v235 = vadd.f32 %v138, %v219
  %v236 = vadd.f32 %v139, %v220
  %v237 = vadd.f32 %v140, %v221
  %238 = vset.pattern.permute.xlu0 2
  %239 = vperm.xlu0 %238, %v26
  %v240 = vpop.permute.xlu0 %239
  %242 = vset.pattern.permute.xlu0 2
  %243 = vperm.xlu0 %242, %v27
  %v244 = vpop.permute.xlu0 %243
  %246 = vset.pattern.permute.xlu0 2
  %247 = vperm.xlu0 %246, %v28
  %v248 = vpop.permute.xlu0 %247
  %250 = vset.pattern.permute.xlu0 2
  %251 = vperm.xlu0 %250, %v29
  %v252 = vpop.permute.xlu0 %251
  %254 = vset.pattern.permute.xlu0 2
  %255 = vperm.xlu0 %254, %v30
  %v256 = vpop.permute.xlu0 %255
  %258 = vset.pattern.permute.xlu0 2
  %259 = vperm.xlu0 %258, %v31
  %v260 = vpop.permute.xlu0 %259
  %262 = vset.pattern.permute.xlu0 2
  %263 = vperm.xlu0 %262, %v32
  %v264 = vpop.permute.xlu0 %263
  %266 = vset.pattern.permute.xlu0 2
  %267 = vperm.xlu0 %266, %v33
  %v268 = vpop.permute.xlu0 %267
  %270 = vset.pattern.permute.xlu0 2
  %271 = vperm.xlu0 %270, %v34
  %v272 = vpop.permute.xlu0 %271
  %274 = vset.pattern.permute.xlu0 2
  %275 = vperm.xlu0 %274, %v35
  %v276 = vpop.permute.xlu0 %275
  %278 = vset.pattern.permute.xlu0 2
  %279 = vperm.xlu0 %278, %v36
  %v280 = vpop.permute.xlu0 %279
  %282 = vset.pattern.permute.xlu0 2
  %283 = vperm.xlu0 %282, %v37
  %v284 = vpop.permute.xlu0 %283
  %286 = vset.pattern.permute.xlu0 2
  %287 = vperm.xlu0 %286, %v38
  %v288 = vpop.permute.xlu0 %287
  %290 = vset.pattern.permute.xlu0 2
  %291 = vperm.xlu0 %290, %v39
  %v292 = vpop.permute.xlu0 %291
  %294 = vset.pattern.permute.xlu0 2
  %295 = vperm.xlu0 %294, %v40
  %v296 = vpop.permute.xlu0 %295
  %298 = vset.pattern.permute.xlu0 2
  %299 = vperm.xlu0 %298, %v41
  %v300 = vpop.permute.xlu0 %299
  %v302 = vperm.slane %v42, 2
  %v303 = vmul.f32 %v240, %v302
  %v304 = vmul.f32 %v244, %v302
  %v305 = vmul.f32 %v248, %v302
  %v306 = vmul.f32 %v252, %v302
  %v307 = vmul.f32 %v256, %v302
  %v308 = vmul.f32 %v260, %v302
  %v309 = vmul.f32 %v264, %v302
  %v310 = vmul.f32 %v268, %v302
  %v311 = vmul.f32 %v272, %v302
  %v312 = vmul.f32 %v276, %v302
  %v313 = vmul.f32 %v280, %v302
  %v314 = vmul.f32 %v284, %v302
  %v315 = vmul.f32 %v288, %v302
  %v316 = vmul.f32 %v292, %v302
  %v317 = vmul.f32 %v296, %v302
  %v318 = vmul.f32 %v300, %v302
  %v319 = vadd.f32 %v222, %v303
  %v320 = vadd.f32 %v223, %v304
  %v321 = vadd.f32 %v224, %v305
  %v322 = vadd.f32 %v225, %v306
  %v323 = vadd.f32 %v226, %v307
  %v324 = vadd.f32 %v227, %v308
  %v325 = vadd.f32 %v228, %v309
  %v326 = vadd.f32 %v229, %v310
  %v327 = vadd.f32 %v230, %v311
  %v328 = vadd.f32 %v231, %v312
  %v329 = vadd.f32 %v232, %v313
  %v330 = vadd.f32 %v233, %v314
  %v331 = vadd.f32 %v234, %v315
  %v332 = vadd.f32 %v235, %v316
  %v333 = vadd.f32 %v236, %v317
  %v334 = vadd.f32 %v237, %v318
  %335 = vset.pattern.permute.xlu0 3
  %336 = vperm.xlu0 %335, %v26
  %v337 = vpop.permute.xlu0 %336
  %339 = vset.pattern.permute.xlu0 3
  %340 = vperm.xlu0 %339, %v27
  %v341 = vpop.permute.xlu0 %340
  %343 = vset.pattern.permute.xlu0 3
  %344 = vperm.xlu0 %343, %v28
  %v345 = vpop.permute.xlu0 %344
  %347 = vset.pattern.permute.xlu0 3
  %348 = vperm.xlu0 %347, %v29
  %v349 = vpop.permute.xlu0 %348
  %351 = vset.pattern.permute.xlu0 3
  %352 = vperm.xlu0 %351, %v30
  %v353 = vpop.permute.xlu0 %352
  %355 = vset.pattern.permute.xlu0 3
  %356 = vperm.xlu0 %355, %v31
  %v357 = vpop.permute.xlu0 %356
  %359 = vset.pattern.permute.xlu0 3
  %360 = vperm.xlu0 %359, %v32
  %v361 = vpop.permute.xlu0 %360
  %363 = vset.pattern.permute.xlu0 3
  %364 = vperm.xlu0 %363, %v33
  %v365 = vpop.permute.xlu0 %364
  %367 = vset.pattern.permute.xlu0 3
  %368 = vperm.xlu0 %367, %v34
  %v369 = vpop.permute.xlu0 %368
  %371 = vset.pattern.permute.xlu0 3
  %372 = vperm.xlu0 %371, %v35
  %v373 = vpop.permute.xlu0 %372
  %375 = vset.pattern.permute.xlu0 3
  %376 = vperm.xlu0 %375, %v36
  %v377 = vpop.permute.xlu0 %376
  %379 = vset.pattern.permute.xlu0 3
  %380 = vperm.xlu0 %379, %v37
  %v381 = vpop.permute.xlu0 %380
  %383 = vset.pattern.permute.xlu0 3
  %384 = vperm.xlu0 %383, %v38
  %v385 = vpop.permute.xlu0 %384
  %387 = vset.pattern.permute.xlu0 3
  %388 = vperm.xlu0 %387, %v39
  %v389 = vpop.permute.xlu0 %388
  %391 = vset.pattern.permute.xlu0 3
  %392 = vperm.xlu0 %391, %v40
  %v393 = vpop.permute.xlu0 %392
  %395 = vset.pattern.permute.xlu0 3
  %396 = vperm.xlu0 %395, %v41
  %v397 = vpop.permute.xlu0 %396
  %v399 = vperm.slane %v42, 3
  %v400 = vmul.f32 %v337, %v399
  %v401 = vmul.f32 %v341, %v399
  %v402 = vmul.f32 %v345, %v399
  %v403 = vmul.f32 %v349, %v399
  %v404 = vmul.f32 %v353, %v399
  %v405 = vmul.f32 %v357, %v399
  %v406 = vmul.f32 %v361, %v399
  %v407 = vmul.f32 %v365, %v399
  %v408 = vmul.f32 %v369, %v399
  %v409 = vmul.f32 %v373, %v399
  %v410 = vmul.f32 %v377, %v399
  %v411 = vmul.f32 %v381, %v399
  %v412 = vmul.f32 %v385, %v399
  %v413 = vmul.f32 %v389, %v399
  %v414 = vmul.f32 %v393, %v399
  %v415 = vmul.f32 %v397, %v399
  %v416 = vadd.f32 %v319, %v400
  %v417 = vadd.f32 %v320, %v401
  %v418 = vadd.f32 %v321, %v402
  %v419 = vadd.f32 %v322, %v403
  %v420 = vadd.f32 %v323, %v404
  %v421 = vadd.f32 %v324, %v405
  %v422 = vadd.f32 %v325, %v406
  %v423 = vadd.f32 %v326, %v407
  %v424 = vadd.f32 %v327, %v408
  %v425 = vadd.f32 %v328, %v409
  %v426 = vadd.f32 %v329, %v410
  %v427 = vadd.f32 %v330, %v411
  %v428 = vadd.f32 %v331, %v412
  %v429 = vadd.f32 %v332, %v413
  %v430 = vadd.f32 %v333, %v414
  %v431 = vadd.f32 %v334, %v415
  %432 = vset.pattern.permute.xlu0 4
  %433 = vperm.xlu0 %432, %v26
  %v434 = vpop.permute.xlu0 %433
  %436 = vset.pattern.permute.xlu0 4
  %437 = vperm.xlu0 %436, %v27
  %v438 = vpop.permute.xlu0 %437
  %440 = vset.pattern.permute.xlu0 4
  %441 = vperm.xlu0 %440, %v28
  %v442 = vpop.permute.xlu0 %441
  %444 = vset.pattern.permute.xlu0 4
  %445 = vperm.xlu0 %444, %v29
  %v446 = vpop.permute.xlu0 %445
  %448 = vset.pattern.permute.xlu0 4
  %449 = vperm.xlu0 %448, %v30
  %v450 = vpop.permute.xlu0 %449
  %452 = vset.pattern.permute.xlu0 4
  %453 = vperm.xlu0 %452, %v31
  %v454 = vpop.permute.xlu0 %453
  %456 = vset.pattern.permute.xlu0 4
  %457 = vperm.xlu0 %456, %v32
  %v458 = vpop.permute.xlu0 %457
  %460 = vset.pattern.permute.xlu0 4
  %461 = vperm.xlu0 %460, %v33
  %v462 = vpop.permute.xlu0 %461
  %464 = vset.pattern.permute.xlu0 4
  %465 = vperm.xlu0 %464, %v34
  %v466 = vpop.permute.xlu0 %465
  %468 = vset.pattern.permute.xlu0 4
  %469 = vperm.xlu0 %468, %v35
  %v470 = vpop.permute.xlu0 %469
  %472 = vset.pattern.permute.xlu0 4
  %473 = vperm.xlu0 %472, %v36
  %v474 = vpop.permute.xlu0 %473
  %476 = vset.pattern.permute.xlu0 4
  %477 = vperm.xlu0 %476, %v37
  %v478 = vpop.permute.xlu0 %477
  %480 = vset.pattern.permute.xlu0 4
  %481 = vperm.xlu0 %480, %v38
  %v482 = vpop.permute.xlu0 %481
  %484 = vset.pattern.permute.xlu0 4
  %485 = vperm.xlu0 %484, %v39
  %v486 = vpop.permute.xlu0 %485
  %488 = vset.pattern.permute.xlu0 4
  %489 = vperm.xlu0 %488, %v40
  %v490 = vpop.permute.xlu0 %489
  %492 = vset.pattern.permute.xlu0 4
  %493 = vperm.xlu0 %492, %v41
  %v494 = vpop.permute.xlu0 %493
  %v496 = vperm.slane %v42, 4
  %v497 = vmul.f32 %v434, %v496
  %v498 = vmul.f32 %v438, %v496
  %v499 = vmul.f32 %v442, %v496
  %v500 = vmul.f32 %v446, %v496
  %v501 = vmul.f32 %v450, %v496
  %v502 = vmul.f32 %v454, %v496
  %v503 = vmul.f32 %v458, %v496
  %v504 = vmul.f32 %v462, %v496
  %v505 = vmul.f32 %v466, %v496
  %v506 = vmul.f32 %v470, %v496
  %v507 = vmul.f32 %v474, %v496
  %v508 = vmul.f32 %v478, %v496
  %v509 = vmul.f32 %v482, %v496
  %v510 = vmul.f32 %v486, %v496
  %v511 = vmul.f32 %v490, %v496
  %v512 = vmul.f32 %v494, %v496
  %v513 = vadd.f32 %v416, %v497
  %v514 = vadd.f32 %v417, %v498
  %v515 = vadd.f32 %v418, %v499
  %v516 = vadd.f32 %v419, %v500
  %v517 = vadd.f32 %v420, %v501
  %v518 = vadd.f32 %v421, %v502
  %v519 = vadd.f32 %v422, %v503
  %v520 = vadd.f32 %v423, %v504
  %v521 = vadd.f32 %v424, %v505
  %v522 = vadd.f32 %v425, %v506
  %v523 = vadd.f32 %v426, %v507
  %v524 = vadd.f32 %v427, %v508
  %v525 = vadd.f32 %v428, %v509
  %v526 = vadd.f32 %v429, %v510
  %v527 = vadd.f32 %v430, %v511
  %v528 = vadd.f32 %v431, %v512
  %529 = vset.pattern.permute.xlu0 5
  %530 = vperm.xlu0 %529, %v26
  %v531 = vpop.permute.xlu0 %530
  %533 = vset.pattern.permute.xlu0 5
  %534 = vperm.xlu0 %533, %v27
  %v535 = vpop.permute.xlu0 %534
  %537 = vset.pattern.permute.xlu0 5
  %538 = vperm.xlu0 %537, %v28
  %v539 = vpop.permute.xlu0 %538
  %541 = vset.pattern.permute.xlu0 5
  %542 = vperm.xlu0 %541, %v29
  %v543 = vpop.permute.xlu0 %542
  %545 = vset.pattern.permute.xlu0 5
  %546 = vperm.xlu0 %545, %v30
  %v547 = vpop.permute.xlu0 %546
  %549 = vset.pattern.permute.xlu0 5
  %550 = vperm.xlu0 %549, %v31
  %v551 = vpop.permute.xlu0 %550
  %553 = vset.pattern.permute.xlu0 5
  %554 = vperm.xlu0 %553, %v32
  %v555 = vpop.permute.xlu0 %554
  %557 = vset.pattern.permute.xlu0 5
  %558 = vperm.xlu0 %557, %v33
  %v559 = vpop.permute.xlu0 %558
  %561 = vset.pattern.permute.xlu0 5
  %562 = vperm.xlu0 %561, %v34
  %v563 = vpop.permute.xlu0 %562
  %565 = vset.pattern.permute.xlu0 5
  %566 = vperm.xlu0 %565, %v35
  %v567 = vpop.permute.xlu0 %566
  %569 = vset.pattern.permute.xlu0 5
  %570 = vperm.xlu0 %569, %v36
  %v571 = vpop.permute.xlu0 %570
  %573 = vset.pattern.permute.xlu0 5
  %574 = vperm.xlu0 %573, %v37
  %v575 = vpop.permute.xlu0 %574
  %577 = vset.pattern.permute.xlu0 5
  %578 = vperm.xlu0 %577, %v38
  %v579 = vpop.permute.xlu0 %578
  %581 = vset.pattern.permute.xlu0 5
  %582 = vperm.xlu0 %581, %v39
  %v583 = vpop.permute.xlu0 %582
  %585 = vset.pattern.permute.xlu0 5
  %586 = vperm.xlu0 %585, %v40
  %v587 = vpop.permute.xlu0 %586
  %589 = vset.pattern.permute.xlu0 5
  %590 = vperm.xlu0 %589, %v41
  %v591 = vpop.permute.xlu0 %590
  %v593 = vperm.slane %v42, 5
  %v594 = vmul.f32 %v531, %v593
  %v595 = vmul.f32 %v535, %v593
  %v596 = vmul.f32 %v539, %v593
  %v597 = vmul.f32 %v543, %v593
  %v598 = vmul.f32 %v547, %v593
  %v599 = vmul.f32 %v551, %v593
  %v600 = vmul.f32 %v555, %v593
  %v601 = vmul.f32 %v559, %v593
  %v602 = vmul.f32 %v563, %v593
  %v603 = vmul.f32 %v567, %v593
  %v604 = vmul.f32 %v571, %v593
  %v605 = vmul.f32 %v575, %v593
  %v606 = vmul.f32 %v579, %v593
  %v607 = vmul.f32 %v583, %v593
  %v608 = vmul.f32 %v587, %v593
  %v609 = vmul.f32 %v591, %v593
  %v610 = vadd.f32 %v513, %v594
  %v611 = vadd.f32 %v514, %v595
  %v612 = vadd.f32 %v515, %v596
  %v613 = vadd.f32 %v516, %v597
  %v614 = vadd.f32 %v517, %v598
  %v615 = vadd.f32 %v518, %v599
  %v616 = vadd.f32 %v519, %v600
  %v617 = vadd.f32 %v520, %v601
  %v618 = vadd.f32 %v521, %v602
  %v619 = vadd.f32 %v522, %v603
  %v620 = vadd.f32 %v523, %v604
  %v621 = vadd.f32 %v524, %v605
  %v622 = vadd.f32 %v525, %v606
  %v623 = vadd.f32 %v526, %v607
  %v624 = vadd.f32 %v527, %v608
  %v625 = vadd.f32 %v528, %v609
  %626 = vset.pattern.permute.xlu0 6
  %627 = vperm.xlu0 %626, %v26
  %v628 = vpop.permute.xlu0 %627
  %630 = vset.pattern.permute.xlu0 6
  %631 = vperm.xlu0 %630, %v27
  %v632 = vpop.permute.xlu0 %631
  %634 = vset.pattern.permute.xlu0 6
  %635 = vperm.xlu0 %634, %v28
  %v636 = vpop.permute.xlu0 %635
  %638 = vset.pattern.permute.xlu0 6
  %639 = vperm.xlu0 %638, %v29
  %v640 = vpop.permute.xlu0 %639
  %642 = vset.pattern.permute.xlu0 6
  %643 = vperm.xlu0 %642, %v30
  %v644 = vpop.permute.xlu0 %643
  %646 = vset.pattern.permute.xlu0 6
  %647 = vperm.xlu0 %646, %v31
  %v648 = vpop.permute.xlu0 %647
  %650 = vset.pattern.permute.xlu0 6
  %651 = vperm.xlu0 %650, %v32
  %v652 = vpop.permute.xlu0 %651
  %654 = vset.pattern.permute.xlu0 6
  %655 = vperm.xlu0 %654, %v33
  %v656 = vpop.permute.xlu0 %655
  %658 = vset.pattern.permute.xlu0 6
  %659 = vperm.xlu0 %658, %v34
  %v660 = vpop.permute.xlu0 %659
  %662 = vset.pattern.permute.xlu0 6
  %663 = vperm.xlu0 %662, %v35
  %v664 = vpop.permute.xlu0 %663
  %666 = vset.pattern.permute.xlu0 6
  %667 = vperm.xlu0 %666, %v36
  %v668 = vpop.permute.xlu0 %667
  %670 = vset.pattern.permute.xlu0 6
  %671 = vperm.xlu0 %670, %v37
  %v672 = vpop.permute.xlu0 %671
  %674 = vset.pattern.permute.xlu0 6
  %675 = vperm.xlu0 %674, %v38
  %v676 = vpop.permute.xlu0 %675
  %678 = vset.pattern.permute.xlu0 6
  %679 = vperm.xlu0 %678, %v39
  %v680 = vpop.permute.xlu0 %679
  %682 = vset.pattern.permute.xlu0 6
  %683 = vperm.xlu0 %682, %v40
  %v684 = vpop.permute.xlu0 %683
  %686 = vset.pattern.permute.xlu0 6
  %687 = vperm.xlu0 %686, %v41
  %v688 = vpop.permute.xlu0 %687
  %v690 = vperm.slane %v42, 6
  %v691 = vmul.f32 %v628, %v690
  %v692 = vmul.f32 %v632, %v690
  %v693 = vmul.f32 %v636, %v690
  %v694 = vmul.f32 %v640, %v690
  %v695 = vmul.f32 %v644, %v690
  %v696 = vmul.f32 %v648, %v690
  %v697 = vmul.f32 %v652, %v690
  %v698 = vmul.f32 %v656, %v690
  %v699 = vmul.f32 %v660, %v690
  %v700 = vmul.f32 %v664, %v690
  %v701 = vmul.f32 %v668, %v690
  %v702 = vmul.f32 %v672, %v690
  %v703 = vmul.f32 %v676, %v690
  %v704 = vmul.f32 %v680, %v690
  %v705 = vmul.f32 %v684, %v690
  %v706 = vmul.f32 %v688, %v690
  %v707 = vadd.f32 %v610, %v691
  %v708 = vadd.f32 %v611, %v692
  %v709 = vadd.f32 %v612, %v693
  %v710 = vadd.f32 %v613, %v694
  %v711 = vadd.f32 %v614, %v695
  %v712 = vadd.f32 %v615, %v696
  %v713 = vadd.f32 %v616, %v697
  %v714 = vadd.f32 %v617, %v698
  %v715 = vadd.f32 %v618, %v699
  %v716 = vadd.f32 %v619, %v700
  %v717 = vadd.f32 %v620, %v701
  %v718 = vadd.f32 %v621, %v702
  %v719 = vadd.f32 %v622, %v703
  %v720 = vadd.f32 %v623, %v704
  %v721 = vadd.f32 %v624, %v705
  %v722 = vadd.f32 %v625, %v706
  %723 = vset.pattern.permute.xlu0 7
  %724 = vperm.xlu0 %723, %v26
  %v725 = vpop.permute.xlu0 %724
  %727 = vset.pattern.permute.xlu0 7
  %728 = vperm.xlu0 %727, %v27
  %v729 = vpop.permute.xlu0 %728
  %731 = vset.pattern.permute.xlu0 7
  %732 = vperm.xlu0 %731, %v28
  %v733 = vpop.permute.xlu0 %732
  %735 = vset.pattern.permute.xlu0 7
  %736 = vperm.xlu0 %735, %v29
  %v737 = vpop.permute.xlu0 %736
  %739 = vset.pattern.permute.xlu0 7
  %740 = vperm.xlu0 %739, %v30
  %v741 = vpop.permute.xlu0 %740
  %743 = vset.pattern.permute.xlu0 7
  %744 = vperm.xlu0 %743, %v31
  %v745 = vpop.permute.xlu0 %744
  %747 = vset.pattern.permute.xlu0 7
  %748 = vperm.xlu0 %747, %v32
  %v749 = vpop.permute.xlu0 %748
  %751 = vset.pattern.permute.xlu0 7
  %752 = vperm.xlu0 %751, %v33
  %v753 = vpop.permute.xlu0 %752
  %755 = vset.pattern.permute.xlu0 7
  %756 = vperm.xlu0 %755, %v34
  %v757 = vpop.permute.xlu0 %756
  %759 = vset.pattern.permute.xlu0 7
  %760 = vperm.xlu0 %759, %v35
  %v761 = vpop.permute.xlu0 %760
  %763 = vset.pattern.permute.xlu0 7
  %764 = vperm.xlu0 %763, %v36
  %v765 = vpop.permute.xlu0 %764
  %767 = vset.pattern.permute.xlu0 7
  %768 = vperm.xlu0 %767, %v37
  %v769 = vpop.permute.xlu0 %768
  %771 = vset.pattern.permute.xlu0 7
  %772 = vperm.xlu0 %771, %v38
  %v773 = vpop.permute.xlu0 %772
  %775 = vset.pattern.permute.xlu0 7
  %776 = vperm.xlu0 %775, %v39
  %v777 = vpop.permute.xlu0 %776
  %779 = vset.pattern.permute.xlu0 7
  %780 = vperm.xlu0 %779, %v40
  %v781 = vpop.permute.xlu0 %780
  %783 = vset.pattern.permute.xlu0 7
  %784 = vperm.xlu0 %783, %v41
  %v785 = vpop.permute.xlu0 %784
  %v787 = vperm.slane %v42, 7
  %v788 = vmul.f32 %v725, %v787
  %v789 = vmul.f32 %v729, %v787
  %v790 = vmul.f32 %v733, %v787
  %v791 = vmul.f32 %v737, %v787
  %v792 = vmul.f32 %v741, %v787
  %v793 = vmul.f32 %v745, %v787
  %v794 = vmul.f32 %v749, %v787
  %v795 = vmul.f32 %v753, %v787
  %v796 = vmul.f32 %v757, %v787
  %v797 = vmul.f32 %v761, %v787
  %v798 = vmul.f32 %v765, %v787
  %v799 = vmul.f32 %v769, %v787
  %v800 = vmul.f32 %v773, %v787
  %v801 = vmul.f32 %v777, %v787
  %v802 = vmul.f32 %v781, %v787
  %v803 = vmul.f32 %v785, %v787
  %v804 = vadd.f32 %v707, %v788
  %v805 = vadd.f32 %v708, %v789
  %v806 = vadd.f32 %v709, %v790
  %v807 = vadd.f32 %v710, %v791
  %v808 = vadd.f32 %v711, %v792
  %v809 = vadd.f32 %v712, %v793
  %v810 = vadd.f32 %v713, %v794
  %v811 = vadd.f32 %v714, %v795
  %v812 = vadd.f32 %v715, %v796
  %v813 = vadd.f32 %v716, %v797
  %v814 = vadd.f32 %v717, %v798
  %v815 = vadd.f32 %v718, %v799
  %v816 = vadd.f32 %v719, %v800
  %v817 = vadd.f32 %v720, %v801
  %v818 = vadd.f32 %v721, %v802
  %v819 = vadd.f32 %v722, %v803
  %820 = vset.pattern.permute.xlu0 8
  %821 = vperm.xlu0 %820, %v26
  %v822 = vpop.permute.xlu0 %821
  %824 = vset.pattern.permute.xlu0 8
  %825 = vperm.xlu0 %824, %v27
  %v826 = vpop.permute.xlu0 %825
  %828 = vset.pattern.permute.xlu0 8
  %829 = vperm.xlu0 %828, %v28
  %v830 = vpop.permute.xlu0 %829
  %832 = vset.pattern.permute.xlu0 8
  %833 = vperm.xlu0 %832, %v29
  %v834 = vpop.permute.xlu0 %833
  %836 = vset.pattern.permute.xlu0 8
  %837 = vperm.xlu0 %836, %v30
  %v838 = vpop.permute.xlu0 %837
  %840 = vset.pattern.permute.xlu0 8
  %841 = vperm.xlu0 %840, %v31
  %v842 = vpop.permute.xlu0 %841
  %844 = vset.pattern.permute.xlu0 8
  %845 = vperm.xlu0 %844, %v32
  %v846 = vpop.permute.xlu0 %845
  %848 = vset.pattern.permute.xlu0 8
  %849 = vperm.xlu0 %848, %v33
  %v850 = vpop.permute.xlu0 %849
  %852 = vset.pattern.permute.xlu0 8
  %853 = vperm.xlu0 %852, %v34
  %v854 = vpop.permute.xlu0 %853
  %856 = vset.pattern.permute.xlu0 8
  %857 = vperm.xlu0 %856, %v35
  %v858 = vpop.permute.xlu0 %857
  %860 = vset.pattern.permute.xlu0 8
  %861 = vperm.xlu0 %860, %v36
  %v862 = vpop.permute.xlu0 %861
  %864 = vset.pattern.permute.xlu0 8
  %865 = vperm.xlu0 %864, %v37
  %v866 = vpop.permute.xlu0 %865
  %868 = vset.pattern.permute.xlu0 8
  %869 = vperm.xlu0 %868, %v38
  %v870 = vpop.permute.xlu0 %869
  %872 = vset.pattern.permute.xlu0 8
  %873 = vperm.xlu0 %872, %v39
  %v874 = vpop.permute.xlu0 %873
  %876 = vset.pattern.permute.xlu0 8
  %877 = vperm.xlu0 %876, %v40
  %v878 = vpop.permute.xlu0 %877
  %880 = vset.pattern.permute.xlu0 8
  %881 = vperm.xlu0 %880, %v41
  %v882 = vpop.permute.xlu0 %881
  %v884 = vperm.slane %v43, 0
  %v885 = vmul.f32 %v822, %v884
  %v886 = vmul.f32 %v826, %v884
  %v887 = vmul.f32 %v830, %v884
  %v888 = vmul.f32 %v834, %v884
  %v889 = vmul.f32 %v838, %v884
  %v890 = vmul.f32 %v842, %v884
  %v891 = vmul.f32 %v846, %v884
  %v892 = vmul.f32 %v850, %v884
  %v893 = vmul.f32 %v854, %v884
  %v894 = vmul.f32 %v858, %v884
  %v895 = vmul.f32 %v862, %v884
  %v896 = vmul.f32 %v866, %v884
  %v897 = vmul.f32 %v870, %v884
  %v898 = vmul.f32 %v874, %v884
  %v899 = vmul.f32 %v878, %v884
  %v900 = vmul.f32 %v882, %v884
  %v901 = vadd.f32 %v804, %v885
  %v902 = vadd.f32 %v805, %v886
  %v903 = vadd.f32 %v806, %v887
  %v904 = vadd.f32 %v807, %v888
  %v905 = vadd.f32 %v808, %v889
  %v906 = vadd.f32 %v809, %v890
  %v907 = vadd.f32 %v810, %v891
  %v908 = vadd.f32 %v811, %v892
  %v909 = vadd.f32 %v812, %v893
  %v910 = vadd.f32 %v813, %v894
  %v911 = vadd.f32 %v814, %v895
  %v912 = vadd.f32 %v815, %v896
  %v913 = vadd.f32 %v816, %v897
  %v914 = vadd.f32 %v817, %v898
  %v915 = vadd.f32 %v818, %v899
  %v916 = vadd.f32 %v819, %v900
  %v917 = vld [vmem:[%s2] sm:$0x3]
  %v918 = vadd.f32 %v901, %v902
  %v919 = vadd.f32 %v918, %v903
  %v920 = vadd.f32 %v919, %v904
  %v921 = vadd.f32 %v920, %v905
  %v922 = vadd.f32 %v921, %v906
  %v923 = vadd.f32 %v922, %v907
  %v924 = vadd.f32 %v923, %v908
  %v925 = vadd.f32 %v924, %v909
  %v926 = vadd.f32 %v925, %v910
  %v927 = vadd.f32 %v926, %v911
  %v928 = vadd.f32 %v927, %v912
  %v929 = vadd.f32 %v928, %v913
  %v930 = vadd.f32 %v929, %v914
  %v931 = vadd.f32 %v930, %v915
  %v932 = vadd.f32 %v931, %v916
  %v933 = vrot.slane %v932, 4
  %v934 = vadd.f32 %v932, %v933
  %v935 = vrot.slane %v934, 2
  %v936 = vadd.f32 %v934, %v935
  %v937 = vrot.slane %v936, 1
  %v938 = vadd.f32 %v936, %v937
  %v939 = vmul.f32 %v938, 0.0078125
  %v940 = vsub.f32 %v901, %v939
  %v941 = vsub.f32 %v902, %v939
  %v942 = vsub.f32 %v903, %v939
  %v943 = vsub.f32 %v904, %v939
  %v944 = vsub.f32 %v905, %v939
  %v945 = vsub.f32 %v906, %v939
  %v946 = vsub.f32 %v907, %v939
  %v947 = vsub.f32 %v908, %v939
  %v948 = vsub.f32 %v909, %v939
  %v949 = vsub.f32 %v910, %v939
  %v950 = vsub.f32 %v911, %v939
  %v951 = vsub.f32 %v912, %v939
  %v952 = vsub.f32 %v913, %v939
  %v953 = vsub.f32 %v914, %v939
  %v954 = vsub.f32 %v915, %v939
  %v955 = vsub.f32 %v916, %v939
  %v956 = vmul.f32 %v940, %v940
  %v957 = vmul.f32 %v941, %v941
  %v958 = vmul.f32 %v942, %v942
  %v959 = vmul.f32 %v943, %v943
  %v960 = vmul.f32 %v944, %v944
  %v961 = vmul.f32 %v945, %v945
  %v962 = vmul.f32 %v946, %v946
  %v963 = vmul.f32 %v947, %v947
  %v964 = vmul.f32 %v948, %v948
  %v965 = vmul.f32 %v949, %v949
  %v966 = vmul.f32 %v950, %v950
  %v967 = vmul.f32 %v951, %v951
  %v968 = vmul.f32 %v952, %v952
  %v969 = vmul.f32 %v953, %v953
  %v970 = vmul.f32 %v954, %v954
  %v971 = vmul.f32 %v955, %v955
  %v972 = vadd.f32 %v956, %v957
  %v973 = vadd.f32 %v972, %v958
  %v974 = vadd.f32 %v973, %v959
  %v975 = vadd.f32 %v974, %v960
  %v976 = vadd.f32 %v975, %v961
  %v977 = vadd.f32 %v976, %v962
  %v978 = vadd.f32 %v977, %v963
  %v979 = vadd.f32 %v978, %v964
  %v980 = vadd.f32 %v979, %v965
  %v981 = vadd.f32 %v980, %v966
  %v982 = vadd.f32 %v981, %v967
  %v983 = vadd.f32 %v982, %v968
  %v984 = vadd.f32 %v983, %v969
  %v985 = vadd.f32 %v984, %v970
  %v986 = vadd.f32 %v985, %v971
  %v987 = vrot.slane %v986, 4
  %v988 = vadd.f32 %v986, %v987
  %v989 = vrot.slane %v988, 2
  %v990 = vadd.f32 %v988, %v989
  %v991 = vrot.slane %v990, 1
  %v992 = vadd.f32 %v990, %v991
  %v993 = vmul.f32 %v992, 0.0078125
  %v994 = vadd.f32 %v993, 1e-05
  %v995 = vrsqrt.pop %v994
  %v996 = vmul.f32 %v995, %v994
  %v997 = vmul.f32 %v996, %v995
  %v998 = vmul.f32 0.5, %v997
  %v999 = vsub.f32 1.5, %v998
  %v1000 = vmul.f32 %v995, %v999
  %vm1001 = vweird.f32 %v994
  %vm1002 = vweird.f32 %v995
  %vm1003 = vmor %vm1001, %vm1002
  %v1004 = vsel %vm1003, %v995, %v1000
  %v1005 = vmul.f32 %v940, %v1004
  %v1006 = vmul.f32 %v941, %v1004
  %v1007 = vmul.f32 %v942, %v1004
  %v1008 = vmul.f32 %v943, %v1004
  %v1009 = vmul.f32 %v944, %v1004
  %v1010 = vmul.f32 %v945, %v1004
  %v1011 = vmul.f32 %v946, %v1004
  %v1012 = vmul.f32 %v947, %v1004
  %v1013 = vmul.f32 %v948, %v1004
  %v1014 = vmul.f32 %v949, %v1004
  %v1015 = vmul.f32 %v950, %v1004
  %v1016 = vmul.f32 %v951, %v1004
  %v1017 = vmul.f32 %v952, %v1004
  %v1018 = vmul.f32 %v953, %v1004
  %v1019 = vmul.f32 %v954, %v1004
  %v1020 = vmul.f32 %v955, %v1004
  %v1021 = vperm.slane %v917, 0
  %v1022 = vmul.f32 %v1021, %v1005
  %v1023 = vmul.f32 %v1021, %v1006
  %v1024 = vmul.f32 %v1021, %v1007
  %v1025 = vmul.f32 %v1021, %v1008
  %v1026 = vmul.f32 %v1021, %v1009
  %v1027 = vmul.f32 %v1021, %v1010
  %v1028 = vmul.f32 %v1021, %v1011
  %v1029 = vmul.f32 %v1021, %v1012
  %v1030 = vmul.f32 %v1021, %v1013
  %v1031 = vmul.f32 %v1021, %v1014
  %v1032 = vmul.f32 %v1021, %v1015
  %v1033 = vmul.f32 %v1021, %v1016
  %v1034 = vmul.f32 %v1021, %v1017
  %v1035 = vmul.f32 %v1021, %v1018
  %v1036 = vmul.f32 %v1021, %v1019
  %v1037 = vmul.f32 %v1021, %v1020
  %v1038 = vperm.slane %v917, 1
  %v1039 = vadd.f32 %v1022, %v1038
  %v1040 = vadd.f32 %v1023, %v1038
  %v1041 = vadd.f32 %v1024, %v1038
  %v1042 = vadd.f32 %v1025, %v1038
  %v1043 = vadd.f32 %v1026, %v1038
  %v1044 = vadd.f32 %v1027, %v1038
  %v1045 = vadd.f32 %v1028, %v1038
  %v1046 = vadd.f32 %v1029, %v1038
  %v1047 = vadd.f32 %v1030, %v1038
  %v1048 = vadd.f32 %v1031, %v1038
  %v1049 = vadd.f32 %v1032, %v1038
  %v1050 = vadd.f32 %v1033, %v1038
  %v1051 = vadd.f32 %v1034, %v1038
  %v1052 = vadd.f32 %v1035, %v1038
  %v1053 = vadd.f32 %v1036, %v1038
  %v1054 = vadd.f32 %v1037, %v1038
  %vm1055 = vcmp.ge.f32.partialorder %v1039, 0.0
  %vm1056 = vcmp.ge.f32.partialorder %v1040, 0.0
  %vm1057 = vcmp.ge.f32.partialorder %v1041, 0.0
  %vm1058 = vcmp.ge.f32.partialorder %v1042, 0.0
  %vm1059 = vcmp.ge.f32.partialorder %v1043, 0.0
  %vm1060 = vcmp.ge.f32.partialorder %v1044, 0.0
  %vm1061 = vcmp.ge.f32.partialorder %v1045, 0.0
  %vm1062 = vcmp.ge.f32.partialorder %v1046, 0.0
  %vm1063 = vcmp.ge.f32.partialorder %v1047, 0.0
  %vm1064 = vcmp.ge.f32.partialorder %v1048, 0.0
  %vm1065 = vcmp.ge.f32.partialorder %v1049, 0.0
  %vm1066 = vcmp.ge.f32.partialorder %v1050, 0.0
  %vm1067 = vcmp.ge.f32.partialorder %v1051, 0.0
  %vm1068 = vcmp.ge.f32.partialorder %v1052, 0.0
  %vm1069 = vcmp.ge.f32.partialorder %v1053, 0.0
  %vm1070 = vcmp.ge.f32.partialorder %v1054, 0.0
  %v1071 = vmul.f32 %v1039, 0.01
  %v1072 = vmul.f32 %v1040, 0.01
  %v1073 = vmul.f32 %v1041, 0.01
  %v1074 = vmul.f32 %v1042, 0.01
  %v1075 = vmul.f32 %v1043, 0.01
  %v1076 = vmul.f32 %v1044, 0.01
  %v1077 = vmul.f32 %v1045, 0.01
  %v1078 = vmul.f32 %v1046, 0.01
  %v1079 = vmul.f32 %v1047, 0.01
  %v1080 = vmul.f32 %v1048, 0.01
  %v1081 = vmul.f32 %v1049, 0.01
  %v1082 = vmul.f32 %v1050, 0.01
  %v1083 = vmul.f32 %v1051, 0.01
  %v1084 = vmul.f32 %v1052, 0.01
  %v1085 = vmul.f32 %v1053, 0.01
  %v1086 = vmul.f32 %v1054, 0.01
  %v1087 = vsel %vm1055, %v1039, %v1071
  %v1088 = vsel %vm1056, %v1040, %v1072
  %v1089 = vsel %vm1057, %v1041, %v1073
  %v1090 = vsel %vm1058, %v1042, %v1074
  %v1091 = vsel %vm1059, %v1043, %v1075
  %v1092 = vsel %vm1060, %v1044, %v1076
  %v1093 = vsel %vm1061, %v1045, %v1077
  %v1094 = vsel %vm1062, %v1046, %v1078
  %v1095 = vsel %vm1063, %v1047, %v1079
  %v1096 = vsel %vm1064, %v1048, %v1080
  %v1097 = vsel %vm1065, %v1049, %v1081
  %v1098 = vsel %vm1066, %v1050, %v1082
  %v1099 = vsel %vm1067, %v1051, %v1083
  %v1100 = vsel %vm1068, %v1052, %v1084
  %v1101 = vsel %vm1069, %v1053, %v1085
  %v1102 = vsel %vm1070, %v1054, %v1086
  %1103 = vst [vmem:[#allocation2] sm:$0xff] 0.0
  %1104 = vst [vmem:[#allocation2 + $0x8] sm:$0xff] 0.0
  %1105 = vst [vmem:[#allocation2 + $0x10] sm:$0xff] 0.0
  %1106 = vst [vmem:[#allocation2 + $0x18] sm:$0xff] 0.0
  %1107 = vst [vmem:[#allocation2 + $0x20] sm:$0xff] 0.0
  %1108 = vst [vmem:[#allocation2 + $0x28] sm:$0xff] 0.0
  %1109 = vst [vmem:[#allocation2 + $0x30] sm:$0xff] 0.0
  %1110 = vst [vmem:[#allocation2 + $0x38] sm:$0xff] 0.0
  %1111 = vst [vmem:[#allocation2 + $0x40] sm:$0xff] 0.0
  %1112 = vst [vmem:[#allocation2 + $0x48] sm:$0xff] 0.0
  %1113 = vst [vmem:[#allocation2 + $0x50] sm:$0xff] 0.0
  %1114 = vst [vmem:[#allocation2 + $0x58] sm:$0xff] 0.0
  %1115 = vst [vmem:[#allocation2 + $0x60] sm:$0xff] 0.0
  %1116 = vst [vmem:[#allocation2 + $0x68] sm:$0xff] 0.0
  %1117 = vst [vmem:[#allocation2 + $0x70] sm:$0xff] 0.0
  %1118 = vst [vmem:[#allocation2 + $0x78] sm:$0xff] 0.0
  %1119 = vst [vmem:[#allocation2 + $0x80] sm:$0xff] 0.0
  %1120 = vst [vmem:[#allocation2 + $0x88] sm:$0xff] 0.0
  %1121 = vst [vmem:[#allocation2 + $0x90] sm:$0xff] 0.0
  %1122 = vst [vmem:[#allocation2 + $0x98] sm:$0xff] 0.0
  %1123 = vst [vmem:[#allocation2 + $0xa0] sm:$0xff] 0.0
  %1124 = vst [vmem:[#allocation2 + $0xa8] sm:$0xff] 0.0
  %1125 = vst [vmem:[#allocation2 + $0xb0] sm:$0xff] 0.0
  %1126 = vst [vmem:[#allocation2 + $0xb8] sm:$0xff] 0.0
  %1127 = vst [vmem:[#allocation2 + $0xc0] sm:$0xff] 0.0
  %1128 = vst [vmem:[#allocation2 + $0xb] sm:$0xff] %v1087
  %1129 = vst [vmem:[#allocation2 + $0x15] sm:$0xff] %v1088
  %1130 = vst [vmem:[#allocation2 + $0x1f] sm:$0xff] %v1089
  %1131 = vst [vmem:[#allocation2 + $0x29] sm:$0xff] %v1090
  %1132 = vst [vmem:[#allocation2 + $0x33] sm:$0xff] %v1091
  %1133 = vst [vmem:[#allocation2 + $0x3d] sm:$0xff] %v1092
  %1134 = vst [vmem:[#allocation2 + $0x47] sm:$0xff] %v1093
  %1135 = vst [vmem:[#allocation2 + $0x51] sm:$0xff] %v1094
  %1136 = vst [vmem:[#allocation2 + $0x6f] sm:$0xff] %v1095
  %1137 = vst [vmem:[#allocation2 + $0x79] sm:$0xff] %v1096
  %1138 = vst [vmem:[#allocation2 + $0x83] sm:$0xff] %v1097
  %1139 = vst [vmem:[#allocation2 + $0x8d] sm:$0xff] %v1098
  %1140 = vst [vmem:[#allocation2 + $0x97] sm:$0xff] %v1099
  %1141 = vst [vmem:[#allocation2 + $0xa1] sm:$0xff] %v1100
  %1142 = vst [vmem:[#allocation2 + $0xab] sm:$0xff] %v1101
  %1143 = vst [vmem:[#allocation2 + $0xb5] sm:$0xff] %v1102
  %v1144 = vld [vmem:[#allocation2] ss:$2 sm:$0xf]
  %v1145 = vpack.c.bf16 %v1144, %v1144
  %1146 = vst [vmem:[#allocation3] sm:$0x3] %v1145
  %s1147 = scalar_lea.vmem [#allocation2], 20
  %v1148 = vld [vmem:[%s1147] ss:$2 sm:$0xf]
  %v1149 = vpack.c.bf16 %v1148, %v1148
  %v1151 = vrot.slane %v1149, 6
  %1153 = vst [vmem:[#allocation3] sm:$0xc] %v1151
  %s1154 = scalar_lea.vmem [#allocation2], 40
  %v1155 = vld [vmem:[%s1154] ss:$2 sm:$0xf]
  %v1156 = vpack.c.bf16 %v1155, %v1155
  %1157 = vst [vmem:[#allocation3 + $0x24] sm:$0x3] %v1156
  %s1158 = scalar_lea.vmem [#allocation2], 60
  %v1159 = vld [vmem:[%s1158] ss:$2 sm:$0xf]
  %v1160 = vpack.c.bf16 %v1159, %v1159
  %v1162 = vrot.slane %v1160, 6
  %1164 = vst [vmem:[#allocation3 + $0x24] sm:$0xc] %v1162
  %s1165 = scalar_lea.vmem [#allocation2], 100
  %v1166 = vld [vmem:[%s1165] ss:$2 sm:$0xf]
  %v1167 = vpack.c.bf16 %v1166, %v1166
  %1168 = vst [vmem:[#allocation3 + $0x48] sm:$0x3] %v1167
  %s1169 = scalar_lea.vmem [#allocation2], 120
  %v1170 = vld [vmem:[%s1169] ss:$2 sm:$0xf]
  %v1171 = vpack.c.bf16 %v1170, %v1170
  %v1173 = vrot.slane %v1171, 6
  %1175 = vst [vmem:[#allocation3 + $0x48] sm:$0xc] %v1173
  %s1176 = scalar_lea.vmem [#allocation2], 140
  %v1177 = vld [vmem:[%s1176] ss:$2 sm:$0xf]
  %v1178 = vpack.c.bf16 %v1177, %v1177
  %1179 = vst [vmem:[#allocation3 + $0x6c] sm:$0x3] %v1178
  %s1180 = scalar_lea.vmem [#allocation2], 160
  %v1181 = vld [vmem:[%s1180] ss:$2 sm:$0xf]
  %v1182 = vpack.c.bf16 %v1181, %v1181
  %v1184 = vrot.slane %v1182, 6
  %1186 = vst [vmem:[#allocation3 + $0x6c] sm:$0xc] %v1184
  %s1187 = scalar_lea.vmem [#allocation2], 1
  %v1188 = vld [vmem:[%s1187] ss:$2 sm:$0xf]
  %v1189 = vpack.c.bf16 %v1188, %v1188
  %1190 = vst [vmem:[#allocation3 + $0x4] sm:$0x3] %v1189
  %s1191 = scalar_lea.vmem [#allocation2], 21
  %v1192 = vld [vmem:[%s1191] ss:$2 sm:$0xf]
  %v1193 = vpack.c.bf16 %v1192, %v1192
  %v1195 = vrot.slane %v1193, 6
  %1197 = vst [vmem:[#allocation3 + $0x4] sm:$0xc] %v1195
  %s1198 = scalar_lea.vmem [#allocation2], 41
  %v1199 = vld [vmem:[%s1198] ss:$2 sm:$0xf]
  %v1200 = vpack.c.bf16 %v1199, %v1199
  %1201 = vst [vmem:[#allocation3 + $0x28] sm:$0x3] %v1200
  %s1202 = scalar_lea.vmem [#allocation2], 61
  %v1203 = vld [vmem:[%s1202] ss:$2 sm:$0xf]
  %v1204 = vpack.c.bf16 %v1203, %v1203
  %v1206 = vrot.slane %v1204, 6
  %1208 = vst [vmem:[#allocation3 + $0x28] sm:$0xc] %v1206
  %s1209 = scalar_lea.vmem [#allocation2], 101
  %v1210 = vld [vmem:[%s1209] ss:$2 sm:$0xf]
  %v1211 = vpack.c.bf16 %v1210, %v1210
  %1212 = vst [vmem:[#allocation3 + $0x4c] sm:$0x3] %v1211
  %s1213 = scalar_lea.vmem [#allocation2], 121
  %v1214 = vld [vmem:[%s1213] ss:$2 sm:$0xf]
  %v1215 = vpack.c.bf16 %v1214, %v1214
  %v1217 = vrot.slane %v1215, 6
  %1219 = vst [vmem:[#allocation3 + $0x4c] sm:$0xc] %v1217
  %s1220 = scalar_lea.vmem [#allocation2], 141
  %v1221 = vld [vmem:[%s1220] ss:$2 sm:$0xf]
  %v1222 = vpack.c.bf16 %v1221, %v1221
  %1223 = vst [vmem:[#allocation3 + $0x70] sm:$0x3] %v1222
  %s1224 = scalar_lea.vmem [#allocation2], 161
  %v1225 = vld [vmem:[%s1224] ss:$2 sm:$0xf]
  %v1226 = vpack.c.bf16 %v1225, %v1225
  %v1228 = vrot.slane %v1226, 6
  %1230 = vst [vmem:[#allocation3 + $0x70] sm:$0xc] %v1228
  %s1231 = scalar_lea.vmem [#allocation2], 2
  %v1232 = vld [vmem:[%s1231] ss:$2 sm:$0xf]
  %v1233 = vpack.c.bf16 %v1232, %v1232
  %1234 = vst [vmem:[#allocation3 + $0x8] sm:$0x3] %v1233
  %s1235 = scalar_lea.vmem [#allocation2], 22
  %v1236 = vld [vmem:[%s1235] ss:$2 sm:$0xf]
  %v1237 = vpack.c.bf16 %v1236, %v1236
  %v1239 = vrot.slane %v1237, 6
  %1241 = vst [vmem:[#allocation3 + $0x8] sm:$0xc] %v1239
  %s1242 = scalar_lea.vmem [#allocation2], 42
  %v1243 = vld [vmem:[%s1242] ss:$2 sm:$0xf]
  %v1244 = vpack.c.bf16 %v1243, %v1243
  %1245 = vst [vmem:[#allocation3 + $0x2c] sm:$0x3] %v1244
  %s1246 = scalar_lea.vmem [#allocation2], 62
  %v1247 = vld [vmem:[%s1246] ss:$2 sm:$0xf]
  %v1248 = vpack.c.bf16 %v1247, %v1247
  %v1250 = vrot.slane %v1248, 6
  %1252 = vst [vmem:[#allocation3 + $0x2c] sm:$0xc] %v1250
  %s1253 = scalar_lea.vmem [#allocation2], 102
  %v1254 = vld [vmem:[%s1253] ss:$2 sm:$0xf]
  %v1255 = vpack.c.bf16 %v1254, %v1254
  %1256 = vst [vmem:[#allocation3 + $0x50] sm:$0x3] %v1255
  %s1257 = scalar_lea.vmem [#allocation2], 122
  %v1258 = vld [vmem:[%s1257] ss:$2 sm:$0xf]
  %v1259 = vpack.c.bf16 %v1258, %v1258
  %v1261 = vrot.slane %v1259, 6
  %1263 = vst [vmem:[#allocation3 + $0x50] sm:$0xc] %v1261
  %s1264 = scalar_lea.vmem [#allocation2], 142
  %v1265 = vld [vmem:[%s1264] ss:$2 sm:$0xf]
  %v1266 = vpack.c.bf16 %v1265, %v1265
  %1267 = vst [vmem:[#allocation3 + $0x74] sm:$0x3] %v1266
  %s1268 = scalar_lea.vmem [#allocation2], 162
  %v1269 = vld [vmem:[%s1268] ss:$2 sm:$0xf]
  %v1270 = vpack.c.bf16 %v1269, %v1269
  %v1272 = vrot.slane %v1270, 6
  %1274 = vst [vmem:[#allocation3 + $0x74] sm:$0xc] %v1272
  %s1275 = scalar_lea.vmem [#allocation2], 10
  %v1276 = vld [vmem:[%s1275] ss:$2 sm:$0xf]
  %v1277 = vpack.c.bf16 %v1276, %v1276
  %1278 = vst [vmem:[#allocation3 + $0xc] sm:$0x3] %v1277
  %s1279 = scalar_lea.vmem [#allocation2], 30
  %v1280 = vld [vmem:[%s1279] ss:$2 sm:$0xf]
  %v1281 = vpack.c.bf16 %v1280, %v1280
  %v1283 = vrot.slane %v1281, 6
  %1285 = vst [vmem:[#allocation3 + $0xc] sm:$0xc] %v1283
  %s1286 = scalar_lea.vmem [#allocation2], 50
  %v1287 = vld [vmem:[%s1286] ss:$2 sm:$0xf]
  %v1288 = vpack.c.bf16 %v1287, %v1287
  %1289 = vst [vmem:[#allocation3 + $0x30] sm:$0x3] %v1288
  %s1290 = scalar_lea.vmem [#allocation2], 70
  %v1291 = vld [vmem:[%s1290] ss:$2 sm:$0xf]
  %v1292 = vpack.c.bf16 %v1291, %v1291
  %v1294 = vrot.slane %v1292, 6
  %1296 = vst [vmem:[#allocation3 + $0x30] sm:$0xc] %v1294
  %s1297 = scalar_lea.vmem [#allocation2], 110
  %v1298 = vld [vmem:[%s1297] ss:$2 sm:$0xf]
  %v1299 = vpack.c.bf16 %v1298, %v1298
  %1300 = vst [vmem:[#allocation3 + $0x54] sm:$0x3] %v1299
  %s1301 = scalar_lea.vmem [#allocation2], 130
  %v1302 = vld [vmem:[%s1301] ss:$2 sm:$0xf]
  %v1303 = vpack.c.bf16 %v1302, %v1302
  %v1305 = vrot.slane %v1303, 6
  %1307 = vst [vmem:[#allocation3 + $0x54] sm:$0xc] %v1305
  %s1308 = scalar_lea.vmem [#allocation2], 150
  %v1309 = vld [vmem:[%s1308] ss:$2 sm:$0xf]
  %v1310 = vpack.c.bf16 %v1309, %v1309
  %1311 = vst [vmem:[#allocation3 + $0x78] sm:$0x3] %v1310
  %s1312 = scalar_lea.vmem [#allocation2], 170
  %v1313 = vld [vmem:[%s1312] ss:$2 sm:$0xf]
  %v1314 = vpack.c.bf16 %v1313, %v1313
  %v1316 = vrot.slane %v1314, 6
  %1318 = vst [vmem:[#allocation3 + $0x78] sm:$0xc] %v1316
  %s1319 = scalar_lea.vmem [#allocation2], 11
  %v1320 = vld [vmem:[%s1319] ss:$2 sm:$0xf]
  %v1321 = vpack.c.bf16 %v1320, %v1320
  %1322 = vst [vmem:[#allocation3 + $0x10] sm:$0x3] %v1321
  %s1323 = scalar_lea.vmem [#allocation2], 31
  %v1324 = vld [vmem:[%s1323] ss:$2 sm:$0xf]
  %v1325 = vpack.c.bf16 %v1324, %v1324
  %v1327 = vrot.slane %v1325, 6
  %1329 = vst [vmem:[#allocation3 + $0x10] sm:$0xc] %v1327
  %s1330 = scalar_lea.vmem [#allocation2], 51
  %v1331 = vld [vmem:[%s1330] ss:$2 sm:$0xf]
  %v1332 = vpack.c.bf16 %v1331, %v1331
  %1333 = vst [vmem:[#allocation3 + $0x34] sm:$0x3] %v1332
  %s1334 = scalar_lea.vmem [#allocation2], 71
  %v1335 = vld [vmem:[%s1334] ss:$2 sm:$0xf]
  %v1336 = vpack.c.bf16 %v1335, %v1335
  %v1338 = vrot.slane %v1336, 6
  %1340 = vst [vmem:[#allocation3 + $0x34] sm:$0xc] %v1338
  %s1341 = scalar_lea.vmem [#allocation2], 111
  %v1342 = vld [vmem:[%s1341] ss:$2 sm:$0xf]
  %v1343 = vpack.c.bf16 %v1342, %v1342
  %1344 = vst [vmem:[#allocation3 + $0x58] sm:$0x3] %v1343
  %s1345 = scalar_lea.vmem [#allocation2], 131
  %v1346 = vld [vmem:[%s1345] ss:$2 sm:$0xf]
  %v1347 = vpack.c.bf16 %v1346, %v1346
  %v1349 = vrot.slane %v1347, 6
  %1351 = vst [vmem:[#allocation3 + $0x58] sm:$0xc] %v1349
  %s1352 = scalar_lea.vmem [#allocation2], 151
  %v1353 = vld [vmem:[%s1352] ss:$2 sm:$0xf]
  %v1354 = vpack.c.bf16 %v1353, %v1353
  %1355 = vst [vmem:[#allocation3 + $0x7c] sm:$0x3] %v1354
  %s1356 = scalar_lea.vmem [#allocation2], 171
  %v1357 = vld [vmem:[%s1356] ss:$2 sm:$0xf]
  %v1358 = vpack.c.bf16 %v1357, %v1357
  %v1360 = vrot.slane %v1358, 6
  %1362 = vst [vmem:[#allocation3 + $0x7c] sm:$0xc] %v1360
  %s1363 = scalar_lea.vmem [#allocation2], 12
  %v1364 = vld [vmem:[%s1363] ss:$2 sm:$0xf]
  %v1365 = vpack.c.bf16 %v1364, %v1364
  %1366 = vst [vmem:[#allocation3 + $0x14] sm:$0x3] %v1365
  %s1367 = scalar_lea.vmem [#allocation2], 32
  %v1368 = vld [vmem:[%s1367] ss:$2 sm:$0xf]
  %v1369 = vpack.c.bf16 %v1368, %v1368
  %v1371 = vrot.slane %v1369, 6
  %1373 = vst [vmem:[#allocation3 + $0x14] sm:$0xc] %v1371
  %s1374 = scalar_lea.vmem [#allocation2], 52
  %v1375 = vld [vmem:[%s1374] ss:$2 sm:$0xf]
  %v1376 = vpack.c.bf16 %v1375, %v1375
  %1377 = vst [vmem:[#allocation3 + $0x38] sm:$0x3] %v1376
  %s1378 = scalar_lea.vmem [#allocation2], 72
  %v1379 = vld [vmem:[%s1378] ss:$2 sm:$0xf]
  %v1380 = vpack.c.bf16 %v1379, %v1379
  %v1382 = vrot.slane %v1380, 6
  %1384 = vst [vmem:[#allocation3 + $0x38] sm:$0xc] %v1382
  %s1385 = scalar_lea.vmem [#allocation2], 112
  %v1386 = vld [vmem:[%s1385] ss:$2 sm:$0xf]
  %v1387 = vpack.c.bf16 %v1386, %v1386
  %1388 = vst [vmem:[#allocation3 + $0x5c] sm:$0x3] %v1387
  %s1389 = scalar_lea.vmem [#allocation2], 132
  %v1390 = vld [vmem:[%s1389] ss:$2 sm:$0xf]
  %v1391 = vpack.c.bf16 %v1390, %v1390
  %v1393 = vrot.slane %v1391, 6
  %1395 = vst [vmem:[#allocation3 + $0x5c] sm:$0xc] %v1393
  %s1396 = scalar_lea.vmem [#allocation2], 152
  %v1397 = vld [vmem:[%s1396] ss:$2 sm:$0xf]
  %v1398 = vpack.c.bf16 %v1397, %v1397
  %1399 = vst [vmem:[#allocation3 + $0x80] sm:$0x3] %v1398
  %s1400 = scalar_lea.vmem [#allocation2], 172
  %v1401 = vld [vmem:[%s1400] ss:$2 sm:$0xf]
  %v1402 = vpack.c.bf16 %v1401, %v1401
  %v1404 = vrot.slane %v1402, 6
  %1406 = vst [vmem:[#allocation3 + $0x80] sm:$0xc] %v1404
  %v1407 = vld [vmem:[%s1147] ss:$2 sm:$0xf]
  %v1408 = vpack.c.bf16 %v1407, %v1407
  %1409 = vst [vmem:[#allocation3 + $0x18] sm:$0x3] %v1408
  %v1410 = vld [vmem:[%s1154] ss:$2 sm:$0xf]
  %v1411 = vpack.c.bf16 %v1410, %v1410
  %v1413 = vrot.slane %v1411, 6
  %1415 = vst [vmem:[#allocation3 + $0x18] sm:$0xc] %v1413
  %v1416 = vld [vmem:[%s1158] ss:$2 sm:$0xf]
  %v1417 = vpack.c.bf16 %v1416, %v1416
  %1418 = vst [vmem:[#allocation3 + $0x3c] sm:$0x3] %v1417
  %s1419 = scalar_lea.vmem [#allocation2], 80
  %v1420 = vld [vmem:[%s1419] ss:$2 sm:$0xf]
  %v1421 = vpack.c.bf16 %v1420, %v1420
  %v1423 = vrot.slane %v1421, 6
  %1425 = vst [vmem:[#allocation3 + $0x3c] sm:$0xc] %v1423
  %v1426 = vld [vmem:[%s1169] ss:$2 sm:$0xf]
  %v1427 = vpack.c.bf16 %v1426, %v1426
  %1428 = vst [vmem:[#allocation3 + $0x60] sm:$0x3] %v1427
  %v1429 = vld [vmem:[%s1176] ss:$2 sm:$0xf]
  %v1430 = vpack.c.bf16 %v1429, %v1429
  %v1432 = vrot.slane %v1430, 6
  %1434 = vst [vmem:[#allocation3 + $0x60] sm:$0xc] %v1432
  %v1435 = vld [vmem:[%s1180] ss:$2 sm:$0xf]
  %v1436 = vpack.c.bf16 %v1435, %v1435
  %1437 = vst [vmem:[#allocation3 + $0x84] sm:$0x3] %v1436
  %s1438 = scalar_lea.vmem [#allocation2], 180
  %v1439 = vld [vmem:[%s1438] ss:$2 sm:$0xf]
  %v1440 = vpack.c.bf16 %v1439, %v1439
  %v1442 = vrot.slane %v1440, 6
  %1444 = vst [vmem:[#allocation3 + $0x84] sm:$0xc] %v1442
  %v1445 = vld [vmem:[%s1191] ss:$2 sm:$0xf]
  %v1446 = vpack.c.bf16 %v1445, %v1445
  %1447 = vst [vmem:[#allocation3 + $0x1c] sm:$0x3] %v1446
  %v1448 = vld [vmem:[%s1198] ss:$2 sm:$0xf]
  %v1449 = vpack.c.bf16 %v1448, %v1448
  %v1451 = vrot.slane %v1449, 6
  %1453 = vst [vmem:[#allocation3 + $0x1c] sm:$0xc] %v1451
  %v1454 = vld [vmem:[%s1202] ss:$2 sm:$0xf]
  %v1455 = vpack.c.bf16 %v1454, %v1454
  %1456 = vst [vmem:[#allocation3 + $0x40] sm:$0x3] %v1455
  %s1457 = scalar_lea.vmem [#allocation2], 81
  %v1458 = vld [vmem:[%s1457] ss:$2 sm:$0xf]
  %v1459 = vpack.c.bf16 %v1458, %v1458
  %v1461 = vrot.slane %v1459, 6
  %1463 = vst [vmem:[#allocation3 + $0x40] sm:$0xc] %v1461
  %v1464 = vld [vmem:[%s1213] ss:$2 sm:$0xf]
  %v1465 = vpack.c.bf16 %v1464, %v1464
  %1466 = vst [vmem:[#allocation3 + $0x64] sm:$0x3] %v1465
  %v1467 = vld [vmem:[%s1220] ss:$2 sm:$0xf]
  %v1468 = vpack.c.bf16 %v1467, %v1467
  %v1470 = vrot.slane %v1468, 6
  %1472 = vst [vmem:[#allocation3 + $0x64] sm:$0xc] %v1470
  %v1473 = vld [vmem:[%s1224] ss:$2 sm:$0xf]
  %v1474 = vpack.c.bf16 %v1473, %v1473
  %1475 = vst [vmem:[#allocation3 + $0x88] sm:$0x3] %v1474
  %s1476 = scalar_lea.vmem [#allocation2], 181
  %v1477 = vld [vmem:[%s1476] ss:$2 sm:$0xf]
  %v1478 = vpack.c.bf16 %v1477, %v1477
  %v1480 = vrot.slane %v1478, 6
  %1482 = vst [vmem:[#allocation3 + $0x88] sm:$0xc] %v1480
  %v1483 = vld [vmem:[%s1235] ss:$2 sm:$0xf]
  %v1484 = vpack.c.bf16 %v1483, %v1483
  %1485 = vst [vmem:[#allocation3 + $0x20] sm:$0x3] %v1484
  %v1486 = vld [vmem:[%s1242] ss:$2 sm:$0xf]
  %v1487 = vpack.c.bf16 %v1486, %v1486
  %v1489 = vrot.slane %v1487, 6
  %1491 = vst [vmem:[#allocation3 + $0x20] sm:$0xc] %v1489
  %v1492 = vld [vmem:[%s1246] ss:$2 sm:$0xf]
  %v1493 = vpack.c.bf16 %v1492, %v1492
  %1494 = vst [vmem:[#allocation3 + $0x44] sm:$0x3] %v1493
  %s1495 = scalar_lea.vmem [#allocation2], 82
  %v1496 = vld [vmem:[%s1495] ss:$2 sm:$0xf]
  %v1497 = vpack.c.bf16 %v1496, %v1496
  %v1499 = vrot.slane %v1497, 6
  %1501 = vst [vmem:[#allocation3 + $0x44] sm:$0xc] %v1499
  %v1502 = vld [vmem:[%s1257] ss:$2 sm:$0xf]
  %v1503 = vpack.c.bf16 %v1502, %v1502
  %1504 = vst [vmem:[#allocation3 + $0x68] sm:$0x3] %v1503
  %v1505 = vld [vmem:[%s1264] ss:$2 sm:$0xf]
  %v1506 = vpack.c.bf16 %v1505, %v1505
  %v1508 = vrot.slane %v1506, 6
  %1510 = vst [vmem:[#allocation3 + $0x68] sm:$0xc] %v1508
  %v1511 = vld [vmem:[%s1268] ss:$2 sm:$0xf]
  %v1512 = vpack.c.bf16 %v1511, %v1511
  %1513 = vst [vmem:[#allocation3 + $0x8c] sm:$0x3] %v1512
  %s1514 = scalar_lea.vmem [#allocation2], 182
  %v1515 = vld [vmem:[%s1514] ss:$2 sm:$0xf]
  %v1516 = vpack.c.bf16 %v1515, %v1515
  %v1518 = vrot.slane %v1516, 6
  %1520 = vst [vmem:[#allocation3 + $0x8c] sm:$0xc] %v1518
  %v1521 = vld [vmem:[#allocation3] sm:$0xff]
  %v1522 = vld [vmem:[#allocation3 + $0x8] sm:$0xff]
  %v1523 = vld [vmem:[#allocation3 + $0x10] sm:$0xff]
  %v1524 = vld [vmem:[#allocation3 + $0x18] sm:$0xff]
  %v1525 = vld [vmem:[#allocation3 + $0x20] sm:$0xf]
  %v1526 = vld [vmem:[#allocation3 + $0x24] sm:$0xff]
  %v1527 = vld [vmem:[#allocation3 + $0x2c] sm:$0xff]
  %v1528 = vld [vmem:[#allocation3 + $0x34] sm:$0xff]
  %v1529 = vld [vmem:[#allocation3 + $0x3c] sm:$0xff]
  %v1530 = vld [vmem:[#allocation3 + $0x44] sm:$0xf]
  %v1531 = vld [vmem:[#allocation3 + $0x48] sm:$0xff]
  %v1532 = vld [vmem:[#allocation3 + $0x50] sm:$0xff]
  %v1533 = vld [vmem:[#allocation3 + $0x58] sm:$0xff]
  %v1534 = vld [vmem:[#allocation3 + $0x60] sm:$0xff]
  %v1535 = vld [vmem:[#allocation3 + $0x68] sm:$0xf]
  %v1536 = vld [vmem:[#allocation3 + $0x6c] sm:$0xff]
  %v1537 = vld [vmem:[#allocation3 + $0x74] sm:$0xff]
  %v1538 = vld [vmem:[#allocation3 + $0x7c] sm:$0xff]
  %v1539 = vld [vmem:[#allocation3 + $0x84] sm:$0xff]
  %v1540 = vld [vmem:[#allocation3 + $0x8c] sm:$0xf]
  %v1541 = vld [vmem:[%s3] sm:$0xf]
  %v1542 = vld [vmem:[%s3 + $0x4] sm:$0xf]
  %v1543 = vld [vmem:[%s3 + $0x8] sm:$0xf]
  %v1544 = vld [vmem:[%s3 + $0xc] sm:$0xf]
  %v1545 = vld [vmem:[%s3 + $0x10] sm:$0xf]
  %v1546 = vld [vmem:[%s3 + $0x14] sm:$0xf]
  %v1547 = vld [vmem:[%s3 + $0x18] sm:$0xf]
  %v1548 = vld [vmem:[%s3 + $0x1c] sm:$0xf]
  %v1549 = vld [vmem:[%s3 + $0x20] sm:$0xf]
  %v1550 = vld [vmem:[%s3 + $0x24] sm:$0xf]
  %v1551 = vld [vmem:[%s3 + $0x28] sm:$0xf]
  %v1552 = vld [vmem:[%s3 + $0x2c] sm:$0xf]
  %v1553 = vld [vmem:[%s3 + $0x30] sm:$0xf]
  %v1554 = vld [vmem:[%s3 + $0x34] sm:$0xf]
  %v1555 = vld [vmem:[%s3 + $0x38] sm:$0xf]
  %v1556 = vld [vmem:[%s3 + $0x3c] sm:$0xf]
  %v1557 = vld [vmem:[%s3 + $0x40] sm:$0xf]
  %v1558 = vld [vmem:[%s3 + $0x44] sm:$0xf]
  %v1559 = vld [vmem:[%s3 + $0x48] sm:$0xf]
  %v1560 = vld [vmem:[%s3 + $0x4c] sm:$0xf]
  %v1561 = vld [vmem:[%s3 + $0x50] sm:$0xf]
  %v1562 = vld [vmem:[%s3 + $0x54] sm:$0xf]
  %v1563 = vld [vmem:[%s3 + $0x58] sm:$0xf]
  %v1564 = vld [vmem:[%s3 + $0x5c] sm:$0xf]
  %v1565 = vld [vmem:[%s3 + $0x60] sm:$0xf]
  %v1566 = vld [vmem:[%s3 + $0x64] sm:$0xf]
  %v1567 = vld [vmem:[%s3 + $0x68] sm:$0xf]
  %v1568 = vld [vmem:[%s3 + $0x6c] sm:$0xf]
  %v1569 = vld [vmem:[%s3 + $0x70] sm:$0xf]
  %v1570 = vld [vmem:[%s3 + $0x74] sm:$0xf]
  %v1571 = vld [vmem:[%s3 + $0x78] sm:$0xf]
  %v1572 = vld [vmem:[%s3 + $0x7c] sm:$0xf]
  %v1573 = vld [vmem:[%s3 + $0x80] sm:$0xf]
  %v1574 = vld [vmem:[%s3 + $0x84] sm:$0xf]
  %v1575 = vld [vmem:[%s3 + $0x88] sm:$0xf]
  %v1576 = vld [vmem:[%s3 + $0x8c] sm:$0xf]
  %v1577 = vld [vmem:[%s3 + $0x90] sm:$0xf]
  %v1578 = vld [vmem:[%s3 + $0x94] sm:$0xf]
  %v1579 = vld [vmem:[%s3 + $0x98] sm:$0xf]
  %v1580 = vld [vmem:[%s3 + $0x9c] sm:$0xf]
  %v1581 = vld [vmem:[%s3 + $0xa0] sm:$0xf]
  %v1582 = vld [vmem:[%s3 + $0xa4] sm:$0xf]
  %v1583 = vld [vmem:[%s3 + $0xa8] sm:$0xf]
  %v1584 = vld [vmem:[%s3 + $0xac] sm:$0xf]
  %v1585 = vld [vmem:[%s3 + $0xb0] sm:$0xf]
  %v1586 = vld [vmem:[%s3 + $0xb4] sm:$0xf]
  %v1587 = vld [vmem:[%s3 + $0xb8] sm:$0xf]
  %v1588 = vld [vmem:[%s3 + $0xbc] sm:$0xf]
  %v1589 = vld [vmem:[%s3 + $0xc0] sm:$0xf]
  %v1590 = vld [vmem:[%s3 + $0xc4] sm:$0xf]
  %v1591 = vld [vmem:[%s3 + $0xc8] sm:$0xf]
  %v1592 = vld [vmem:[%s3 + $0xcc] sm:$0xf]
  %v1593 = vld [vmem:[%s3 + $0xd0] sm:$0xf]
  %v1594 = vld [vmem:[%s3 + $0xd4] sm:$0xf]
  %v1595 = vld [vmem:[%s3 + $0xd8] sm:$0xf]
  %v1596 = vld [vmem:[%s3 + $0xdc] sm:$0xf]
  %v1597 = vld [vmem:[%s3 + $0xe0] sm:$0xf]
  %v1598 = vld [vmem:[%s3 + $0xe4] sm:$0xf]
  %v1599 = vld [vmem:[%s3 + $0xe8] sm:$0xf]
  %v1600 = vld [vmem:[%s3 + $0xec] sm:$0xf]
  %v1601 = vld [vmem:[%s3 + $0xf0] sm:$0xf]
  %v1602 = vld [vmem:[%s3 + $0xf4] sm:$0xf]
  %v1603 = vld [vmem:[%s3 + $0xf8] sm:$0xf]
  %v1604 = vld [vmem:[%s3 + $0xfc] sm:$0xf]
  %v1605 = vld [vmem:[%s3 + $0x100] sm:$0xf]
  %v1606 = vld [vmem:[%s3 + $0x104] sm:$0xf]
  %v1607 = vld [vmem:[%s3 + $0x108] sm:$0xf]
  %v1608 = vld [vmem:[%s3 + $0x10c] sm:$0xf]
  %v1609 = vld [vmem:[%s3 + $0x110] sm:$0xf]
  %v1610 = vld [vmem:[%s3 + $0x114] sm:$0xf]
  %v1611 = vld [vmem:[%s3 + $0x118] sm:$0xf]
  %v1612 = vld [vmem:[%s3 + $0x11c] sm:$0xf]
  %v1613 = vld [vmem:[%s3 + $0x120] sm:$0xf]
  %v1614 = vld [vmem:[%s3 + $0x124] sm:$0xf]
  %v1615 = vld [vmem:[%s3 + $0x128] sm:$0xf]
  %v1616 = vld [vmem:[%s3 + $0x12c] sm:$0xf]
  %v1617 = vld [vmem:[%s3 + $0x130] sm:$0xf]
  %v1618 = vld [vmem:[%s3 + $0x134] sm:$0xf]
  %v1619 = vld [vmem:[%s3 + $0x138] sm:$0xf]
  %v1620 = vld [vmem:[%s3 + $0x13c] sm:$0xf]
  %v1621 = vld [vmem:[%s3 + $0x140] sm:$0xf]
  %v1622 = vld [vmem:[%s3 + $0x144] sm:$0xf]
  %v1623 = vld [vmem:[%s3 + $0x148] sm:$0xf]
  %v1624 = vld [vmem:[%s3 + $0x14c] sm:$0xf]
  %v1625 = vld [vmem:[%s3 + $0x150] sm:$0xf]
  %v1626 = vld [vmem:[%s3 + $0x154] sm:$0xf]
  %v1627 = vld [vmem:[%s3 + $0x158] sm:$0xf]
  %v1628 = vld [vmem:[%s3 + $0x15c] sm:$0xf]
  %v1629 = vld [vmem:[%s3 + $0x160] sm:$0xf]
  %v1630 = vld [vmem:[%s3 + $0x164] sm:$0xf]
  %v1631 = vld [vmem:[%s3 + $0x168] sm:$0xf]
  %v1632 = vld [vmem:[%s3 + $0x16c] sm:$0xf]
  %v1633 = vld [vmem:[%s3 + $0x170] sm:$0xf]
  %v1634 = vld [vmem:[%s3 + $0x174] sm:$0xf]
  %v1635 = vld [vmem:[%s3 + $0x178] sm:$0xf]
  %v1636 = vld [vmem:[%s3 + $0x17c] sm:$0xf]
  %v1637 = vld [vmem:[%s3 + $0x180] sm:$0xf]
  %v1638 = vld [vmem:[%s3 + $0x184] sm:$0xf]
  %v1639 = vld [vmem:[%s3 + $0x188] sm:$0xf]
  %v1640 = vld [vmem:[%s3 + $0x18c] sm:$0xf]
  %v1641 = vld [vmem:[%s3 + $0x190] sm:$0xf]
  %v1642 = vld [vmem:[%s3 + $0x194] sm:$0xf]
  %v1643 = vld [vmem:[%s3 + $0x198] sm:$0xf]
  %v1644 = vld [vmem:[%s3 + $0x19c] sm:$0xf]
  %v1645 = vld [vmem:[%s3 + $0x1a0] sm:$0xf]
  %v1646 = vld [vmem:[%s3 + $0x1a4] sm:$0xf]
  %v1647 = vld [vmem:[%s3 + $0x1a8] sm:$0xf]
  %v1648 = vld [vmem:[%s3 + $0x1ac] sm:$0xf]
  %v1649 = vld [vmem:[%s3 + $0x1b0] sm:$0xf]
  %v1650 = vld [vmem:[%s3 + $0x1b4] sm:$0xf]
  %v1651 = vld [vmem:[%s3 + $0x1b8] sm:$0xf]
  %v1652 = vld [vmem:[%s3 + $0x1bc] sm:$0xf]
  %v1653 = vld [vmem:[%s3 + $0x1c0] sm:$0xf]
  %v1654 = vld [vmem:[%s3 + $0x1c4] sm:$0xf]
  %v1655 = vld [vmem:[%s3 + $0x1c8] sm:$0xf]
  %v1656 = vld [vmem:[%s3 + $0x1cc] sm:$0xf]
  %v1657 = vld [vmem:[%s3 + $0x1d0] sm:$0xf]
  %v1658 = vld [vmem:[%s3 + $0x1d4] sm:$0xf]
  %v1659 = vld [vmem:[%s3 + $0x1d8] sm:$0xf]
  %v1660 = vld [vmem:[%s3 + $0x1dc] sm:$0xf]
  %v1661 = vld [vmem:[%s3 + $0x1e0] sm:$0xf]
  %v1662 = vld [vmem:[%s3 + $0x1e4] sm:$0xf]
  %v1663 = vld [vmem:[%s3 + $0x1e8] sm:$0xf]
  %v1664 = vld [vmem:[%s3 + $0x1ec] sm:$0xf]
  %v1665 = vld [vmem:[%s3 + $0x1f0] sm:$0xf]
  %v1666 = vld [vmem:[%s3 + $0x1f4] sm:$0xf]
  %v1667 = vld [vmem:[%s3 + $0x1f8] sm:$0xf]
  %v1668 = vld [vmem:[%s3 + $0x1fc] sm:$0xf]
  %v1669 = vld [vmem:[%s3 + $0x200] sm:$0xf]
  %v1670 = vld [vmem:[%s3 + $0x204] sm:$0xf]
  %v1671 = vld [vmem:[%s3 + $0x208] sm:$0xf]
  %v1672 = vld [vmem:[%s3 + $0x20c] sm:$0xf]
  %v1673 = vld [vmem:[%s3 + $0x210] sm:$0xf]
  %v1674 = vld [vmem:[%s3 + $0x214] sm:$0xf]
  %v1675 = vld [vmem:[%s3 + $0x218] sm:$0xf]
  %v1676 = vld [vmem:[%s3 + $0x21c] sm:$0xf]
  %v1677 = vld [vmem:[%s3 + $0x220] sm:$0xf]
  %v1678 = vld [vmem:[%s3 + $0x224] sm:$0xf]
  %v1679 = vld [vmem:[%s3 + $0x228] sm:$0xf]
  %v1680 = vld [vmem:[%s3 + $0x22c] sm:$0xf]
  %v1681 = vld [vmem:[%s3 + $0x230] sm:$0xf]
  %v1682 = vld [vmem:[%s3 + $0x234] sm:$0xf]
  %v1683 = vld [vmem:[%s3 + $0x238] sm:$0xf]
  %v1684 = vld [vmem:[%s3 + $0x23c] sm:$0xf]
  %v1705 = vunpack.c.l.b16 %v1521
  %v1706 = vunpack.c.h.b16 %v1521
  %v1707 = vunpack.c.l.b16 %v1522
  %v1708 = vunpack.c.h.b16 %v1522
  %v1709 = vunpack.c.l.b16 %v1523
  %v1710 = vunpack.c.h.b16 %v1523
  %v1711 = vunpack.c.l.b16 %v1524
  %v1712 = vunpack.c.h.b16 %v1524
  %v1713 = vunpack.c.l.b16 %v1525
  %v1714 = vunpack.c.l.b16 %v1526
  %v1715 = vunpack.c.h.b16 %v1526
  %v1716 = vunpack.c.l.b16 %v1527
  %v1717 = vunpack.c.h.b16 %v1527
  %v1718 = vunpack.c.l.b16 %v1528
  %v1719 = vunpack.c.h.b16 %v1528
  %v1720 = vunpack.c.l.b16 %v1529
  %v1721 = vunpack.c.h.b16 %v1529
  %v1722 = vunpack.c.l.b16 %v1530
  %v1723 = vunpack.c.l.b16 %v1531
  %v1724 = vunpack.c.h.b16 %v1531
  %v1725 = vunpack.c.l.b16 %v1532
  %v1726 = vunpack.c.h.b16 %v1532
  %v1727 = vunpack.c.l.b16 %v1533
  %v1728 = vunpack.c.h.b16 %v1533
  %v1729 = vunpack.c.l.b16 %v1534
  %v1730 = vunpack.c.h.b16 %v1534
  %v1731 = vunpack.c.l.b16 %v1535
  %v1732 = vunpack.c.l.b16 %v1536
  %v1733 = vunpack.c.h.b16 %v1536
  %v1734 = vunpack.c.l.b16 %v1537
  %v1735 = vunpack.c.h.b16 %v1537
  %v1736 = vunpack.c.l.b16 %v1538
  %v1737 = vunpack.c.h.b16 %v1538
  %v1738 = vunpack.c.l.b16 %v1539
  %v1739 = vunpack.c.h.b16 %v1539
  %v1740 = vunpack.c.l.b16 %v1540
  %v1741 = vpack.c.b16 %v1714, %v1705
  %v1742 = vpack.c.b16 %v1715, %v1706
  %v1743 = vpack.c.b16 %v1716, %v1707
  %v1744 = vpack.c.b16 %v1717, %v1708
  %v1745 = vpack.c.b16 %v1718, %v1709
  %v1746 = vpack.c.b16 %v1719, %v1710
  %v1747 = vpack.c.b16 %v1720, %v1711
  %v1748 = vpack.c.b16 %v1721, %v1712
  %v1749 = vpack.c.b16 %v1722, %v1713
  %v1750 = vpack.c.b16 %v1732, %v1723
  %v1751 = vpack.c.b16 %v1733, %v1724
  %v1752 = vpack.c.b16 %v1734, %v1725
  %v1753 = vpack.c.b16 %v1735, %v1726
  %v1754 = vpack.c.b16 %v1736, %v1727
  %v1755 = vpack.c.b16 %v1737, %v1728
  %v1756 = vpack.c.b16 %v1738, %v1729
  %v1757 = vpack.c.b16 %v1739, %v1730
  %v1758 = vpack.c.b16 %v1740, %v1731
  %v1921 = vunpack.c.l.b16 %v1541
  %v1922 = vunpack.c.l.b16 %v1542
  %v1923 = vunpack.c.l.b16 %v1543
  %v1924 = vunpack.c.l.b16 %v1544
  %v1925 = vunpack.c.l.b16 %v1545
  %v1926 = vunpack.c.l.b16 %v1546
  %v1927 = vunpack.c.l.b16 %v1547
  %v1928 = vunpack.c.l.b16 %v1548
  %v1929 = vunpack.c.l.b16 %v1549
  %v1930 = vunpack.c.l.b16 %v1550
  %v1931 = vunpack.c.l.b16 %v1551
  %v1932 = vunpack.c.l.b16 %v1552
  %v1933 = vunpack.c.l.b16 %v1553
  %v1934 = vunpack.c.l.b16 %v1554
  %v1935 = vunpack.c.l.b16 %v1555
  %v1936 = vunpack.c.l.b16 %v1556
  %v1937 = vunpack.c.l.b16 %v1557
  %v1938 = vunpack.c.l.b16 %v1558
  %v1939 = vunpack.c.l.b16 %v1559
  %v1940 = vunpack.c.l.b16 %v1560
  %v1941 = vunpack.c.l.b16 %v1561
  %v1942 = vunpack.c.l.b16 %v1562
  %v1943 = vunpack.c.l.b16 %v1563
  %v1944 = vunpack.c.l.b16 %v1564
  %v1945 = vunpack.c.l.b16 %v1565
  %v1946 = vunpack.c.l.b16 %v1566
  %v1947 = vunpack.c.l.b16 %v1567
  %v1948 = vunpack.c.l.b16 %v1568
  %v1949 = vunpack.c.l.b16 %v1569
  %v1950 = vunpack.c.l.b16 %v1570
  %v1951 = vunpack.c.l.b16 %v1571
  %v1952 = vunpack.c.l.b16 %v1572
  %v1953 = vunpack.c.l.b16 %v1573
  %v1954 = vunpack.c.l.b16 %v1574
  %v1955 = vunpack.c.l.b16 %v1575
  %v1956 = vunpack.c.l.b16 %v1576
  %v1957 = vunpack.c.l.b16 %v1577
  %v1958 = vunpack.c.l.b16 %v1578
  %v1959 = vunpack.c.l.b16 %v1579
  %v1960 = vunpack.c.l.b16 %v1580
  %v1961 = vunpack.c.l.b16 %v1581
  %v1962 = vunpack.c.l.b16 %v1582
  %v1963 = vunpack.c.l.b16 %v1583
  %v1964 = vunpack.c.l.b16 %v1584
  %v1965 = vunpack.c.l.b16 %v1585
  %v1966 = vunpack.c.l.b16 %v1586
  %v1967 = vunpack.c.l.b16 %v1587
  %v1968 = vunpack.c.l.b16 %v1588
  %v1969 = vunpack.c.l.b16 %v1589
  %v1970 = vunpack.c.l.b16 %v1590
  %v1971 = vunpack.c.l.b16 %v1591
  %v1972 = vunpack.c.l.b16 %v1592
  %v1973 = vunpack.c.l.b16 %v1593
  %v1974 = vunpack.c.l.b16 %v1594
  %v1975 = vunpack.c.l.b16 %v1595
  %v1976 = vunpack.c.l.b16 %v1596
  %v1977 = vunpack.c.l.b16 %v1597
  %v1978 = vunpack.c.l.b16 %v1598
  %v1979 = vunpack.c.l.b16 %v1599
  %v1980 = vunpack.c.l.b16 %v1600
  %v1981 = vunpack.c.l.b16 %v1601
  %v1982 = vunpack.c.l.b16 %v1602
  %v1983 = vunpack.c.l.b16 %v1603
  %v1984 = vunpack.c.l.b16 %v1604
  %v1985 = vunpack.c.l.b16 %v1605
  %v1986 = vunpack.c.l.b16 %v1606
  %v1987 = vunpack.c.l.b16 %v1607
  %v1988 = vunpack.c.l.b16 %v1608
  %v1989 = vunpack.c.l.b16 %v1609
  %v1990 = vunpack.c.l.b16 %v1610
  %v1991 = vunpack.c.l.b16 %v1611
  %v1992 = vunpack.c.l.b16 %v1612
  %v1993 = vunpack.c.l.b16 %v1613
  %v1994 = vunpack.c.l.b16 %v1614
  %v1995 = vunpack.c.l.b16 %v1615
  %v1996 = vunpack.c.l.b16 %v1616
  %v1997 = vunpack.c.l.b16 %v1617
  %v1998 = vunpack.c.l.b16 %v1618
  %v1999 = vunpack.c.l.b16 %v1619
  %v2000 = vunpack.c.l.b16 %v1620
  %v2001 = vunpack.c.l.b16 %v1621
  %v2002 = vunpack.c.l.b16 %v1622
  %v2003 = vunpack.c.l.b16 %v1623
  %v2004 = vunpack.c.l.b16 %v1624
  %v2005 = vunpack.c.l.b16 %v1625
  %v2006 = vunpack.c.l.b16 %v1626
  %v2007 = vunpack.c.l.b16 %v1627
  %v2008 = vunpack.c.l.b16 %v1628
  %v2009 = vunpack.c.l.b16 %v1629
  %v2010 = vunpack.c.l.b16 %v1630
  %v2011 = vunpack.c.l.b16 %v1631
  %v2012 = vunpack.c.l.b16 %v1632
  %v2013 = vunpack.c.l.b16 %v1633
  %v2014 = vunpack.c.l.b16 %v1634
  %v2015 = vunpack.c.l.b16 %v1635
  %v2016 = vunpack.c.l.b16 %v1636
  %v2017 = vunpack.c.l.b16 %v1637
  %v2018 = vunpack.c.l.b16 %v1638
  %v2019 = vunpack.c.l.b16 %v1639
  %v2020 = vunpack.c.l.b16 %v1640
  %v2021 = vunpack.c.l.b16 %v1641
  %v2022 = vunpack.c.l.b16 %v1642
  %v2023 = vunpack.c.l.b16 %v1643
  %v2024 = vunpack.c.l.b16 %v1644
  %v2025 = vunpack.c.l.b16 %v1645
  %v2026 = vunpack.c.l.b16 %v1646
  %v2027 = vunpack.c.l.b16 %v1647
  %v2028 = vunpack.c.l.b16 %v1648
  %v2029 = vunpack.c.l.b16 %v1649
  %v2030 = vunpack.c.l.b16 %v1650
  %v2031 = vunpack.c.l.b16 %v1651
  %v2032 = vunpack.c.l.b16 %v1652
  %v2033 = vunpack.c.l.b16 %v1653
  %v2034 = vunpack.c.l.b16 %v1654
  %v2035 = vunpack.c.l.b16 %v1655
  %v2036 = vunpack.c.l.b16 %v1656
  %v2037 = vunpack.c.l.b16 %v1657
  %v2038 = vunpack.c.l.b16 %v1658
  %v2039 = vunpack.c.l.b16 %v1659
  %v2040 = vunpack.c.l.b16 %v1660
  %v2041 = vunpack.c.l.b16 %v1661
  %v2042 = vunpack.c.l.b16 %v1662
  %v2043 = vunpack.c.l.b16 %v1663
  %v2044 = vunpack.c.l.b16 %v1664
  %v2045 = vunpack.c.l.b16 %v1665
  %v2046 = vunpack.c.l.b16 %v1666
  %v2047 = vunpack.c.l.b16 %v1667
  %v2048 = vunpack.c.l.b16 %v1668
  %v2049 = vunpack.c.l.b16 %v1669
  %v2050 = vunpack.c.l.b16 %v1670
  %v2051 = vunpack.c.l.b16 %v1671
  %v2052 = vunpack.c.l.b16 %v1672
  %v2053 = vunpack.c.l.b16 %v1673
  %v2054 = vunpack.c.l.b16 %v1674
  %v2055 = vunpack.c.l.b16 %v1675
  %v2056 = vunpack.c.l.b16 %v1676
  %v2057 = vunpack.c.l.b16 %v1677
  %v2058 = vunpack.c.l.b16 %v1678
  %v2059 = vunpack.c.l.b16 %v1679
  %v2060 = vunpack.c.l.b16 %v1680
  %v2061 = vunpack.c.l.b16 %v1681
  %v2062 = vunpack.c.l.b16 %v1682
  %v2063 = vunpack.c.l.b16 %v1683
  %v2064 = vunpack.c.l.b16 %v1684
  %v2065 = vpack.c.b16 %v1922, %v1921
  %v2066 = vpack.c.b16 %v1924, %v1923
  %v2067 = vpack.c.b16 %v1926, %v1925
  %v2068 = vpack.c.b16 %v1928, %v1927
  %v2069 = vpack.c.b16 %v1930, %v1929
  %v2070 = vpack.c.b16 %v1932, %v1931
  %v2071 = vpack.c.b16 %v1934, %v1933
  %v2072 = vpack.c.b16 %v1936, %v1935
  %v2073 = vpack.c.b16 %v1938, %v1937
  %v2074 = vpack.c.b16 %v1940, %v1939
  %v2075 = vpack.c.b16 %v1942, %v1941
  %v2076 = vpack.c.b16 %v1944, %v1943
  %v2077 = vpack.c.b16 %v1946, %v1945
  %v2078 = vpack.c.b16 %v1948, %v1947
  %v2079 = vpack.c.b16 %v1950, %v1949
  %v2080 = vpack.c.b16 %v1952, %v1951
  %v2081 = vpack.c.b16 %v1954, %v1953
  %v2082 = vpack.c.b16 %v1956, %v1955
  %v2083 = vpack.c.b16 %v1958, %v1957
  %v2084 = vpack.c.b16 %v1960, %v1959
  %v2085 = vpack.c.b16 %v1962, %v1961
  %v2086 = vpack.c.b16 %v1964, %v1963
  %v2087 = vpack.c.b16 %v1966, %v1965
  %v2088 = vpack.c.b16 %v1968, %v1967
  %v2089 = vpack.c.b16 %v1970, %v1969
  %v2090 = vpack.c.b16 %v1972, %v1971
  %v2091 = vpack.c.b16 %v1974, %v1973
  %v2092 = vpack.c.b16 %v1976, %v1975
  %v2093 = vpack.c.b16 %v1978, %v1977
  %v2094 = vpack.c.b16 %v1980, %v1979
  %v2095 = vpack.c.b16 %v1982, %v1981
  %v2096 = vpack.c.b16 %v1984, %v1983
  %v2097 = vpack.c.b16 %v1986, %v1985
  %v2098 = vpack.c.b16 %v1988, %v1987
  %v2099 = vpack.c.b16 %v1990, %v1989
  %v2100 = vpack.c.b16 %v1992, %v1991
  %v2101 = vpack.c.b16 %v1994, %v1993
  %v2102 = vpack.c.b16 %v1996, %v1995
  %v2103 = vpack.c.b16 %v1998, %v1997
  %v2104 = vpack.c.b16 %v2000, %v1999
  %v2105 = vpack.c.b16 %v2002, %v2001
  %v2106 = vpack.c.b16 %v2004, %v2003
  %v2107 = vpack.c.b16 %v2006, %v2005
  %v2108 = vpack.c.b16 %v2008, %v2007
  %v2109 = vpack.c.b16 %v2010, %v2009
  %v2110 = vpack.c.b16 %v2012, %v2011
  %v2111 = vpack.c.b16 %v2014, %v2013
  %v2112 = vpack.c.b16 %v2016, %v2015
  %v2113 = vpack.c.b16 %v2018, %v2017
  %v2114 = vpack.c.b16 %v2020, %v2019
  %v2115 = vpack.c.b16 %v2022, %v2021
  %v2116 = vpack.c.b16 %v2024, %v2023
  %v2117 = vpack.c.b16 %v2026, %v2025
  %v2118 = vpack.c.b16 %v2028, %v2027
  %v2119 = vpack.c.b16 %v2030, %v2029
  %v2120 = vpack.c.b16 %v2032, %v2031
  %v2121 = vpack.c.b16 %v2034, %v2033
  %v2122 = vpack.c.b16 %v2036, %v2035
  %v2123 = vpack.c.b16 %v2038, %v2037
  %v2124 = vpack.c.b16 %v2040, %v2039
  %v2125 = vpack.c.b16 %v2042, %v2041
  %v2126 = vpack.c.b16 %v2044, %v2043
  %v2127 = vpack.c.b16 %v2046, %v2045
  %v2128 = vpack.c.b16 %v2048, %v2047
  %v2129 = vpack.c.b16 %v2050, %v2049
  %v2130 = vpack.c.b16 %v2052, %v2051
  %v2131 = vpack.c.b16 %v2054, %v2053
  %v2132 = vpack.c.b16 %v2056, %v2055
  %v2133 = vpack.c.b16 %v2058, %v2057
  %v2134 = vpack.c.b16 %v2060, %v2059
  %v2135 = vpack.c.b16 %v2062, %v2061
  %v2136 = vpack.c.b16 %v2064, %v2063
  %2209 = vmatpush.bf16.msra.mxu0 %v2072
  %2210 = vmatpush.bf16.msra.mxu0 %v2071
  %2211 = vmatpush.bf16.msra.mxu0 %v2070
  %2212 = vmatpush.bf16.msra.mxu0 %v2069
  %2213 = vmatpush.bf16.msra.mxu0 %v2068
  %2214 = vmatpush.bf16.msra.mxu0 %v2067
  %2215 = vmatpush.bf16.msra.mxu0 %v2066
  %2216 = vmatpush.bf16.msra.mxu0 %v2065
  %2217 = vmatmul.bf16.gmra.mxu0 %v1741
  %v2218 = vpop.f32.mrf.mxu0
  %v2219 = vadd.f32 0.0, %v2218
  %v2220 = vpop.f32.mrf.mxu0
  %v2221 = vadd.f32 0.0, %v2220
  %2222 = vmatmul.bf16.gmra.mxu0 %v1750
  %v2223 = vpop.f32.mrf.mxu0
  %v2224 = vadd.f32 0.0, %v2223
  %v2225 = vpop.f32.mrf.mxu0
  %v2226 = vadd.f32 0.0, %v2225
  %2227 = vdwg.mxu0
  %2228 = vmatpush.bf16.msra.mxu0 %v2080
  %2229 = vmatpush.bf16.msra.mxu0 %v2079
  %2230 = vmatpush.bf16.msra.mxu0 %v2078
  %2231 = vmatpush.bf16.msra.mxu0 %v2077
  %2232 = vmatpush.bf16.msra.mxu0 %v2076
  %2233 = vmatpush.bf16.msra.mxu0 %v2075
  %2234 = vmatpush.bf16.msra.mxu0 %v2074
  %2235 = vmatpush.bf16.msra.mxu0 %v2073
  %2236 = vmatmul.bf16.gmra.mxu0 %v1742
  %v2237 = vpop.f32.mrf.mxu0
  %v2238 = vadd.f32 %v2219, %v2237
  %v2239 = vpop.f32.mrf.mxu0
  %v2240 = vadd.f32 %v2221, %v2239
  %2241 = vmatmul.bf16.gmra.mxu0 %v1751
  %v2242 = vpop.f32.mrf.mxu0
  %v2243 = vadd.f32 %v2224, %v2242
  %v2244 = vpop.f32.mrf.mxu0
  %v2245 = vadd.f32 %v2226, %v2244
  %2246 = vdwg.mxu0
  %2247 = vmatpush.bf16.msra.mxu0 %v2088
  %2248 = vmatpush.bf16.msra.mxu0 %v2087
  %2249 = vmatpush.bf16.msra.mxu0 %v2086
  %2250 = vmatpush.bf16.msra.mxu0 %v2085
  %2251 = vmatpush.bf16.msra.mxu0 %v2084
  %2252 = vmatpush.bf16.msra.mxu0 %v2083
  %2253 = vmatpush.bf16.msra.mxu0 %v2082
  %2254 = vmatpush.bf16.msra.mxu0 %v2081
  %2255 = vmatmul.bf16.gmra.mxu0 %v1743
  %v2256 = vpop.f32.mrf.mxu0
  %v2257 = vadd.f32 %v2238, %v2256
  %v2258 = vpop.f32.mrf.mxu0
  %v2259 = vadd.f32 %v2240, %v2258
  %2260 = vmatmul.bf16.gmra.mxu0 %v1752
  %v2261 = vpop.f32.mrf.mxu0
  %v2262 = vadd.f32 %v2243, %v2261
  %v2263 = vpop.f32.mrf.mxu0
  %v2264 = vadd.f32 %v2245, %v2263
  %2265 = vdwg.mxu0
  %2266 = vmatpush.bf16.msra.mxu0 %v2096
  %2267 = vmatpush.bf16.msra.mxu0 %v2095
  %2268 = vmatpush.bf16.msra.mxu0 %v2094
  %2269 = vmatpush.bf16.msra.mxu0 %v2093
  %2270 = vmatpush.bf16.msra.mxu0 %v2092
  %2271 = vmatpush.bf16.msra.mxu0 %v2091
  %2272 = vmatpush.bf16.msra.mxu0 %v2090
  %2273 = vmatpush.bf16.msra.mxu0 %v2089
  %2274 = vmatmul.bf16.gmra.mxu0 %v1744
  %v2275 = vpop.f32.mrf.mxu0
  %v2276 = vadd.f32 %v2257, %v2275
  %v2277 = vpop.f32.mrf.mxu0
  %v2278 = vadd.f32 %v2259, %v2277
  %2279 = vmatmul.bf16.gmra.mxu0 %v1753
  %v2280 = vpop.f32.mrf.mxu0
  %v2281 = vadd.f32 %v2262, %v2280
  %v2282 = vpop.f32.mrf.mxu0
  %v2283 = vadd.f32 %v2264, %v2282
  %2284 = vdwg.mxu0
  %2285 = vmatpush.bf16.msra.mxu0 %v2104
  %2286 = vmatpush.bf16.msra.mxu0 %v2103
  %2287 = vmatpush.bf16.msra.mxu0 %v2102
  %2288 = vmatpush.bf16.msra.mxu0 %v2101
  %2289 = vmatpush.bf16.msra.mxu0 %v2100
  %2290 = vmatpush.bf16.msra.mxu0 %v2099
  %2291 = vmatpush.bf16.msra.mxu0 %v2098
  %2292 = vmatpush.bf16.msra.mxu0 %v2097
  %2293 = vmatmul.bf16.gmra.mxu0 %v1745
  %v2294 = vpop.f32.mrf.mxu0
  %v2295 = vadd.f32 %v2276, %v2294
  %v2296 = vpop.f32.mrf.mxu0
  %v2297 = vadd.f32 %v2278, %v2296
  %2298 = vmatmul.bf16.gmra.mxu0 %v1754
  %v2299 = vpop.f32.mrf.mxu0
  %v2300 = vadd.f32 %v2281, %v2299
  %v2301 = vpop.f32.mrf.mxu0
  %v2302 = vadd.f32 %v2283, %v2301
  %2303 = vdwg.mxu0
  %2304 = vmatpush.bf16.msra.mxu0 %v2112
  %2305 = vmatpush.bf16.msra.mxu0 %v2111
  %2306 = vmatpush.bf16.msra.mxu0 %v2110
  %2307 = vmatpush.bf16.msra.mxu0 %v2109
  %2308 = vmatpush.bf16.msra.mxu0 %v2108
  %2309 = vmatpush.bf16.msra.mxu0 %v2107
  %2310 = vmatpush.bf16.msra.mxu0 %v2106
  %2311 = vmatpush.bf16.msra.mxu0 %v2105
  %2312 = vmatmul.bf16.gmra.mxu0 %v1746
  %v2313 = vpop.f32.mrf.mxu0
  %v2314 = vadd.f32 %v2295, %v2313
  %v2315 = vpop.f32.mrf.mxu0
  %v2316 = vadd.f32 %v2297, %v2315
  %2317 = vmatmul.bf16.gmra.mxu0 %v1755
  %v2318 = vpop.f32.mrf.mxu0
  %v2319 = vadd.f32 %v2300, %v2318
  %v2320 = vpop.f32.mrf.mxu0
  %v2321 = vadd.f32 %v2302, %v2320
  %2322 = vdwg.mxu0
  %2323 = vmatpush.bf16.msra.mxu0 %v2120
  %2324 = vmatpush.bf16.msra.mxu0 %v2119
  %2325 = vmatpush.bf16.msra.mxu0 %v2118
  %2326 = vmatpush.bf16.msra.mxu0 %v2117
  %2327 = vmatpush.bf16.msra.mxu0 %v2116
  %2328 = vmatpush.bf16.msra.mxu0 %v2115
  %2329 = vmatpush.bf16.msra.mxu0 %v2114
  %2330 = vmatpush.bf16.msra.mxu0 %v2113
  %2331 = vmatmul.bf16.gmra.mxu0 %v1747
  %v2332 = vpop.f32.mrf.mxu0
  %v2333 = vadd.f32 %v2314, %v2332
  %v2334 = vpop.f32.mrf.mxu0
  %v2335 = vadd.f32 %v2316, %v2334
  %2336 = vmatmul.bf16.gmra.mxu0 %v1756
  %v2337 = vpop.f32.mrf.mxu0
  %v2338 = vadd.f32 %v2319, %v2337
  %v2339 = vpop.f32.mrf.mxu0
  %v2340 = vadd.f32 %v2321, %v2339
  %2341 = vdwg.mxu0
  %2342 = vmatpush.bf16.msra.mxu0 %v2128
  %2343 = vmatpush.bf16.msra.mxu0 %v2127
  %2344 = vmatpush.bf16.msra.mxu0 %v2126
  %2345 = vmatpush.bf16.msra.mxu0 %v2125
  %2346 = vmatpush.bf16.msra.mxu0 %v2124
  %2347 = vmatpush.bf16.msra.mxu0 %v2123
  %2348 = vmatpush.bf16.msra.mxu0 %v2122
  %2349 = vmatpush.bf16.msra.mxu0 %v2121
  %2350 = vmatmul.bf16.gmra.mxu0 %v1748
  %v2351 = vpop.f32.mrf.mxu0
  %v2352 = vadd.f32 %v2333, %v2351
  %v2353 = vpop.f32.mrf.mxu0
  %v2354 = vadd.f32 %v2335, %v2353
  %2355 = vmatmul.bf16.gmra.mxu0 %v1757
  %v2356 = vpop.f32.mrf.mxu0
  %v2357 = vadd.f32 %v2338, %v2356
  %v2358 = vpop.f32.mrf.mxu0
  %v2359 = vadd.f32 %v2340, %v2358
  %2360 = vdwg.mxu0
  %2361 = vmatpush.bf16.msra.mxu0 %v2136
  %2362 = vmatpush.bf16.msra.mxu0 %v2135
  %2363 = vmatpush.bf16.msra.mxu0 %v2134
  %2364 = vmatpush.bf16.msra.mxu0 %v2133
  %2365 = vmatpush.bf16.msra.mxu0 %v2132
  %2366 = vmatpush.bf16.msra.mxu0 %v2131
  %2367 = vmatpush.bf16.msra.mxu0 %v2130
  %2368 = vmatpush.bf16.msra.mxu0 %v2129
  %2369 = vmatmul.bf16.gmra.mxu0 %v1749
  %v2370 = vpop.f32.mrf.mxu0
  %v2371 = vadd.f32 %v2352, %v2370
  %v2372 = vpop.f32.mrf.mxu0
  %v2373 = vadd.f32 %v2354, %v2372
  %2374 = vmatmul.bf16.gmra.mxu0 %v1758
  %v2375 = vpop.f32.mrf.mxu0
  %v2376 = vadd.f32 %v2357, %v2375
  %v2377 = vpop.f32.mrf.mxu0
  %v2378 = vadd.f32 %v2359, %v2377
  %2379 = vdwg.mxu0
  %v2380 = vld [vmem:[%s4] sm:$0x3]
  %v2381 = vadd.f32 %v2371, %v2373
  %v2382 = vadd.f32 %v2381, %v2376
  %v2383 = vadd.f32 %v2382, %v2378
  %v2384 = vrot.slane %v2383, 4
  %v2385 = vadd.f32 %v2383, %v2384
  %v2386 = vrot.slane %v2385, 2
  %v2387 = vadd.f32 %v2385, %v2386
  %v2388 = vrot.slane %v2387, 1
  %v2389 = vadd.f32 %v2387, %v2388
  %v2390 = vmul.f32 %v2389, 0.03125
  %v2391 = vsub.f32 %v2371, %v2390
  %v2392 = vsub.f32 %v2373, %v2390
  %v2393 = vsub.f32 %v2376, %v2390
  %v2394 = vsub.f32 %v2378, %v2390
  %v2395 = vmul.f32 %v2391, %v2391
  %v2396 = vmul.f32 %v2392, %v2392
  %v2397 = vmul.f32 %v2393, %v2393
  %v2398 = vmul.f32 %v2394, %v2394
  %v2399 = vadd.f32 %v2395, %v2396
  %v2400 = vadd.f32 %v2399, %v2397
  %v2401 = vadd.f32 %v2400, %v2398
  %v2402 = vrot.slane %v2401, 4
  %v2403 = vadd.f32 %v2401, %v2402
  %v2404 = vrot.slane %v2403, 2
  %v2405 = vadd.f32 %v2403, %v2404
  %v2406 = vrot.slane %v2405, 1
  %v2407 = vadd.f32 %v2405, %v2406
  %v2408 = vmul.f32 %v2407, 0.03125
  %v2409 = vadd.f32 %v2408, 1e-05
  %v2410 = vrsqrt.pop %v2409
  %v2411 = vmul.f32 %v2410, %v2409
  %v2412 = vmul.f32 %v2411, %v2410
  %v2413 = vmul.f32 0.5, %v2412
  %v2414 = vsub.f32 1.5, %v2413
  %v2415 = vmul.f32 %v2410, %v2414
  %vm2416 = vweird.f32 %v2409
  %vm2417 = vweird.f32 %v2410
  %vm2418 = vmor %vm2416, %vm2417
  %v2419 = vsel %vm2418, %v2410, %v2415
  %v2420 = vmul.f32 %v2391, %v2419
  %v2421 = vmul.f32 %v2392, %v2419
  %v2422 = vmul.f32 %v2393, %v2419
  %v2423 = vmul.f32 %v2394, %v2419
  %v2424 = vperm.slane %v2380, 0
  %v2425 = vmul.f32 %v2424, %v2420
  %v2426 = vmul.f32 %v2424, %v2421
  %v2427 = vmul.f32 %v2424, %v2422
  %v2428 = vmul.f32 %v2424, %v2423
  %v2429 = vperm.slane %v2380, 1
  %v2430 = vadd.f32 %v2425, %v2429
  %v2431 = vadd.f32 %v2426, %v2429
  %v2432 = vadd.f32 %v2427, %v2429
  %v2433 = vadd.f32 %v2428, %v2429
  %vm2434 = vcmp.ge.f32.partialorder %v2430, 0.0
  %vm2435 = vcmp.ge.f32.partialorder %v2431, 0.0
  %vm2436 = vcmp.ge.f32.partialorder %v2432, 0.0
  %vm2437 = vcmp.ge.f32.partialorder %v2433, 0.0
  %v2438 = vmul.f32 %v2430, 0.01
  %v2439 = vmul.f32 %v2431, 0.01
  %v2440 = vmul.f32 %v2432, 0.01
  %v2441 = vmul.f32 %v2433, 0.01
  %v2442 = vsel %vm2434, %v2430, %v2438
  %v2443 = vsel %vm2435, %v2431, %v2439
  %v2444 = vsel %vm2436, %v2432, %v2440
  %v2445 = vsel %vm2437, %v2433, %v2441
  %v2446 = vld [vmem:[%s5] sm:$0xf]
  %v2447 = vld [vmem:[%s5 + $0x4] sm:$0xf]
  %v2448 = vld [vmem:[%s5 + $0x8] sm:$0xf]
  %v2449 = vld [vmem:[%s5 + $0xc] sm:$0xf]
  %v2450 = vld [vmem:[%s5 + $0x10] sm:$0xf]
  %v2451 = vld [vmem:[%s5 + $0x14] sm:$0xf]
  %v2452 = vld [vmem:[%s5 + $0x18] sm:$0xf]
  %v2453 = vld [vmem:[%s5 + $0x1c] sm:$0xf]
  %v2454 = vld [vmem:[%s5 + $0x20] sm:$0xf]
  %v2455 = vld [vmem:[%s5 + $0x24] sm:$0xf]
  %v2456 = vld [vmem:[%s5 + $0x28] sm:$0xf]
  %v2457 = vld [vmem:[%s5 + $0x2c] sm:$0xf]
  %v2458 = vld [vmem:[%s5 + $0x30] sm:$0xf]
  %v2459 = vld [vmem:[%s5 + $0x34] sm:$0xf]
  %v2460 = vld [vmem:[%s5 + $0x38] sm:$0xf]
  %v2461 = vld [vmem:[%s5 + $0x3c] sm:$0xf]
  %v2462 = vld [vmem:[%s6] sm:$0x1]
  %v2463 = vadd.f32 %v2442, %v2443
  %v2464 = vrot.slane %v2463, 4
  %v2465 = vadd.f32 %v2463, %v2464
  %v2466 = vrot.slane %v2465, 2
  %v2467 = vadd.f32 %v2465, %v2466
  %v2468 = vrot.slane %v2467, 1
  %v2469 = vadd.f32 %v2467, %v2468
  %v2470 = vadd.f32 %v2444, %v2445
  %v2471 = vrot.slane %v2470, 4
  %v2472 = vadd.f32 %v2470, %v2471
  %v2473 = vrot.slane %v2472, 2
  %v2474 = vadd.f32 %v2472, %v2473
  %v2475 = vrot.slane %v2474, 1
  %v2476 = vadd.f32 %v2474, %v2475
  %v2477 = vrcp.pop 16.0
  %v2478 = vmul.f32 16.0, %v2477
  %v2479 = vsub.f32 1.0, %v2478
  %v2480 = vmul.f32 %v2477, %v2479
  %v2481 = vadd.f32 %v2477, %v2480
  %vm2482 = vweird.f32 %v2477
  %v2483 = vsel %vm2482, %v2477, %v2481
  %v2484 = vmul.f32 %v2469, %v2483
  %v2485 = vmul.f32 %v2476, %v2483
  %v2486 = vpack.c.bf16 %v2484, %v2484
  %v2487 = vpack.c.bf16 %v2485, %v2485
  %v2489 = vperm.slane %v2462, 0
  %v2493 = vunpack.c.l.b16 %v2486
  %v2494 = vunpack.c.l.b16 %v2487
  %vm2495 = vcmask 1041409
  %v2496 = vsel %vm2495, %v2494, %v2493
  %v2497 = vpack.c.b16 %v2496, %v2496
  %v2515 = vunpack.c.l.b16 %v2446
  %v2516 = vunpack.c.l.b16 %v2447
  %v2517 = vunpack.c.l.b16 %v2448
  %v2518 = vunpack.c.l.b16 %v2449
  %v2519 = vunpack.c.l.b16 %v2450
  %v2520 = vunpack.c.l.b16 %v2451
  %v2521 = vunpack.c.l.b16 %v2452
  %v2522 = vunpack.c.l.b16 %v2453
  %v2523 = vunpack.c.l.b16 %v2454
  %v2524 = vunpack.c.l.b16 %v2455
  %v2525 = vunpack.c.l.b16 %v2456
  %v2526 = vunpack.c.l.b16 %v2457
  %v2527 = vunpack.c.l.b16 %v2458
  %v2528 = vunpack.c.l.b16 %v2459
  %v2529 = vunpack.c.l.b16 %v2460
  %v2530 = vunpack.c.l.b16 %v2461
  %v2531 = vpack.c.b16 %v2516, %v2515
  %v2532 = vpack.c.b16 %v2518, %v2517
  %v2533 = vpack.c.b16 %v2520, %v2519
  %v2534 = vpack.c.b16 %v2522, %v2521
  %v2535 = vpack.c.b16 %v2524, %v2523
  %v2536 = vpack.c.b16 %v2526, %v2525
  %v2537 = vpack.c.b16 %v2528, %v2527
  %v2538 = vpack.c.b16 %v2530, %v2529
  %2547 = vmatpush.bf16.msra.mxu0 %v2538
  %2548 = vmatpush.bf16.msra.mxu0 %v2537
  %2549 = vmatpush.bf16.msra.mxu0 %v2536
  %2550 = vmatpush.bf16.msra.mxu0 %v2535
  %2551 = vmatpush.bf16.msra.mxu0 %v2534
  %2552 = vmatpush.bf16.msra.mxu0 %v2533
  %2553 = vmatpush.bf16.msra.mxu0 %v2532
  %2554 = vmatpush.bf16.msra.mxu0 %v2531
  %2555 = vmatmul.bf16.gmra.mxu0 %v2497
  %v2556 = vpop.f32.mrf.mxu0
  %v2557 = vadd.f32 %v2489, %v2556
  %v2558 = vpop.f32.mrf.mxu0
  %2559 = vdwg.mxu0
  %2560 = vst [vmem:[%s7] sm:$0x3] %v2557
  // Predicated region
  $region30: #{forward.1} parent=0 // pred_check
    _
  $region31: #{forward.1} parent=0 // pred_check_branch
    %2562 = sbr.rel (0) target = $region33
  $region32: #{forward.1} parent=0 // pred_region
    _
  $region33: #{forward.1} parent=0 // pred_fallthru
    _
  // Predicated region
  $region34: #{forward.1} parent=0 // pred_check
    _
  $region35: #{forward.1} parent=0 // pred_check_branch
    %2564 = sbr.rel (0) target = $region37
  $region36: #{forward.1} parent=0 // pred_region
    _
  $region37: #{forward.1} parent=0 // pred_fallthru
    _

</llo_original>
